<compile_context>
chip_gen: v6e
topology: v6e:2x2x1
jax: 0.10.0
libtpu: 0.0.40
codegen_flags: <defaults>
</compile_context>

<pallas_src>
import jax
import jax.numpy as jnp
import numpy as np
from jax.experimental import pallas as pl
from jax.experimental.pallas import tpu as pltpu

EPS = 1e-5

_TAPS = [(dy, dx) for dy in (-1, 0, 1) for dx in (-1, 0, 1)]  # k = (dy+1)*3+(dx+1)


def _border_masks(H, W):
    """Host-precomputed 0/1 masks (9, H*W): tap k valid at flattened position p."""
    HW = H * W
    ii = np.arange(HW) // W
    jj = np.arange(HW) % W
    m = np.ones((9, HW), np.float32)
    for k, (dy, dx) in enumerate(_TAPS):
        valid = np.ones(HW, bool)
        if dy < 0:
            valid &= ii >= -dy
        if dy > 0:
            valid &= ii < H - dy
        if dx < 0:
            valid &= jj >= -dx
        if dx > 0:
            valid &= jj < W - dx
        m[k] = valid.astype(np.float32)
    return m


def _conv3x3_taps(x, w_ref, b_ref, mask_ref, W, HW):
    """3x3 'same' conv of x (Cp, HW): 9 rolled+masked taps, MXU-accumulated."""
    acc = None
    for k, (dy, dx) in enumerate(_TAPS):
        shift = (-(dy * W + dx)) % HW                    # t[p] = x[p + dy*W + dx]
        t = x if shift == 0 else pltpu.roll(x, shift, axis=1)
        if (dy, dx) != (0, 0):
            t = t * mask_ref[k:k + 1, :]                 # (1, HW) sublane-broadcast
        contrib = jnp.dot(w_ref[k], t, preferred_element_type=jnp.float32)
        acc = contrib if acc is None else acc + contrib  # MRB / VPU accumulation
    return acc + b_ref[...]


def _make_conv1_kernel(H, W):
    """y1 = conv1(x) + b1;  stats = sum over HW of [y1, y1^2, x, x^2]."""
    HW = H * W

    def kernel(x_ref, w_ref, b_ref, mask_ref, y_ref, st_ref):
        x = x_ref[0]                                     # (Cp, HW)
        y = _conv3x3_taps(x, w_ref, b_ref, mask_ref, W, HW)
        y_ref[0] = y
        ones = jnp.ones((HW, 1), jnp.float32)
        stacked = jnp.concatenate([y, y * y, x, x * x], axis=0)   # (4Cp, HW)
        st_ref[0] = jnp.dot(stacked, ones, preferred_element_type=jnp.float32)

    return kernel


def _make_conv2_kernel(H, W):
    """x1 = relu(y1*s1+t1); y2 = conv2(x1)+b2; stats = sum of [y2, y2^2, x*y2]."""
    HW = H * W

    def kernel(y1_ref, sc_ref, sh_ref, xres_ref, w_ref, b_ref, mask_ref,
               y2_ref, st_ref):
        x1 = jnp.maximum(y1_ref[0] * sc_ref[...] + sh_ref[...], 0.0)
        y2 = _conv3x3_taps(x1, w_ref, b_ref, mask_ref, W, HW)
        y2_ref[0] = y2
        x = xres_ref[0]
        ones = jnp.ones((HW, 1), jnp.float32)
        stacked = jnp.concatenate([y2, y2 * y2, x * y2], axis=0)  # (3Cp, HW)
        st_ref[0] = jnp.dot(stacked, ones, preferred_element_type=jnp.float32)

    return kernel


def _final_kernel(x_ref, y2_ref, a_ref, b_ref, c_ref, o_ref):
    """out = relu(a*x + b*y2 + c)  (BN2+residual+BN3+ReLU folded)."""
    o_ref[0] = jnp.maximum(
        a_ref[...] * x_ref[0] + b_ref[...] * y2_ref[0] + c_ref[...], 0.0)


def _affine_from_sums(s, q, gamma, beta, count):
    """Fold batch-stat BN into per-channel (scale, shift) from sum / sum-sq."""
    mean = s / count
    var = q / count - mean * mean                        # biased (training) var
    inv = jax.lax.rsqrt(var + EPS)
    scale = gamma * inv
    shift = beta - mean * scale
    return scale, shift


def _pick_vmem_limit():
    """~75% of physical VMEM, clipped to [32, 100] MiB; conservative fallback."""
    try:
        cap = int(pltpu.get_tpu_info().vmem_capacity_bytes)
    except Exception:
        return 32 * 1024 * 1024
    return int(min(max(cap * 3 // 4, 32 * 1024 * 1024), 100 * 1024 * 1024))


def resnet_block_forward(x_nchw, params):
    N, C, H, W = x_nchw.shape
    HW = H * W
    Cp = ((C + 7) // 8) * 8                              # sublane-aligned channels
    count = float(N * HW)

    def padc(v):
        return jnp.pad(v.astype(jnp.float32), (0, Cp - C))

    def prep_w(w):
        # torch (Cout, Cin, 3, 3) -> (9, Cp, Cp): per-tap (Cout, Cin) matrices.
        wk = jnp.transpose(w.astype(jnp.float32), (2, 3, 0, 1)).reshape(9, C, C)
        return jnp.pad(wk, ((0, 0), (0, Cp - C), (0, Cp - C)))

    # Native layout: reshape + zero-pad channels, no transpose.
    x3 = jnp.pad(x_nchw.astype(jnp.float32).reshape(N, C, HW),
                 ((0, 0), (0, Cp - C), (0, 0)))

    w9_1, w9_2 = prep_w(params["w1"]), prep_w(params["w2"])
    b1 = padc(params["b1"]).reshape(Cp, 1)
    b2 = padc(params["b2"]).reshape(Cp, 1)
    g1, be1 = padc(params["g1"]), padc(params["be1"])
    g2, be2 = padc(params["g2"]), padc(params["be2"])
    g3, be3 = padc(params["g3"]), padc(params["be3"])
    masks = jnp.asarray(_border_masks(H, W))

    act_spec = pl.BlockSpec((1, Cp, HW), lambda n: (n, 0, 0))
    vec_spec = pl.BlockSpec((Cp, 1), lambda n: (0, 0))
    w_spec = pl.BlockSpec((9, Cp, Cp), lambda n: (0, 0, 0))
    mask_spec = pl.BlockSpec((9, HW), lambda n: (0, 0))
    act_shape = jax.ShapeDtypeStruct((N, Cp, HW), jnp.float32)

    cparams = pltpu.CompilerParams(
        dimension_semantics=("parallel",),               # shard images across TCs
        vmem_limit_bytes=_pick_vmem_limit(),
    )
    # TODO(synk): single-buffer the grid-invariant w/mask operands
    #             (pipeline_mode=pl.Buffered(1)) to save VMEM at large C on v7x.

    # ---- pass 1: y1 = conv1(x); stats of y1 and of x (for BN1 and BN3) ------
    y1, st1 = pl.pallas_call(
        _make_conv1_kernel(H, W),
        grid=(N,),
        in_specs=[act_spec, w_spec, vec_spec, mask_spec],
        out_specs=(act_spec, pl.BlockSpec((1, 4 * Cp, 1), lambda n: (n, 0, 0))),
        out_shape=(act_shape, jax.ShapeDtypeStruct((N, 4 * Cp, 1), jnp.float32)),
        compiler_params=cparams,
    )(x3, w9_1, b1, masks)

    s1 = jnp.sum(st1, axis=0)[:, 0]                      # (4Cp,)
    sy1, qy1 = s1[:Cp], s1[Cp:2 * Cp]
    sx, qx = s1[2 * Cp:3 * Cp], s1[3 * Cp:]
    scale1, shift1 = _affine_from_sums(sy1, qy1, g1, be1, count)

    # ---- pass 2: x1 = relu(BN1(y1)); y2 = conv2(x1); stats of y2 and x*y2 ---
    y2, st2 = pl.pallas_call(
        _make_conv2_kernel(H, W),
        grid=(N,),
        in_specs=[act_spec, vec_spec, vec_spec, act_spec, w_spec, vec_spec,
                  mask_spec],
        out_specs=(act_spec, pl.BlockSpec((1, 3 * Cp, 1), lambda n: (n, 0, 0))),
        out_shape=(act_shape, jax.ShapeDtypeStruct((N, 3 * Cp, 1), jnp.float32)),
        compiler_params=cparams,
    )(y1, scale1.reshape(Cp, 1), shift1.reshape(Cp, 1), x3, w9_2, b2, masks)

    s2v = jnp.sum(st2, axis=0)[:, 0]                     # (3Cp,)
    sy2, qy2, sxy = s2v[:Cp], s2v[Cp:2 * Cp], s2v[2 * Cp:]
    scale2, shift2 = _affine_from_sums(sy2, qy2, g2, be2, count)

    # BN3 statistics of z = x + scale2*y2 + shift2, reconstructed exactly from
    # the partial sums already gathered (no extra pass over the activations):
    #   sum(z)   = Sx + s2*Sy2 + t2*M
    #   sum(z^2) = Qx + s2^2*Qy2 + t2^2*M + 2*s2*Sxy + 2*t2*Sx + 2*s2*t2*Sy2
    sz = sx + scale2 * sy2 + shift2 * count
    qz = (qx + scale2 * scale2 * qy2 + shift2 * shift2 * count
          + 2.0 * scale2 * sxy + 2.0 * shift2 * sx + 2.0 * scale2 * shift2 * sy2)
    scale3, shift3 = _affine_from_sums(sz, qz, g3, be3, count)

    # out = relu(scale3*(x + scale2*y2 + shift2) + shift3) = relu(a*x + b*y2 + c)
    a_vec = scale3.reshape(Cp, 1)
    b_vec = (scale2 * scale3).reshape(Cp, 1)
    c_vec = (shift2 * scale3 + shift3).reshape(Cp, 1)

    # ---- pass 3: fused residual + BN3 + ReLU (output aliases y2's buffer) ---
    out3 = pl.pallas_call(
        _final_kernel,
        grid=(N,),
        in_specs=[act_spec, act_spec, vec_spec, vec_spec, vec_spec],
        out_specs=act_spec,
        out_shape=act_shape,
        input_output_aliases={1: 0},                     # reuse y2's HBM slab
        compiler_params=cparams,
    )(x3, y2, a_vec, b_vec, c_vec)

    # TODO(synk): BatchNorm running_mean/running_var buffer updates (training
    # side-state) are not modeled; only the forward math is reproduced.
    return out3[:, :C, :].reshape(N, C, H, W)


def ref_forward(x, params):
    """Pure-JAX reference matching the PyTorch forward (training-mode BN)."""
    def conv(y, w, b):
        out = jax.lax.conv_general_dilated(
            y, w, window_strides=(1, 1), padding="SAME",
            dimension_numbers=("NCHW", "OIHW", "NCHW"))
        return out + b[None, :, None, None]

    def bn(y, g, be):
        mean = jnp.mean(y, axis=(0, 2, 3), keepdims=True)
        var = jnp.mean((y - mean) ** 2, axis=(0, 2, 3), keepdims=True)
        return ((y - mean) * jax.lax.rsqrt(var + EPS)
                * g[None, :, None, None] + be[None, :, None, None])

    x1 = jax.nn.relu(bn(conv(x, params["w1"], params["b1"]), params["g1"], params["be1"]))
    x2 = bn(conv(x1, params["w2"], params["b2"]), params["g2"], params["be2"])
    return jax.nn.relu(bn(x + x2, params["g3"], params["be3"]))


if __name__ == "__main__":
    N, C, H, W = 2, 4, 16, 16

    key = jax.random.PRNGKey(0)
    ks = jax.random.split(key, 12)

    params = {
        "w1": 0.3 * jax.random.normal(ks[0], (C, C, 3, 3), jnp.float32),
        "b1": 0.1 * jax.random.normal(ks[1], (C,), jnp.float32),
        "w2": 0.3 * jax.random.normal(ks[2], (C, C, 3, 3), jnp.float32),
        "b2": 0.1 * jax.random.normal(ks[3], (C,), jnp.float32),
        "g1": 1.0 + 0.1 * jax.random.normal(ks[4], (C,), jnp.float32),
        "be1": 0.1 * jax.random.normal(ks[5], (C,), jnp.float32),
        "g2": 1.0 + 0.1 * jax.random.normal(ks[6], (C,), jnp.float32),
        "be2": 0.1 * jax.random.normal(ks[7], (C,), jnp.float32),
        "g3": 1.0 + 0.1 * jax.random.normal(ks[8], (C,), jnp.float32),
        "be3": 0.1 * jax.random.normal(ks[9], (C,), jnp.float32),
    }
    x = jax.random.normal(ks[10], (N, C, H, W), jnp.float32)

    fwd = jax.jit(resnet_block_forward)
    out = jax.block_until_ready(fwd(x, params))
    ref = jax.block_until_ready(jax.jit(ref_forward)(x, params))

    assert out.shape == (N, C, H, W), out.shape
    np.testing.assert_allclose(np.asarray(out), np.asarray(ref), rtol=1e-4, atol=1e-4)
    print("KERNEL_OK")
</pallas_src>

<mosaic_0001>
module attributes {stable_mosaic.version = 11 : i64} {
  func.func @kernel(%arg0: i32, %arg1: memref<1x8x256xf32, #tpu.memory_space<vmem>>, %arg2: memref<9x8x8xf32, #tpu.memory_space<vmem>>, %arg3: memref<8x1xf32, #tpu.memory_space<vmem>>, %arg4: memref<9x256xf32, #tpu.memory_space<vmem>>, %arg5: memref<1x8x256xf32, #tpu.memory_space<vmem>>, %arg6: memref<1x32x1xf32, #tpu.memory_space<vmem>>) attributes {dimension_semantics = [#tpu.dimension_semantics<parallel>], iteration_bounds = array<i64: 2>, scalar_prefetch = 0 : i64, scratch_operands = 0 : i64, tpu.core_type = #tpu.core_type<tc>, window_params = [{transform_indices = @transform_0, window_bounds = array<i64: 1, 8, 256>}, {pipeline_mode = #tpu.pipeline_mode<synchronous>, transform_indices = @transform_1, window_bounds = array<i64: 9, 8, 8>}, {pipeline_mode = #tpu.pipeline_mode<synchronous>, transform_indices = @transform_2, window_bounds = array<i64: 8, 1>}, {pipeline_mode = #tpu.pipeline_mode<synchronous>, transform_indices = @transform_3, window_bounds = array<i64: 9, 256>}, {transform_indices = @transform_4, window_bounds = array<i64: 1, 8, 256>}, {transform_indices = @transform_5, window_bounds = array<i64: 1, 32, 1>}]} {
    %c0 = arith.constant 0 : index
    %c0_0 = arith.constant 0 : index
    %c0_1 = arith.constant 0 : index
    %0 = vector.load %arg1[%c0, %c0_0, %c0_1] : memref<1x8x256xf32, #tpu.memory_space<vmem>>, vector<1x8x256xf32>
    %1 = vector.shape_cast %0 : vector<1x8x256xf32> to vector<8x256xf32>
    %c17_i32 = arith.constant 17 : i32
    %2 = tpu.dynamic_rotate %1 by %c17_i32 dim 1 : vector<8x256xf32>, i32 -> vector<8x256xf32>
    %c0_2 = arith.constant 0 : index
    %c0_3 = arith.constant 0 : index
    %3 = vector.load %arg4[%c0_2, %c0_3] : memref<9x256xf32, #tpu.memory_space<vmem>>, vector<1x256xf32>
    %4 = vector.broadcast %3 : vector<1x256xf32> to vector<8x256xf32>
    %5 = arith.mulf %2, %4 : vector<8x256xf32>
    %c0_4 = arith.constant 0 : index
    %c0_5 = arith.constant 0 : index
    %c0_6 = arith.constant 0 : index
    %6 = vector.load %arg2[%c0_4, %c0_5, %c0_6] : memref<9x8x8xf32, #tpu.memory_space<vmem>>, vector<1x8x8xf32>
    %7 = vector.shape_cast %6 : vector<1x8x8xf32> to vector<8x8xf32>
    %cst = arith.constant dense<0.000000e+00> : vector<8x256xf32>
    %8 = tpu.matmul %7, %5, %cst {dimension_numbers = #tpu.dot_dimension_numbers<[1], [0], [0], [1], [0, 0, 1, 1], [], []>} : vector<8x8xf32>, vector<8x256xf32>, vector<8x256xf32> -> vector<8x256xf32>
    %c16_i32 = arith.constant 16 : i32
    %9 = tpu.dynamic_rotate %1 by %c16_i32 dim 1 : vector<8x256xf32>, i32 -> vector<8x256xf32>
    %c1 = arith.constant 1 : index
    %c0_7 = arith.constant 0 : index
    %10 = vector.load %arg4[%c1, %c0_7] : memref<9x256xf32, #tpu.memory_space<vmem>>, vector<1x256xf32>
    %11 = vector.broadcast %10 : vector<1x256xf32> to vector<8x256xf32>
    %12 = arith.mulf %9, %11 : vector<8x256xf32>
    %c1_8 = arith.constant 1 : index
    %c0_9 = arith.constant 0 : index
    %c0_10 = arith.constant 0 : index
    %13 = vector.load %arg2[%c1_8, %c0_9, %c0_10] : memref<9x8x8xf32, #tpu.memory_space<vmem>>, vector<1x8x8xf32>
    %14 = vector.shape_cast %13 : vector<1x8x8xf32> to vector<8x8xf32>
    %cst_11 = arith.constant dense<0.000000e+00> : vector<8x256xf32>
    %15 = tpu.matmul %14, %12, %cst_11 {dimension_numbers = #tpu.dot_dimension_numbers<[1], [0], [0], [1], [0, 0, 1, 1], [], []>} : vector<8x8xf32>, vector<8x256xf32>, vector<8x256xf32> -> vector<8x256xf32>
    %16 = arith.addf %8, %15 : vector<8x256xf32>
    %c15_i32 = arith.constant 15 : i32
    %17 = tpu.dynamic_rotate %1 by %c15_i32 dim 1 : vector<8x256xf32>, i32 -> vector<8x256xf32>
    %c2 = arith.constant 2 : index
    %c0_12 = arith.constant 0 : index
    %18 = vector.load %arg4[%c2, %c0_12] : memref<9x256xf32, #tpu.memory_space<vmem>>, vector<1x256xf32>
    %19 = vector.broadcast %18 : vector<1x256xf32> to vector<8x256xf32>
    %20 = arith.mulf %17, %19 : vector<8x256xf32>
    %c2_13 = arith.constant 2 : index
    %c0_14 = arith.constant 0 : index
    %c0_15 = arith.constant 0 : index
    %21 = vector.load %arg2[%c2_13, %c0_14, %c0_15] : memref<9x8x8xf32, #tpu.memory_space<vmem>>, vector<1x8x8xf32>
    %22 = vector.shape_cast %21 : vector<1x8x8xf32> to vector<8x8xf32>
    %cst_16 = arith.constant dense<0.000000e+00> : vector<8x256xf32>
    %23 = tpu.matmul %22, %20, %cst_16 {dimension_numbers = #tpu.dot_dimension_numbers<[1], [0], [0], [1], [0, 0, 1, 1], [], []>} : vector<8x8xf32>, vector<8x256xf32>, vector<8x256xf32> -> vector<8x256xf32>
    %24 = arith.addf %16, %23 : vector<8x256xf32>
    %c1_i32 = arith.constant 1 : i32
    %25 = tpu.dynamic_rotate %1 by %c1_i32 dim 1 : vector<8x256xf32>, i32 -> vector<8x256xf32>
    %c3 = arith.constant 3 : index
    %c0_17 = arith.constant 0 : index
    %26 = vector.load %arg4[%c3, %c0_17] : memref<9x256xf32, #tpu.memory_space<vmem>>, vector<1x256xf32>
    %27 = vector.broadcast %26 : vector<1x256xf32> to vector<8x256xf32>
    %28 = arith.mulf %25, %27 : vector<8x256xf32>
    %c3_18 = arith.constant 3 : index
    %c0_19 = arith.constant 0 : index
    %c0_20 = arith.constant 0 : index
    %29 = vector.load %arg2[%c3_18, %c0_19, %c0_20] : memref<9x8x8xf32, #tpu.memory_space<vmem>>, vector<1x8x8xf32>
    %30 = vector.shape_cast %29 : vector<1x8x8xf32> to vector<8x8xf32>
    %cst_21 = arith.constant dense<0.000000e+00> : vector<8x256xf32>
    %31 = tpu.matmul %30, %28, %cst_21 {dimension_numbers = #tpu.dot_dimension_numbers<[1], [0], [0], [1], [0, 0, 1, 1], [], []>} : vector<8x8xf32>, vector<8x256xf32>, vector<8x256xf32> -> vector<8x256xf32>
    %32 = arith.addf %24, %31 : vector<8x256xf32>
    %c4 = arith.constant 4 : index
    %c0_22 = arith.constant 0 : index
    %c0_23 = arith.constant 0 : index
    %33 = vector.load %arg2[%c4, %c0_22, %c0_23] : memref<9x8x8xf32, #tpu.memory_space<vmem>>, vector<1x8x8xf32>
    %34 = vector.shape_cast %33 : vector<1x8x8xf32> to vector<8x8xf32>
    %cst_24 = arith.constant dense<0.000000e+00> : vector<8x256xf32>
    %35 = tpu.matmul %34, %1, %cst_24 {dimension_numbers = #tpu.dot_dimension_numbers<[1], [0], [0], [1], [0, 0, 1, 1], [], []>} : vector<8x8xf32>, vector<8x256xf32>, vector<8x256xf32> -> vector<8x256xf32>
    %36 = arith.addf %32, %35 : vector<8x256xf32>
    %c255_i32 = arith.constant 255 : i32
    %37 = tpu.dynamic_rotate %1 by %c255_i32 dim 1 : vector<8x256xf32>, i32 -> vector<8x256xf32>
    %c5 = arith.constant 5 : index
    %c0_25 = arith.constant 0 : index
    %38 = vector.load %arg4[%c5, %c0_25] : memref<9x256xf32, #tpu.memory_space<vmem>>, vector<1x256xf32>
    %39 = vector.broadcast %38 : vector<1x256xf32> to vector<8x256xf32>
    %40 = arith.mulf %37, %39 : vector<8x256xf32>
    %c5_26 = arith.constant 5 : index
    %c0_27 = arith.constant 0 : index
    %c0_28 = arith.constant 0 : index
    %41 = vector.load %arg2[%c5_26, %c0_27, %c0_28] : memref<9x8x8xf32, #tpu.memory_space<vmem>>, vector<1x8x8xf32>
    %42 = vector.shape_cast %41 : vector<1x8x8xf32> to vector<8x8xf32>
    %cst_29 = arith.constant dense<0.000000e+00> : vector<8x256xf32>
    %43 = tpu.matmul %42, %40, %cst_29 {dimension_numbers = #tpu.dot_dimension_numbers<[1], [0], [0], [1], [0, 0, 1, 1], [], []>} : vector<8x8xf32>, vector<8x256xf32>, vector<8x256xf32> -> vector<8x256xf32>
    %44 = arith.addf %36, %43 : vector<8x256xf32>
    %c241_i32 = arith.constant 241 : i32
    %45 = tpu.dynamic_rotate %1 by %c241_i32 dim 1 : vector<8x256xf32>, i32 -> vector<8x256xf32>
    %c6 = arith.constant 6 : index
    %c0_30 = arith.constant 0 : index
    %46 = vector.load %arg4[%c6, %c0_30] : memref<9x256xf32, #tpu.memory_space<vmem>>, vector<1x256xf32>
    %47 = vector.broadcast %46 : vector<1x256xf32> to vector<8x256xf32>
    %48 = arith.mulf %45, %47 : vector<8x256xf32>
    %c6_31 = arith.constant 6 : index
    %c0_32 = arith.constant 0 : index
    %c0_33 = arith.constant 0 : index
    %49 = vector.load %arg2[%c6_31, %c0_32, %c0_33] : memref<9x8x8xf32, #tpu.memory_space<vmem>>, vector<1x8x8xf32>
    %50 = vector.shape_cast %49 : vector<1x8x8xf32> to vector<8x8xf32>
    %cst_34 = arith.constant dense<0.000000e+00> : vector<8x256xf32>
    %51 = tpu.matmul %50, %48, %cst_34 {dimension_numbers = #tpu.dot_dimension_numbers<[1], [0], [0], [1], [0, 0, 1, 1], [], []>} : vector<8x8xf32>, vector<8x256xf32>, vector<8x256xf32> -> vector<8x256xf32>
    %52 = arith.addf %44, %51 : vector<8x256xf32>
    %c240_i32 = arith.constant 240 : i32
    %53 = tpu.dynamic_rotate %1 by %c240_i32 dim 1 : vector<8x256xf32>, i32 -> vector<8x256xf32>
    %c7 = arith.constant 7 : index
    %c0_35 = arith.constant 0 : index
    %54 = vector.load %arg4[%c7, %c0_35] : memref<9x256xf32, #tpu.memory_space<vmem>>, vector<1x256xf32>
    %55 = vector.broadcast %54 : vector<1x256xf32> to vector<8x256xf32>
    %56 = arith.mulf %53, %55 : vector<8x256xf32>
    %c7_36 = arith.constant 7 : index
    %c0_37 = arith.constant 0 : index
    %c0_38 = arith.constant 0 : index
    %57 = vector.load %arg2[%c7_36, %c0_37, %c0_38] : memref<9x8x8xf32, #tpu.memory_space<vmem>>, vector<1x8x8xf32>
    %58 = vector.shape_cast %57 : vector<1x8x8xf32> to vector<8x8xf32>
    %cst_39 = arith.constant dense<0.000000e+00> : vector<8x256xf32>
    %59 = tpu.matmul %58, %56, %cst_39 {dimension_numbers = #tpu.dot_dimension_numbers<[1], [0], [0], [1], [0, 0, 1, 1], [], []>} : vector<8x8xf32>, vector<8x256xf32>, vector<8x256xf32> -> vector<8x256xf32>
    %60 = arith.addf %52, %59 : vector<8x256xf32>
    %c239_i32 = arith.constant 239 : i32
    %61 = tpu.dynamic_rotate %1 by %c239_i32 dim 1 : vector<8x256xf32>, i32 -> vector<8x256xf32>
    %c8 = arith.constant 8 : index
    %c0_40 = arith.constant 0 : index
    %62 = vector.load %arg4[%c8, %c0_40] : memref<9x256xf32, #tpu.memory_space<vmem>>, vector<1x256xf32>
    %63 = vector.broadcast %62 : vector<1x256xf32> to vector<8x256xf32>
    %64 = arith.mulf %61, %63 : vector<8x256xf32>
    %c8_41 = arith.constant 8 : index
    %c0_42 = arith.constant 0 : index
    %c0_43 = arith.constant 0 : index
    %65 = vector.load %arg2[%c8_41, %c0_42, %c0_43] : memref<9x8x8xf32, #tpu.memory_space<vmem>>, vector<1x8x8xf32>
    %66 = vector.shape_cast %65 : vector<1x8x8xf32> to vector<8x8xf32>
    %cst_44 = arith.constant dense<0.000000e+00> : vector<8x256xf32>
    %67 = tpu.matmul %66, %64, %cst_44 {dimension_numbers = #tpu.dot_dimension_numbers<[1], [0], [0], [1], [0, 0, 1, 1], [], []>} : vector<8x8xf32>, vector<8x256xf32>, vector<8x256xf32> -> vector<8x256xf32>
    %68 = arith.addf %60, %67 : vector<8x256xf32>
    %c0_45 = arith.constant 0 : index
    %c0_46 = arith.constant 0 : index
    %69 = vector.load %arg3[%c0_45, %c0_46] : memref<8x1xf32, #tpu.memory_space<vmem>>, vector<8x1xf32>
    %70 = vector.broadcast %69 : vector<8x1xf32> to vector<8x256xf32>
    %71 = arith.addf %68, %70 : vector<8x256xf32>
    %c0_47 = arith.constant 0 : index
    %c0_48 = arith.constant 0 : index
    %c0_49 = arith.constant 0 : index
    %72 = vector.load %arg5[%c0_47, %c0_48, %c0_49] : memref<1x8x256xf32, #tpu.memory_space<vmem>>, vector<1x8x256xf32>
    %73 = vector.shape_cast %72 : vector<1x8x256xf32> to vector<8x256xf32>
    %74 = vector.shape_cast %71 : vector<8x256xf32> to vector<1x8x256xf32>
    tpu.vector_store %arg5[%c0_47, %c0_48, %c0_49], %74 {strides = array<i32>} : memref<1x8x256xf32, #tpu.memory_space<vmem>>, vector<1x8x256xf32>,
    %cst_50 = arith.constant 1.000000e+00 : f32
    %75 = vector.broadcast %cst_50 : f32 to vector<256x1xf32>
    %76 = arith.mulf %71, %71 : vector<8x256xf32>
    %77 = arith.mulf %1, %1 : vector<8x256xf32>
    %78 = tpu.concatenate %71, %76, %1, %77 in 0 : vector<8x256xf32>, vector<8x256xf32>, vector<8x256xf32>, vector<8x256xf32> -> vector<32x256xf32>
    %cst_51 = arith.constant dense<0.000000e+00> : vector<32x1xf32>
    %79 = tpu.matmul %78, %75, %cst_51 {dimension_numbers = #tpu.dot_dimension_numbers<[1], [0], [0], [1], [0, 0, 1, 1], [], []>} : vector<32x256xf32>, vector<256x1xf32>, vector<32x1xf32> -> vector<32x1xf32>
    %c0_52 = arith.constant 0 : index
    %c0_53 = arith.constant 0 : index
    %c0_54 = arith.constant 0 : index
    %80 = vector.load %arg6[%c0_52, %c0_53, %c0_54] : memref<1x32x1xf32, #tpu.memory_space<vmem>>, vector<1x32x1xf32>
    %81 = vector.shape_cast %80 : vector<1x32x1xf32> to vector<32x1xf32>
    %82 = vector.shape_cast %79 : vector<32x1xf32> to vector<1x32x1xf32>
    tpu.vector_store %arg6[%c0_52, %c0_53, %c0_54], %82 {strides = array<i32>} : memref<1x32x1xf32, #tpu.memory_space<vmem>>, vector<1x32x1xf32>,
    return
  }
  func.func @transform_0(%arg0: i32) -> (i32, i32, i32) {
    %c0_i32 = arith.constant 0 : i32
    %c0_i32_0 = arith.constant 0 : i32
    %c0_i32_1 = arith.constant 0 : i32
    return %arg0, %c0_i32, %c0_i32_0 : i32, i32, i32
  }
  func.func @transform_1(%arg0: i32) -> (i32, i32, i32) {
    %c0_i32 = arith.constant 0 : i32
    %c0_i32_0 = arith.constant 0 : i32
    %c0_i32_1 = arith.constant 0 : i32
    %c0_i32_2 = arith.constant 0 : i32
    return %c0_i32, %c0_i32_0, %c0_i32_1 : i32, i32, i32
  }
  func.func @transform_2(%arg0: i32) -> (i32, i32) {
    %c0_i32 = arith.constant 0 : i32
    %c0_i32_0 = arith.constant 0 : i32
    %c0_i32_1 = arith.constant 0 : i32
    return %c0_i32, %c0_i32_0 : i32, i32
  }
  func.func @transform_3(%arg0: i32) -> (i32, i32) {
    %c0_i32 = arith.constant 0 : i32
    %c0_i32_0 = arith.constant 0 : i32
    %c0_i32_1 = arith.constant 0 : i32
    return %c0_i32, %c0_i32_0 : i32, i32
  }
  func.func @transform_4(%arg0: i32) -> (i32, i32, i32) {
    %c0_i32 = arith.constant 0 : i32
    %c0_i32_0 = arith.constant 0 : i32
    %c0_i32_1 = arith.constant 0 : i32
    return %arg0, %c0_i32, %c0_i32_0 : i32, i32, i32
  }
  func.func @transform_5(%arg0: i32) -> (i32, i32, i32) {
    %c0_i32 = arith.constant 0 : i32
    %c0_i32_0 = arith.constant 0 : i32
    %c0_i32_1 = arith.constant 0 : i32
    return %arg0, %c0_i32, %c0_i32_0 : i32, i32, i32
  }
}

module attributes {stable_mosaic.version = 11 : i64} {
  func.func @kernel(%arg0: i32, %arg1: memref<1x8x256xf32, #tpu.memory_space<vmem>>, %arg2: memref<8x1xf32, #tpu.memory_space<vmem>>, %arg3: memref<8x1xf32, #tpu.memory_space<vmem>>, %arg4: memref<1x8x256xf32, #tpu.memory_space<vmem>>, %arg5: memref<9x8x8xf32, #tpu.memory_space<vmem>>, %arg6: memref<8x1xf32, #tpu.memory_space<vmem>>, %arg7: memref<9x256xf32, #tpu.memory_space<vmem>>, %arg8: memref<1x8x256xf32, #tpu.memory_space<vmem>>, %arg9: memref<1x24x1xf32, #tpu.memory_space<vmem>>) attributes {dimension_semantics = [#tpu.dimension_semantics<parallel>], iteration_bounds = array<i64: 2>, scalar_prefetch = 0 : i64, scratch_operands = 0 : i64, tpu.core_type = #tpu.core_type<tc>, window_params = [{transform_indices = @transform_0, window_bounds = array<i64: 1, 8, 256>}, {pipeline_mode = #tpu.pipeline_mode<synchronous>, transform_indices = @transform_1, window_bounds = array<i64: 8, 1>}, {pipeline_mode = #tpu.pipeline_mode<synchronous>, transform_indices = @transform_2, window_bounds = array<i64: 8, 1>}, {transform_indices = @transform_3, window_bounds = array<i64: 1, 8, 256>}, {pipeline_mode = #tpu.pipeline_mode<synchronous>, transform_indices = @transform_4, window_bounds = array<i64: 9, 8, 8>}, {pipeline_mode = #tpu.pipeline_mode<synchronous>, transform_indices = @transform_5, window_bounds = array<i64: 8, 1>}, {pipeline_mode = #tpu.pipeline_mode<synchronous>, transform_indices = @transform_6, window_bounds = array<i64: 9, 256>}, {transform_indices = @transform_7, window_bounds = array<i64: 1, 8, 256>}, {transform_indices = @transform_8, window_bounds = array<i64: 1, 24, 1>}]} {
    %c0 = arith.constant 0 : index
    %c0_0 = arith.constant 0 : index
    %c0_1 = arith.constant 0 : index
    %0 = vector.load %arg1[%c0, %c0_0, %c0_1] : memref<1x8x256xf32, #tpu.memory_space<vmem>>, vector<1x8x256xf32>
    %1 = vector.shape_cast %0 : vector<1x8x256xf32> to vector<8x256xf32>
    %c0_2 = arith.constant 0 : index
    %c0_3 = arith.constant 0 : index
    %2 = vector.load %arg2[%c0_2, %c0_3] : memref<8x1xf32, #tpu.memory_space<vmem>>, vector<8x1xf32>
    %3 = vector.broadcast %2 : vector<8x1xf32> to vector<8x256xf32>
    %4 = arith.mulf %1, %3 : vector<8x256xf32>
    %c0_4 = arith.constant 0 : index
    %c0_5 = arith.constant 0 : index
    %5 = vector.load %arg3[%c0_4, %c0_5] : memref<8x1xf32, #tpu.memory_space<vmem>>, vector<8x1xf32>
    %6 = vector.broadcast %5 : vector<8x1xf32> to vector<8x256xf32>
    %7 = arith.addf %4, %6 : vector<8x256xf32>
    %cst = arith.constant 0.000000e+00 : f32
    %8 = vector.broadcast %cst : f32 to vector<8x256xf32>
    %9 = arith.maximumf %7, %8 : vector<8x256xf32>
    %c17_i32 = arith.constant 17 : i32
    %10 = tpu.dynamic_rotate %9 by %c17_i32 dim 1 : vector<8x256xf32>, i32 -> vector<8x256xf32>
    %c0_6 = arith.constant 0 : index
    %c0_7 = arith.constant 0 : index
    %11 = vector.load %arg7[%c0_6, %c0_7] : memref<9x256xf32, #tpu.memory_space<vmem>>, vector<1x256xf32>
    %12 = vector.broadcast %11 : vector<1x256xf32> to vector<8x256xf32>
    %13 = arith.mulf %10, %12 : vector<8x256xf32>
    %c0_8 = arith.constant 0 : index
    %c0_9 = arith.constant 0 : index
    %c0_10 = arith.constant 0 : index
    %14 = vector.load %arg5[%c0_8, %c0_9, %c0_10] : memref<9x8x8xf32, #tpu.memory_space<vmem>>, vector<1x8x8xf32>
    %15 = vector.shape_cast %14 : vector<1x8x8xf32> to vector<8x8xf32>
    %cst_11 = arith.constant dense<0.000000e+00> : vector<8x256xf32>
    %16 = tpu.matmul %15, %13, %cst_11 {dimension_numbers = #tpu.dot_dimension_numbers<[1], [0], [0], [1], [0, 0, 1, 1], [], []>} : vector<8x8xf32>, vector<8x256xf32>, vector<8x256xf32> -> vector<8x256xf32>
    %c16_i32 = arith.constant 16 : i32
    %17 = tpu.dynamic_rotate %9 by %c16_i32 dim 1 : vector<8x256xf32>, i32 -> vector<8x256xf32>
    %c1 = arith.constant 1 : index
    %c0_12 = arith.constant 0 : index
    %18 = vector.load %arg7[%c1, %c0_12] : memref<9x256xf32, #tpu.memory_space<vmem>>, vector<1x256xf32>
    %19 = vector.broadcast %18 : vector<1x256xf32> to vector<8x256xf32>
    %20 = arith.mulf %17, %19 : vector<8x256xf32>
    %c1_13 = arith.constant 1 : index
    %c0_14 = arith.constant 0 : index
    %c0_15 = arith.constant 0 : index
    %21 = vector.load %arg5[%c1_13, %c0_14, %c0_15] : memref<9x8x8xf32, #tpu.memory_space<vmem>>, vector<1x8x8xf32>
    %22 = vector.shape_cast %21 : vector<1x8x8xf32> to vector<8x8xf32>
    %cst_16 = arith.constant dense<0.000000e+00> : vector<8x256xf32>
    %23 = tpu.matmul %22, %20, %cst_16 {dimension_numbers = #tpu.dot_dimension_numbers<[1], [0], [0], [1], [0, 0, 1, 1], [], []>} : vector<8x8xf32>, vector<8x256xf32>, vector<8x256xf32> -> vector<8x256xf32>
    %24 = arith.addf %16, %23 : vector<8x256xf32>
    %c15_i32 = arith.constant 15 : i32
    %25 = tpu.dynamic_rotate %9 by %c15_i32 dim 1 : vector<8x256xf32>, i32 -> vector<8x256xf32>
    %c2 = arith.constant 2 : index
    %c0_17 = arith.constant 0 : index
    %26 = vector.load %arg7[%c2, %c0_17] : memref<9x256xf32, #tpu.memory_space<vmem>>, vector<1x256xf32>
    %27 = vector.broadcast %26 : vector<1x256xf32> to vector<8x256xf32>
    %28 = arith.mulf %25, %27 : vector<8x256xf32>
    %c2_18 = arith.constant 2 : index
    %c0_19 = arith.constant 0 : index
    %c0_20 = arith.constant 0 : index
    %29 = vector.load %arg5[%c2_18, %c0_19, %c0_20] : memref<9x8x8xf32, #tpu.memory_space<vmem>>, vector<1x8x8xf32>
    %30 = vector.shape_cast %29 : vector<1x8x8xf32> to vector<8x8xf32>
    %cst_21 = arith.constant dense<0.000000e+00> : vector<8x256xf32>
    %31 = tpu.matmul %30, %28, %cst_21 {dimension_numbers = #tpu.dot_dimension_numbers<[1], [0], [0], [1], [0, 0, 1, 1], [], []>} : vector<8x8xf32>, vector<8x256xf32>, vector<8x256xf32> -> vector<8x256xf32>
    %32 = arith.addf %24, %31 : vector<8x256xf32>
    %c1_i32 = arith.constant 1 : i32
    %33 = tpu.dynamic_rotate %9 by %c1_i32 dim 1 : vector<8x256xf32>, i32 -> vector<8x256xf32>
    %c3 = arith.constant 3 : index
    %c0_22 = arith.constant 0 : index
    %34 = vector.load %arg7[%c3, %c0_22] : memref<9x256xf32, #tpu.memory_space<vmem>>, vector<1x256xf32>
    %35 = vector.broadcast %34 : vector<1x256xf32> to vector<8x256xf32>
    %36 = arith.mulf %33, %35 : vector<8x256xf32>
    %c3_23 = arith.constant 3 : index
    %c0_24 = arith.constant 0 : index
    %c0_25 = arith.constant 0 : index
    %37 = vector.load %arg5[%c3_23, %c0_24, %c0_25] : memref<9x8x8xf32, #tpu.memory_space<vmem>>, vector<1x8x8xf32>
    %38 = vector.shape_cast %37 : vector<1x8x8xf32> to vector<8x8xf32>
    %cst_26 = arith.constant dense<0.000000e+00> : vector<8x256xf32>
    %39 = tpu.matmul %38, %36, %cst_26 {dimension_numbers = #tpu.dot_dimension_numbers<[1], [0], [0], [1], [0, 0, 1, 1], [], []>} : vector<8x8xf32>, vector<8x256xf32>, vector<8x256xf32> -> vector<8x256xf32>
    %40 = arith.addf %32, %39 : vector<8x256xf32>
    %c4 = arith.constant 4 : index
    %c0_27 = arith.constant 0 : index
    %c0_28 = arith.constant 0 : index
    %41 = vector.load %arg5[%c4, %c0_27, %c0_28] : memref<9x8x8xf32, #tpu.memory_space<vmem>>, vector<1x8x8xf32>
    %42 = vector.shape_cast %41 : vector<1x8x8xf32> to vector<8x8xf32>
    %cst_29 = arith.constant dense<0.000000e+00> : vector<8x256xf32>
    %43 = tpu.matmul %42, %9, %cst_29 {dimension_numbers = #tpu.dot_dimension_numbers<[1], [0], [0], [1], [0, 0, 1, 1], [], []>} : vector<8x8xf32>, vector<8x256xf32>, vector<8x256xf32> -> vector<8x256xf32>
    %44 = arith.addf %40, %43 : vector<8x256xf32>
    %c255_i32 = arith.constant 255 : i32
    %45 = tpu.dynamic_rotate %9 by %c255_i32 dim 1 : vector<8x256xf32>, i32 -> vector<8x256xf32>
    %c5 = arith.constant 5 : index
    %c0_30 = arith.constant 0 : index
    %46 = vector.load %arg7[%c5, %c0_30] : memref<9x256xf32, #tpu.memory_space<vmem>>, vector<1x256xf32>
    %47 = vector.broadcast %46 : vector<1x256xf32> to vector<8x256xf32>
    %48 = arith.mulf %45, %47 : vector<8x256xf32>
    %c5_31 = arith.constant 5 : index
    %c0_32 = arith.constant 0 : index
    %c0_33 = arith.constant 0 : index
    %49 = vector.load %arg5[%c5_31, %c0_32, %c0_33] : memref<9x8x8xf32, #tpu.memory_space<vmem>>, vector<1x8x8xf32>
    %50 = vector.shape_cast %49 : vector<1x8x8xf32> to vector<8x8xf32>
    %cst_34 = arith.constant dense<0.000000e+00> : vector<8x256xf32>
    %51 = tpu.matmul %50, %48, %cst_34 {dimension_numbers = #tpu.dot_dimension_numbers<[1], [0], [0], [1], [0, 0, 1, 1], [], []>} : vector<8x8xf32>, vector<8x256xf32>, vector<8x256xf32> -> vector<8x256xf32>
    %52 = arith.addf %44, %51 : vector<8x256xf32>
    %c241_i32 = arith.constant 241 : i32
    %53 = tpu.dynamic_rotate %9 by %c241_i32 dim 1 : vector<8x256xf32>, i32 -> vector<8x256xf32>
    %c6 = arith.constant 6 : index
    %c0_35 = arith.constant 0 : index
    %54 = vector.load %arg7[%c6, %c0_35] : memref<9x256xf32, #tpu.memory_space<vmem>>, vector<1x256xf32>
    %55 = vector.broadcast %54 : vector<1x256xf32> to vector<8x256xf32>
    %56 = arith.mulf %53, %55 : vector<8x256xf32>
    %c6_36 = arith.constant 6 : index
    %c0_37 = arith.constant 0 : index
    %c0_38 = arith.constant 0 : index
    %57 = vector.load %arg5[%c6_36, %c0_37, %c0_38] : memref<9x8x8xf32, #tpu.memory_space<vmem>>, vector<1x8x8xf32>
    %58 = vector.shape_cast %57 : vector<1x8x8xf32> to vector<8x8xf32>
    %cst_39 = arith.constant dense<0.000000e+00> : vector<8x256xf32>
    %59 = tpu.matmul %58, %56, %cst_39 {dimension_numbers = #tpu.dot_dimension_numbers<[1], [0], [0], [1], [0, 0, 1, 1], [], []>} : vector<8x8xf32>, vector<8x256xf32>, vector<8x256xf32> -> vector<8x256xf32>
    %60 = arith.addf %52, %59 : vector<8x256xf32>
    %c240_i32 = arith.constant 240 : i32
    %61 = tpu.dynamic_rotate %9 by %c240_i32 dim 1 : vector<8x256xf32>, i32 -> vector<8x256xf32>
    %c7 = arith.constant 7 : index
    %c0_40 = arith.constant 0 : index
    %62 = vector.load %arg7[%c7, %c0_40] : memref<9x256xf32, #tpu.memory_space<vmem>>, vector<1x256xf32>
    %63 = vector.broadcast %62 : vector<1x256xf32> to vector<8x256xf32>
    %64 = arith.mulf %61, %63 : vector<8x256xf32>
    %c7_41 = arith.constant 7 : index
    %c0_42 = arith.constant 0 : index
    %c0_43 = arith.constant 0 : index
    %65 = vector.load %arg5[%c7_41, %c0_42, %c0_43] : memref<9x8x8xf32, #tpu.memory_space<vmem>>, vector<1x8x8xf32>
    %66 = vector.shape_cast %65 : vector<1x8x8xf32> to vector<8x8xf32>
    %cst_44 = arith.constant dense<0.000000e+00> : vector<8x256xf32>
    %67 = tpu.matmul %66, %64, %cst_44 {dimension_numbers = #tpu.dot_dimension_numbers<[1], [0], [0], [1], [0, 0, 1, 1], [], []>} : vector<8x8xf32>, vector<8x256xf32>, vector<8x256xf32> -> vector<8x256xf32>
    %68 = arith.addf %60, %67 : vector<8x256xf32>
    %c239_i32 = arith.constant 239 : i32
    %69 = tpu.dynamic_rotate %9 by %c239_i32 dim 1 : vector<8x256xf32>, i32 -> vector<8x256xf32>
    %c8 = arith.constant 8 : index
    %c0_45 = arith.constant 0 : index
    %70 = vector.load %arg7[%c8, %c0_45] : memref<9x256xf32, #tpu.memory_space<vmem>>, vector<1x256xf32>
    %71 = vector.broadcast %70 : vector<1x256xf32> to vector<8x256xf32>
    %72 = arith.mulf %69, %71 : vector<8x256xf32>
    %c8_46 = arith.constant 8 : index
    %c0_47 = arith.constant 0 : index
    %c0_48 = arith.constant 0 : index
    %73 = vector.load %arg5[%c8_46, %c0_47, %c0_48] : memref<9x8x8xf32, #tpu.memory_space<vmem>>, vector<1x8x8xf32>
    %74 = vector.shape_cast %73 : vector<1x8x8xf32> to vector<8x8xf32>
    %cst_49 = arith.constant dense<0.000000e+00> : vector<8x256xf32>
    %75 = tpu.matmul %74, %72, %cst_49 {dimension_numbers = #tpu.dot_dimension_numbers<[1], [0], [0], [1], [0, 0, 1, 1], [], []>} : vector<8x8xf32>, vector<8x256xf32>, vector<8x256xf32> -> vector<8x256xf32>
    %76 = arith.addf %68, %75 : vector<8x256xf32>
    %c0_50 = arith.constant 0 : index
    %c0_51 = arith.constant 0 : index
    %77 = vector.load %arg6[%c0_50, %c0_51] : memref<8x1xf32, #tpu.memory_space<vmem>>, vector<8x1xf32>
    %78 = vector.broadcast %77 : vector<8x1xf32> to vector<8x256xf32>
    %79 = arith.addf %76, %78 : vector<8x256xf32>
    %c0_52 = arith.constant 0 : index
    %c0_53 = arith.constant 0 : index
    %c0_54 = arith.constant 0 : index
    %80 = vector.load %arg8[%c0_52, %c0_53, %c0_54] : memref<1x8x256xf32, #tpu.memory_space<vmem>>, vector<1x8x256xf32>
    %81 = vector.shape_cast %80 : vector<1x8x256xf32> to vector<8x256xf32>
    %82 = vector.shape_cast %79 : vector<8x256xf32> to vector<1x8x256xf32>
    tpu.vector_store %arg8[%c0_52, %c0_53, %c0_54], %82 {strides = array<i32>} : memref<1x8x256xf32, #tpu.memory_space<vmem>>, vector<1x8x256xf32>,
    %c0_55 = arith.constant 0 : index
    %c0_56 = arith.constant 0 : index
    %c0_57 = arith.constant 0 : index
    %83 = vector.load %arg4[%c0_55, %c0_56, %c0_57] : memref<1x8x256xf32, #tpu.memory_space<vmem>>, vector<1x8x256xf32>
    %84 = vector.shape_cast %83 : vector<1x8x256xf32> to vector<8x256xf32>
    %cst_58 = arith.constant 1.000000e+00 : f32
    %85 = vector.broadcast %cst_58 : f32 to vector<256x1xf32>
    %86 = arith.mulf %79, %79 : vector<8x256xf32>
    %87 = arith.mulf %84, %79 : vector<8x256xf32>
    %88 = tpu.concatenate %79, %86, %87 in 0 : vector<8x256xf32>, vector<8x256xf32>, vector<8x256xf32> -> vector<24x256xf32>
    %cst_59 = arith.constant dense<0.000000e+00> : vector<24x1xf32>
    %89 = tpu.matmul %88, %85, %cst_59 {dimension_numbers = #tpu.dot_dimension_numbers<[1], [0], [0], [1], [0, 0, 1, 1], [], []>} : vector<24x256xf32>, vector<256x1xf32>, vector<24x1xf32> -> vector<24x1xf32>
    %c0_60 = arith.constant 0 : index
    %c0_61 = arith.constant 0 : index
    %c0_62 = arith.constant 0 : index
    %90 = vector.load %arg9[%c0_60, %c0_61, %c0_62] : memref<1x24x1xf32, #tpu.memory_space<vmem>>, vector<1x24x1xf32>
    %91 = vector.shape_cast %90 : vector<1x24x1xf32> to vector<24x1xf32>
    %92 = vector.shape_cast %89 : vector<24x1xf32> to vector<1x24x1xf32>
    tpu.vector_store %arg9[%c0_60, %c0_61, %c0_62], %92 {strides = array<i32>} : memref<1x24x1xf32, #tpu.memory_space<vmem>>, vector<1x24x1xf32>,
    return
  }
  func.func @transform_0(%arg0: i32) -> (i32, i32, i32) {
    %c0_i32 = arith.constant 0 : i32
    %c0_i32_0 = arith.constant 0 : i32
    %c0_i32_1 = arith.constant 0 : i32
    return %arg0, %c0_i32, %c0_i32_0 : i32, i32, i32
  }
  func.func @transform_1(%arg0: i32) -> (i32, i32) {
    %c0_i32 = arith.constant 0 : i32
    %c0_i32_0 = arith.constant 0 : i32
    %c0_i32_1 = arith.constant 0 : i32
    return %c0_i32, %c0_i32_0 : i32, i32
  }
  func.func @transform_2(%arg0: i32) -> (i32, i32) {
    %c0_i32 = arith.constant 0 : i32
    %c0_i32_0 = arith.constant 0 : i32
    %c0_i32_1 = arith.constant 0 : i32
    return %c0_i32, %c0_i32_0 : i32, i32
  }
  func.func @transform_3(%arg0: i32) -> (i32, i32, i32) {
    %c0_i32 = arith.constant 0 : i32
    %c0_i32_0 = arith.constant 0 : i32
    %c0_i32_1 = arith.constant 0 : i32
    return %arg0, %c0_i32, %c0_i32_0 : i32, i32, i32
  }
  func.func @transform_4(%arg0: i32) -> (i32, i32, i32) {
    %c0_i32 = arith.constant 0 : i32
    %c0_i32_0 = arith.constant 0 : i32
    %c0_i32_1 = arith.constant 0 : i32
    %c0_i32_2 = arith.constant 0 : i32
    return %c0_i32, %c0_i32_0, %c0_i32_1 : i32, i32, i32
  }
  func.func @transform_5(%arg0: i32) -> (i32, i32) {
    %c0_i32 = arith.constant 0 : i32
    %c0_i32_0 = arith.constant 0 : i32
    %c0_i32_1 = arith.constant 0 : i32
    return %c0_i32, %c0_i32_0 : i32, i32
  }
  func.func @transform_6(%arg0: i32) -> (i32, i32) {
    %c0_i32 = arith.constant 0 : i32
    %c0_i32_0 = arith.constant 0 : i32
    %c0_i32_1 = arith.constant 0 : i32
    return %c0_i32, %c0_i32_0 : i32, i32
  }
  func.func @transform_7(%arg0: i32) -> (i32, i32, i32) {
    %c0_i32 = arith.constant 0 : i32
    %c0_i32_0 = arith.constant 0 : i32
    %c0_i32_1 = arith.constant 0 : i32
    return %arg0, %c0_i32, %c0_i32_0 : i32, i32, i32
  }
  func.func @transform_8(%arg0: i32) -> (i32, i32, i32) {
    %c0_i32 = arith.constant 0 : i32
    %c0_i32_0 = arith.constant 0 : i32
    %c0_i32_1 = arith.constant 0 : i32
    return %arg0, %c0_i32, %c0_i32_0 : i32, i32, i32
  }
}

module attributes {stable_mosaic.version = 11 : i64} {
  func.func @_final_kernel(%arg0: i32, %arg1: memref<1x8x256xf32, #tpu.memory_space<vmem>>, %arg2: memref<1x8x256xf32, #tpu.memory_space<vmem>>, %arg3: memref<8x1xf32, #tpu.memory_space<vmem>>, %arg4: memref<8x1xf32, #tpu.memory_space<vmem>>, %arg5: memref<8x1xf32, #tpu.memory_space<vmem>>, %arg6: memref<1x8x256xf32, #tpu.memory_space<vmem>>) attributes {dimension_semantics = [#tpu.dimension_semantics<parallel>], iteration_bounds = array<i64: 2>, scalar_prefetch = 0 : i64, scratch_operands = 0 : i64, tpu.core_type = #tpu.core_type<tc>, window_params = [{transform_indices = @transform_0, window_bounds = array<i64: 1, 8, 256>}, {transform_indices = @transform_1, window_bounds = array<i64: 1, 8, 256>}, {pipeline_mode = #tpu.pipeline_mode<synchronous>, transform_indices = @transform_2, window_bounds = array<i64: 8, 1>}, {pipeline_mode = #tpu.pipeline_mode<synchronous>, transform_indices = @transform_3, window_bounds = array<i64: 8, 1>}, {pipeline_mode = #tpu.pipeline_mode<synchronous>, transform_indices = @transform_4, window_bounds = array<i64: 8, 1>}, {transform_indices = @transform_5, window_bounds = array<i64: 1, 8, 256>}]} {
    %c0 = arith.constant 0 : index
    %c0_0 = arith.constant 0 : index
    %0 = vector.load %arg3[%c0, %c0_0] : memref<8x1xf32, #tpu.memory_space<vmem>>, vector<8x1xf32>
    %c0_1 = arith.constant 0 : index
    %c0_2 = arith.constant 0 : index
    %c0_3 = arith.constant 0 : index
    %1 = vector.load %arg1[%c0_1, %c0_2, %c0_3] : memref<1x8x256xf32, #tpu.memory_space<vmem>>, vector<1x8x256xf32>
    %2 = vector.shape_cast %1 : vector<1x8x256xf32> to vector<8x256xf32>
    %3 = vector.broadcast %0 : vector<8x1xf32> to vector<8x256xf32>
    %4 = arith.mulf %3, %2 : vector<8x256xf32>
    %c0_4 = arith.constant 0 : index
    %c0_5 = arith.constant 0 : index
    %5 = vector.load %arg4[%c0_4, %c0_5] : memref<8x1xf32, #tpu.memory_space<vmem>>, vector<8x1xf32>
    %c0_6 = arith.constant 0 : index
    %c0_7 = arith.constant 0 : index
    %c0_8 = arith.constant 0 : index
    %6 = vector.load %arg2[%c0_6, %c0_7, %c0_8] : memref<1x8x256xf32, #tpu.memory_space<vmem>>, vector<1x8x256xf32>
    %7 = vector.shape_cast %6 : vector<1x8x256xf32> to vector<8x256xf32>
    %8 = vector.broadcast %5 : vector<8x1xf32> to vector<8x256xf32>
    %9 = arith.mulf %8, %7 : vector<8x256xf32>
    %10 = arith.addf %4, %9 : vector<8x256xf32>
    %c0_9 = arith.constant 0 : index
    %c0_10 = arith.constant 0 : index
    %11 = vector.load %arg5[%c0_9, %c0_10] : memref<8x1xf32, #tpu.memory_space<vmem>>, vector<8x1xf32>
    %12 = vector.broadcast %11 : vector<8x1xf32> to vector<8x256xf32>
    %13 = arith.addf %10, %12 : vector<8x256xf32>
    %cst = arith.constant 0.000000e+00 : f32
    %14 = vector.broadcast %cst : f32 to vector<8x256xf32>
    %15 = arith.maximumf %13, %14 : vector<8x256xf32>
    %c0_11 = arith.constant 0 : index
    %c0_12 = arith.constant 0 : index
    %c0_13 = arith.constant 0 : index
    %16 = vector.load %arg6[%c0_11, %c0_12, %c0_13] : memref<1x8x256xf32, #tpu.memory_space<vmem>>, vector<1x8x256xf32>
    %17 = vector.shape_cast %16 : vector<1x8x256xf32> to vector<8x256xf32>
    %18 = vector.shape_cast %15 : vector<8x256xf32> to vector<1x8x256xf32>
    tpu.vector_store %arg6[%c0_11, %c0_12, %c0_13], %18 {strides = array<i32>} : memref<1x8x256xf32, #tpu.memory_space<vmem>>, vector<1x8x256xf32>,
    return
  }
  func.func @transform_0(%arg0: i32) -> (i32, i32, i32) {
    %c0_i32 = arith.constant 0 : i32
    %c0_i32_0 = arith.constant 0 : i32
    %c0_i32_1 = arith.constant 0 : i32
    return %arg0, %c0_i32, %c0_i32_0 : i32, i32, i32
  }
  func.func @transform_1(%arg0: i32) -> (i32, i32, i32) {
    %c0_i32 = arith.constant 0 : i32
    %c0_i32_0 = arith.constant 0 : i32
    %c0_i32_1 = arith.constant 0 : i32
    return %arg0, %c0_i32, %c0_i32_0 : i32, i32, i32
  }
  func.func @transform_2(%arg0: i32) -> (i32, i32) {
    %c0_i32 = arith.constant 0 : i32
    %c0_i32_0 = arith.constant 0 : i32
    %c0_i32_1 = arith.constant 0 : i32
    return %c0_i32, %c0_i32_0 : i32, i32
  }
  func.func @transform_3(%arg0: i32) -> (i32, i32) {
    %c0_i32 = arith.constant 0 : i32
    %c0_i32_0 = arith.constant 0 : i32
    %c0_i32_1 = arith.constant 0 : i32
    return %c0_i32, %c0_i32_0 : i32, i32
  }
  func.func @transform_4(%arg0: i32) -> (i32, i32) {
    %c0_i32 = arith.constant 0 : i32
    %c0_i32_0 = arith.constant 0 : i32
    %c0_i32_1 = arith.constant 0 : i32
    return %c0_i32, %c0_i32_0 : i32, i32
  }
  func.func @transform_5(%arg0: i32) -> (i32, i32, i32) {
    %c0_i32 = arith.constant 0 : i32
    %c0_i32_0 = arith.constant 0 : i32
    %c0_i32_1 = arith.constant 0 : i32
    return %arg0, %c0_i32, %c0_i32_0 : i32, i32, i32
  }
}

</mosaic_0001>

<llo_original>
// kernel: resnet_block_forward.5
$region0: #{resnet_block_forward.5}
  #allocation0 [shape = 'u32[]', space=smem, size = 0x4, offset = 0x4, fixed_abs, tag = 'smem constant byte address 0x4 - core index']
  #allocation1 [shape = 'u32[144,128]{1,0:T(1,128)}', space=vmem, size = 0x12000, scoped, tag = 'internal scratch']
  %s0 = inlined_call_operand.vmem [shape: f32[2,8,256], index: 0, kind: input, shape index: {}]
  %s1 = inlined_call_operand.vmem [shape: f32[2,8,256], index: 1, kind: input, shape index: {}, may-alias: {1,5}]
  %s2 = inlined_call_operand.vmem [shape: f32[8,1], index: 2, kind: input, shape index: {}]
  %s3 = inlined_call_operand.vmem [shape: f32[8,1], index: 3, kind: input, shape index: {}]
  %s4 = inlined_call_operand.vmem [shape: f32[8,1], index: 4, kind: input, shape index: {}]
  %s5 = inlined_call_operand.vmem [shape: f32[2,8,256], index: 5, kind: output, shape index: {}, may-alias: {1,5}]
  %s6 = sld [smem:[#allocation0]]
  $region53: #{resnet_block_forward.5} parent=0
    _
  %s8 = ssub.s32 1, %s6
  %s9 = scalar_select 0, %s8, %s6
  loop: start=0, step=1, limit=4
  $region2: #{resnet_block_forward.5} parent=0 // loop_pre_header
    _
  $region3: #{resnet_block_forward.5} parent=0 // loop_header
    %s11 = sphi 0, %s15
    %p12 = scmp.ge.s32.totalorder %s11, 4
    %s21 = sphi 0, %s23
    %s24 = sphi 0, %s21
    %s25 = sphi 0, %s24
    %s41 = sphi 0, %s25
    %s47 = sphi 0, %s49
    %s50 = sphi 0, %s47
    %s51 = sphi 0, %s50
    %s67 = sphi 0, %s51
    %s71 = sphi 0, %s71
    %s73 = sphi 0, %s71
    %s74 = sphi 0, %s73
    %s88 = sphi 0, %s74
    %s92 = sphi 0, %s92
    %s94 = sphi 0, %s92
    %s95 = sphi 0, %s94
    %s109 = sphi 0, %s95
    %s113 = sphi 0, %s113
    %s115 = sphi 0, %s113
    %s116 = sphi 0, %s115
    %s130 = sphi 0, %s116
    %s136 = sphi 0, %s138
    %s139 = sphi 0, %s136
    %s140 = sphi 0, %s139
    %s156 = sphi 0, %s140
  $region4: #{resnet_block_forward.5} parent=0 // loop_header_branch
    %14 = sbr.rel (%p12) target = $region8
  $region5: #{resnet_block_forward.5} parent=0 // loop_body
    %s16 = ssub.s32 %s11, 1
    %s17 = ssub.s32 %s11, 2
    %s18 = sadd.s32 %s11, 1
    %s19 = ssub.s32 %s11, %s18
    %p20 = scmp.eq.s32.totalorder %s19, 0
    %s22 = sadd.s32 %s21, 1
    %s23 = scalar_select %p20, %s21, %s22
    %p26 = pneg %p20
    %p27 = scmp.eq.s32.totalorder %s11, 1
    %p28 = por %p26, %p27
    %p29 = scmp.ne.s32.totalorder %s21, %s24
    %p30 = scmp.eq.s32.totalorder %s11, 0
    %p31 = por %p29, %p30
    %p32 = scmp.ne.s32.totalorder %s21, %s24
    %p33 = scmp.eq.s32.totalorder %s16, 1
    %p34 = por %p32, %p33
    %p35 = scmp.ne.s32.totalorder %s24, %s25
    %p36 = scmp.eq.s32.totalorder %s16, 0
    %p37 = por %p35, %p36
    %p38 = scmp.ne.s32.totalorder %s24, %s25
    %p39 = scmp.eq.s32.totalorder %s17, 1
    %p40 = por %p38, %p39
    %p42 = scmp.ne.s32.totalorder %s25, %s41
    %p43 = scmp.eq.s32.totalorder %s17, 0
    %p44 = por %p42, %p43
    %s45 = ssub.s32 %s11, %s18
    %p46 = scmp.eq.s32.totalorder %s45, 0
    %s48 = sadd.s32 %s47, 1
    %s49 = scalar_select %p46, %s47, %s48
    %p52 = pneg %p46
    %p53 = scmp.eq.s32.totalorder %s11, 1
    %p54 = por %p52, %p53
    %p55 = scmp.ne.s32.totalorder %s47, %s50
    %p56 = scmp.eq.s32.totalorder %s11, 0
    %p57 = por %p55, %p56
    %p58 = scmp.ne.s32.totalorder %s47, %s50
    %p59 = scmp.eq.s32.totalorder %s16, 1
    %p60 = por %p58, %p59
    %p61 = scmp.ne.s32.totalorder %s50, %s51
    %p62 = scmp.eq.s32.totalorder %s16, 0
    %p63 = por %p61, %p62
    %p64 = scmp.ne.s32.totalorder %s50, %s51
    %p65 = scmp.eq.s32.totalorder %s17, 1
    %p66 = por %p64, %p65
    %p68 = scmp.ne.s32.totalorder %s51, %s67
    %p69 = scmp.eq.s32.totalorder %s17, 0
    %p70 = por %p68, %p69
    %s72 = sadd.s32 %s71, 1
    %p75 = scmp.eq.s32.totalorder %s11, 1
    %p76 = scmp.ne.s32.totalorder %s71, %s73
    %p77 = scmp.eq.s32.totalorder %s11, 0
    %p78 = por %p76, %p77
    %p79 = scmp.ne.s32.totalorder %s71, %s73
    %p80 = scmp.eq.s32.totalorder %s16, 1
    %p81 = por %p79, %p80
    %p82 = scmp.ne.s32.totalorder %s73, %s74
    %p83 = scmp.eq.s32.totalorder %s16, 0
    %p84 = por %p82, %p83
    %p85 = scmp.ne.s32.totalorder %s73, %s74
    %p86 = scmp.eq.s32.totalorder %s17, 1
    %p87 = por %p85, %p86
    %p89 = scmp.ne.s32.totalorder %s74, %s88
    %p90 = scmp.eq.s32.totalorder %s17, 0
    %p91 = por %p89, %p90
    %s93 = sadd.s32 %s92, 1
    %p96 = scmp.eq.s32.totalorder %s11, 1
    %p97 = scmp.ne.s32.totalorder %s92, %s94
    %p98 = scmp.eq.s32.totalorder %s11, 0
    %p99 = por %p97, %p98
    %p100 = scmp.ne.s32.totalorder %s92, %s94
    %p101 = scmp.eq.s32.totalorder %s16, 1
    %p102 = por %p100, %p101
    %p103 = scmp.ne.s32.totalorder %s94, %s95
    %p104 = scmp.eq.s32.totalorder %s16, 0
    %p105 = por %p103, %p104
    %p106 = scmp.ne.s32.totalorder %s94, %s95
    %p107 = scmp.eq.s32.totalorder %s17, 1
    %p108 = por %p106, %p107
    %p110 = scmp.ne.s32.totalorder %s95, %s109
    %p111 = scmp.eq.s32.totalorder %s17, 0
    %p112 = por %p110, %p111
    %s114 = sadd.s32 %s113, 1
    %p117 = scmp.eq.s32.totalorder %s11, 1
    %p118 = scmp.ne.s32.totalorder %s113, %s115
    %p119 = scmp.eq.s32.totalorder %s11, 0
    %p120 = por %p118, %p119
    %p121 = scmp.ne.s32.totalorder %s113, %s115
    %p122 = scmp.eq.s32.totalorder %s16, 1
    %p123 = por %p121, %p122
    %p124 = scmp.ne.s32.totalorder %s115, %s116
    %p125 = scmp.eq.s32.totalorder %s16, 0
    %p126 = por %p124, %p125
    %p127 = scmp.ne.s32.totalorder %s115, %s116
    %p128 = scmp.eq.s32.totalorder %s17, 1
    %p129 = por %p127, %p128
    %p131 = scmp.ne.s32.totalorder %s116, %s130
    %p132 = scmp.eq.s32.totalorder %s17, 0
    %p133 = por %p131, %p132
    %s134 = ssub.s32 %s11, %s18
    %p135 = scmp.eq.s32.totalorder %s134, 0
    %s137 = sadd.s32 %s136, 1
    %s138 = scalar_select %p135, %s136, %s137
    %p141 = pneg %p135
    %p142 = scmp.eq.s32.totalorder %s11, 1
    %p143 = por %p141, %p142
    %p144 = scmp.ne.s32.totalorder %s136, %s139
    %p145 = scmp.eq.s32.totalorder %s11, 0
    %p146 = por %p144, %p145
    %p147 = scmp.ne.s32.totalorder %s136, %s139
    %p148 = scmp.eq.s32.totalorder %s16, 1
    %p149 = por %p147, %p148
    %p150 = scmp.ne.s32.totalorder %s139, %s140
    %p151 = scmp.eq.s32.totalorder %s16, 0
    %p152 = por %p150, %p151
    %p153 = scmp.ne.s32.totalorder %s139, %s140
    %p154 = scmp.eq.s32.totalorder %s17, 1
    %p155 = por %p153, %p154
    %p157 = scmp.ne.s32.totalorder %s140, %s156
    %p158 = scmp.eq.s32.totalorder %s17, 0
    %p159 = por %p157, %p158
    %p160 = scmp.le.s32.totalorder 1, %s11
    %p161 = scmp.lt.s32.totalorder %s11, 3
    %p162 = pnand %p160, %p161
    %p163 = pneg %p162
    // Predicated region
    $region9: #{resnet_block_forward.5} parent=5 // pred_check
      _
    $region10: #{resnet_block_forward.5} parent=5 // pred_check_branch
      %165 = sbr.rel (%p162) target = $region12
    $region11: #{resnet_block_forward.5} parent=5 // pred_region
      %s166 = ssub.s32 %s11, 1
      // Predicated region
      $region13: #{resnet_block_forward.5} parent=11 // pred_check
        %p167 = pneg %p84
      $region14: #{resnet_block_forward.5} parent=11 // pred_check_branch
        %169 = sbr.rel (%p167) target = $region16
      $region15: #{resnet_block_forward.5} parent=11 // pred_region
        _
      $region16: #{resnet_block_forward.5} parent=11 // pred_fallthru
        _
      // Predicated region
      $region17: #{resnet_block_forward.5} parent=11 // pred_check
        %p170 = pneg %p105
      $region18: #{resnet_block_forward.5} parent=11 // pred_check_branch
        %172 = sbr.rel (%p170) target = $region20
      $region19: #{resnet_block_forward.5} parent=11 // pred_region
        _
      $region20: #{resnet_block_forward.5} parent=11 // pred_fallthru
        _
      // Predicated region
      $region21: #{resnet_block_forward.5} parent=11 // pred_check
        %p173 = pneg %p126
      $region22: #{resnet_block_forward.5} parent=11 // pred_check_branch
        %175 = sbr.rel (%p173) target = $region24
      $region23: #{resnet_block_forward.5} parent=11 // pred_region
        _
      $region24: #{resnet_block_forward.5} parent=11 // pred_fallthru
        _
    $region12: #{resnet_block_forward.5} parent=5 // pred_fallthru
      _
    %p176 = scmp.lt.s32.totalorder %s11, 2
    // Predicated region
    $region25: #{resnet_block_forward.5} parent=5 // pred_check
      %p177 = pneg %p176
    $region26: #{resnet_block_forward.5} parent=5 // pred_check_branch
      %179 = sbr.rel (%p177) target = $region28
    $region27: #{resnet_block_forward.5} parent=5 // pred_region
      // Predicated region
      $region29: #{resnet_block_forward.5} parent=27 // pred_check
        %p180 = pneg %p31
      $region30: #{resnet_block_forward.5} parent=27 // pred_check_branch
        %182 = sbr.rel (%p180) target = $region32
      $region31: #{resnet_block_forward.5} parent=27 // pred_region
        %p183 = scmp.lt.s32.totalorder %s11, 1
        %s184 = scalar_select %p183, %s11, 1
        %s185 = smul.addr %s184, 2
        %s186 = smul.addr %s185, 8
        %s187 = scalar_lea.vmem %s0, %s186
      $region32: #{resnet_block_forward.5} parent=27 // pred_fallthru
        _
      // Predicated region
      $region33: #{resnet_block_forward.5} parent=27 // pred_check
        %p188 = pneg %p57
      $region34: #{resnet_block_forward.5} parent=27 // pred_check_branch
        %190 = sbr.rel (%p188) target = $region36
      $region35: #{resnet_block_forward.5} parent=27 // pred_region
        %p191 = scmp.lt.s32.totalorder %s11, 1
        %s192 = scalar_select %p191, %s11, 1
        %s193 = smul.addr %s192, 2
        %s194 = smul.addr %s193, 8
        %s195 = scalar_lea.vmem %s1, %s194
      $region36: #{resnet_block_forward.5} parent=27 // pred_fallthru
        _
    $region28: #{resnet_block_forward.5} parent=5 // pred_fallthru
      _
    %p196 = scmp.le.s32.totalorder 1, %s11
    %p197 = scmp.lt.s32.totalorder %s11, 3
    %p198 = pnand %p196, %p197
    %p199 = pneg %p198
    // Predicated region
    $region37: #{resnet_block_forward.5} parent=5 // pred_check
      _
    $region38: #{resnet_block_forward.5} parent=5 // pred_check_branch
      %201 = sbr.rel (%p198) target = $region40
    $region39: #{resnet_block_forward.5} parent=5 // pred_region
      %s202 = ssub.s32 %s11, 1
      %p203 = scmp.lt.s32.totalorder %s16, 1
      %s204 = scalar_select %p203, %s16, 1
      %s205 = smul.addr %s204, 2
      %s206 = smul.addr %s205, 8
      %s207 = scalar_lea.vmem %s0, %s206
      %p208 = pneg %p37
      %p209 = pneg %p34
      %p210 = scmp.lt.s32.totalorder %s16, 1
      %s211 = scalar_select %p210, %s16, 1
      %s212 = smul.addr %s211, 2
      %s213 = smul.addr %s212, 8
      %s214 = scalar_lea.vmem %s1, %s213
      %p215 = pneg %p63
      %p216 = pneg %p60
      %p217 = pneg %p84
      %p218 = pneg %p81
      %p219 = pneg %p105
      %p220 = pneg %p102
      %p221 = pneg %p126
      %p222 = pneg %p123
      %p223 = pneg %p152
      %p224 = pneg %p149
      %p225 = scmp.lt.s32.totalorder %s16, 1
      %s226 = scalar_select %p225, %s16, 1
      %s227 = smul.addr %s226, 2
      %s228 = smul.addr %s227, 8
      %s229 = scalar_lea.vmem %s5, %s228
      %p230 = scmp.lt.s32.totalorder %s16, 1
      %s231 = scalar_select %p230, %s16, 1
      %s232 = smul.addr %s231, 2
      %s233 = smul.addr %s232, 8
      %s234 = scalar_lea.vmem %s0, %s233
      %p235 = scmp.lt.s32.totalorder %s16, 1
      %s236 = scalar_select %p235, %s16, 1
      %s237 = smul.addr %s236, 2
      %s238 = smul.addr %s237, 8
      %s239 = scalar_lea.vmem %s1, %s238
      %p240 = scmp.lt.s32.totalorder %s16, 1
      %s241 = scalar_select %p240, %s16, 1
      %s242 = smul.addr %s241, 2
      %s243 = smul.addr %s242, 8
      %s244 = scalar_lea.vmem %s5, %s243
      %v245 = vld [vmem:[%s2] sm:$0xff]
      %v246 = vld [vmem:[%s234] sm:$0xff]
      %v247 = vld [vmem:[%s234 + $0x8] sm:$0xff]
      %249 = vset.pattern.permute.xlu0 0
      %250 = vperm.xlu0 %249, %v245
      %v251 = vpop.permute.xlu0 %250
      %v253 = vmul.f32 %v251, %v246
      %v254 = vmul.f32 %v251, %v247
      %v255 = vld [vmem:[%s3] sm:$0xff]
      %v256 = vld [vmem:[%s239] sm:$0xff]
      %v257 = vld [vmem:[%s239 + $0x8] sm:$0xff]
      %259 = vset.pattern.permute.xlu0 0
      %260 = vperm.xlu0 %259, %v255
      %v261 = vpop.permute.xlu0 %260
      %v263 = vmul.f32 %v261, %v256
      %v264 = vmul.f32 %v261, %v257
      %v265 = vadd.f32 %v253, %v263
      %v266 = vadd.f32 %v254, %v264
      %v267 = vld [vmem:[%s4] sm:$0xff]
      %269 = vset.pattern.permute.xlu0 0
      %270 = vperm.xlu0 %269, %v267
      %v271 = vpop.permute.xlu0 %270
      %v273 = vadd.f32 %v265, %v271
      %v274 = vadd.f32 %v266, %v271
      %v275 = vmax.f32 %v273, 0.0
      %v276 = vmax.f32 %v274, 0.0
      %277 = vst [vmem:[%s244] sm:$0xff] %v275
      %278 = vst [vmem:[%s244 + $0x8] sm:$0xff] %v276
      %p279 = scmp.lt.s32.totalorder %s16, 1
      %s280 = scalar_select %p279, %s16, 1
      %s281 = smul.addr %s280, 2
      %s282 = smul.addr %s281, 8
      %s283 = scalar_lea.vmem %s5, %s282
      // Predicated region
      $region41: #{resnet_block_forward.5} parent=39 // pred_check
        %p284 = pneg %p149
      $region42: #{resnet_block_forward.5} parent=39 // pred_check_branch
        %286 = sbr.rel (%p284) target = $region44
      $region43: #{resnet_block_forward.5} parent=39 // pred_region
        _
      $region44: #{resnet_block_forward.5} parent=39 // pred_fallthru
        _
    $region40: #{resnet_block_forward.5} parent=5 // pred_fallthru
      _
    %p287 = scmp.le.s32.totalorder 2, %s11
    // Predicated region
    $region45: #{resnet_block_forward.5} parent=5 // pred_check
      %p288 = pneg %p287
    $region46: #{resnet_block_forward.5} parent=5 // pred_check_branch
      %290 = sbr.rel (%p288) target = $region48
    $region47: #{resnet_block_forward.5} parent=5 // pred_region
      %s291 = ssub.s32 %s11, 2
      // Predicated region
      $region49: #{resnet_block_forward.5} parent=47 // pred_check
        %p292 = pneg %p155
      $region50: #{resnet_block_forward.5} parent=47 // pred_check_branch
        %294 = sbr.rel (%p292) target = $region52
      $region51: #{resnet_block_forward.5} parent=47 // pred_region
        %p295 = scmp.lt.s32.totalorder %s17, 1
        %s296 = scalar_select %p295, %s17, 1
        %s297 = smul.addr %s296, 2
        %s298 = smul.addr %s297, 8
        %s299 = scalar_lea.vmem %s5, %s298
      $region52: #{resnet_block_forward.5} parent=47 // pred_fallthru
        _
    $region48: #{resnet_block_forward.5} parent=5 // pred_fallthru
      _
  $region6: #{resnet_block_forward.5} parent=0 // loop_footer
    %s15 = sadd.s32 1, %s11
  $region7: #{resnet_block_forward.5} parent=0 // loop_footer_branch
    %10 = sbr.rel target = $region3
  $region8: #{resnet_block_forward.5} parent=0 // loop_exit
    _

// kernel: resnet_block_forward.4
$region0: #{resnet_block_forward.4}
  #allocation0 [shape = 'u32[]', space=smem, size = 0x4, offset = 0x4, fixed_abs, tag = 'smem constant byte address 0x4 - core index']
  #allocation1 [shape = 'u32[144,128]{1,0:T(1,128)}', space=vmem, size = 0x12000, scoped, tag = 'internal scratch']
  %s0 = inlined_call_operand.vmem [shape: f32[2,8,256], index: 0, kind: input, shape index: {}]
  %s1 = inlined_call_operand.vmem [shape: f32[8,1], index: 1, kind: input, shape index: {}]
  %s2 = inlined_call_operand.vmem [shape: f32[8,1], index: 2, kind: input, shape index: {}]
  %s3 = inlined_call_operand.vmem [shape: f32[2,8,256], index: 3, kind: input, shape index: {}]
  %s4 = inlined_call_operand.vmem [shape: f32[9,8,8], index: 4, kind: input, shape index: {}]
  %s5 = inlined_call_operand.vmem [shape: f32[8,1], index: 5, kind: input, shape index: {}]
  %s6 = inlined_call_operand.vmem [shape: f32[9,256], index: 6, kind: input, shape index: {}]
  %s7 = inlined_call_operand.vmem [shape: f32[2,8,256], index: 7, kind: output, shape index: {0}]
  %s8 = inlined_call_operand.vmem [shape: f32[2,24,1], index: 8, kind: output, shape index: {1}]
  %9 = xla_tuple %s7, %s8
  %s10 = sld [smem:[#allocation0]]
  $region69: #{resnet_block_forward.4} parent=0
    _
  %s12 = ssub.s32 1, %s10
  %s13 = scalar_select 0, %s12, %s10
  loop: start=0, step=1, limit=4
  $region2: #{resnet_block_forward.4} parent=0 // loop_pre_header
    _
  $region3: #{resnet_block_forward.4} parent=0 // loop_header
    %s15 = sphi 0, %s19
    %p16 = scmp.ge.s32.totalorder %s15, 4
    %s25 = sphi 0, %s27
    %s28 = sphi 0, %s25
    %s29 = sphi 0, %s28
    %s45 = sphi 0, %s29
    %s49 = sphi 0, %s49
    %s51 = sphi 0, %s49
    %s52 = sphi 0, %s51
    %s66 = sphi 0, %s52
    %s70 = sphi 0, %s70
    %s72 = sphi 0, %s70
    %s73 = sphi 0, %s72
    %s87 = sphi 0, %s73
    %s93 = sphi 0, %s95
    %s96 = sphi 0, %s93
    %s97 = sphi 0, %s96
    %s113 = sphi 0, %s97
    %s117 = sphi 0, %s117
    %s119 = sphi 0, %s117
    %s120 = sphi 0, %s119
    %s134 = sphi 0, %s120
    %s138 = sphi 0, %s138
    %s140 = sphi 0, %s138
    %s141 = sphi 0, %s140
    %s155 = sphi 0, %s141
    %s159 = sphi 0, %s159
    %s161 = sphi 0, %s159
    %s162 = sphi 0, %s161
    %s176 = sphi 0, %s162
    %s182 = sphi 0, %s184
    %s185 = sphi 0, %s182
    %s186 = sphi 0, %s185
    %s202 = sphi 0, %s186
    %s208 = sphi 0, %s210
    %s211 = sphi 0, %s208
    %s212 = sphi 0, %s211
    %s228 = sphi 0, %s212
  $region4: #{resnet_block_forward.4} parent=0 // loop_header_branch
    %18 = sbr.rel (%p16) target = $region8
  $region5: #{resnet_block_forward.4} parent=0 // loop_body
    %s20 = ssub.s32 %s15, 1
    %s21 = ssub.s32 %s15, 2
    %s22 = sadd.s32 %s15, 1
    %s23 = ssub.s32 %s15, %s22
    %p24 = scmp.eq.s32.totalorder %s23, 0
    %s26 = sadd.s32 %s25, 1
    %s27 = scalar_select %p24, %s25, %s26
    %p30 = pneg %p24
    %p31 = scmp.eq.s32.totalorder %s15, 1
    %p32 = por %p30, %p31
    %p33 = scmp.ne.s32.totalorder %s25, %s28
    %p34 = scmp.eq.s32.totalorder %s15, 0
    %p35 = por %p33, %p34
    %p36 = scmp.ne.s32.totalorder %s25, %s28
    %p37 = scmp.eq.s32.totalorder %s20, 1
    %p38 = por %p36, %p37
    %p39 = scmp.ne.s32.totalorder %s28, %s29
    %p40 = scmp.eq.s32.totalorder %s20, 0
    %p41 = por %p39, %p40
    %p42 = scmp.ne.s32.totalorder %s28, %s29
    %p43 = scmp.eq.s32.totalorder %s21, 1
    %p44 = por %p42, %p43
    %p46 = scmp.ne.s32.totalorder %s29, %s45
    %p47 = scmp.eq.s32.totalorder %s21, 0
    %p48 = por %p46, %p47
    %s50 = sadd.s32 %s49, 1
    %p53 = scmp.eq.s32.totalorder %s15, 1
    %p54 = scmp.ne.s32.totalorder %s49, %s51
    %p55 = scmp.eq.s32.totalorder %s15, 0
    %p56 = por %p54, %p55
    %p57 = scmp.ne.s32.totalorder %s49, %s51
    %p58 = scmp.eq.s32.totalorder %s20, 1
    %p59 = por %p57, %p58
    %p60 = scmp.ne.s32.totalorder %s51, %s52
    %p61 = scmp.eq.s32.totalorder %s20, 0
    %p62 = por %p60, %p61
    %p63 = scmp.ne.s32.totalorder %s51, %s52
    %p64 = scmp.eq.s32.totalorder %s21, 1
    %p65 = por %p63, %p64
    %p67 = scmp.ne.s32.totalorder %s52, %s66
    %p68 = scmp.eq.s32.totalorder %s21, 0
    %p69 = por %p67, %p68
    %s71 = sadd.s32 %s70, 1
    %p74 = scmp.eq.s32.totalorder %s15, 1
    %p75 = scmp.ne.s32.totalorder %s70, %s72
    %p76 = scmp.eq.s32.totalorder %s15, 0
    %p77 = por %p75, %p76
    %p78 = scmp.ne.s32.totalorder %s70, %s72
    %p79 = scmp.eq.s32.totalorder %s20, 1
    %p80 = por %p78, %p79
    %p81 = scmp.ne.s32.totalorder %s72, %s73
    %p82 = scmp.eq.s32.totalorder %s20, 0
    %p83 = por %p81, %p82
    %p84 = scmp.ne.s32.totalorder %s72, %s73
    %p85 = scmp.eq.s32.totalorder %s21, 1
    %p86 = por %p84, %p85
    %p88 = scmp.ne.s32.totalorder %s73, %s87
    %p89 = scmp.eq.s32.totalorder %s21, 0
    %p90 = por %p88, %p89
    %s91 = ssub.s32 %s15, %s22
    %p92 = scmp.eq.s32.totalorder %s91, 0
    %s94 = sadd.s32 %s93, 1
    %s95 = scalar_select %p92, %s93, %s94
    %p98 = pneg %p92
    %p99 = scmp.eq.s32.totalorder %s15, 1
    %p100 = por %p98, %p99
    %p101 = scmp.ne.s32.totalorder %s93, %s96
    %p102 = scmp.eq.s32.totalorder %s15, 0
    %p103 = por %p101, %p102
    %p104 = scmp.ne.s32.totalorder %s93, %s96
    %p105 = scmp.eq.s32.totalorder %s20, 1
    %p106 = por %p104, %p105
    %p107 = scmp.ne.s32.totalorder %s96, %s97
    %p108 = scmp.eq.s32.totalorder %s20, 0
    %p109 = por %p107, %p108
    %p110 = scmp.ne.s32.totalorder %s96, %s97
    %p111 = scmp.eq.s32.totalorder %s21, 1
    %p112 = por %p110, %p111
    %p114 = scmp.ne.s32.totalorder %s97, %s113
    %p115 = scmp.eq.s32.totalorder %s21, 0
    %p116 = por %p114, %p115
    %s118 = sadd.s32 %s117, 1
    %p121 = scmp.eq.s32.totalorder %s15, 1
    %p122 = scmp.ne.s32.totalorder %s117, %s119
    %p123 = scmp.eq.s32.totalorder %s15, 0
    %p124 = por %p122, %p123
    %p125 = scmp.ne.s32.totalorder %s117, %s119
    %p126 = scmp.eq.s32.totalorder %s20, 1
    %p127 = por %p125, %p126
    %p128 = scmp.ne.s32.totalorder %s119, %s120
    %p129 = scmp.eq.s32.totalorder %s20, 0
    %p130 = por %p128, %p129
    %p131 = scmp.ne.s32.totalorder %s119, %s120
    %p132 = scmp.eq.s32.totalorder %s21, 1
    %p133 = por %p131, %p132
    %p135 = scmp.ne.s32.totalorder %s120, %s134
    %p136 = scmp.eq.s32.totalorder %s21, 0
    %p137 = por %p135, %p136
    %s139 = sadd.s32 %s138, 1
    %p142 = scmp.eq.s32.totalorder %s15, 1
    %p143 = scmp.ne.s32.totalorder %s138, %s140
    %p144 = scmp.eq.s32.totalorder %s15, 0
    %p145 = por %p143, %p144
    %p146 = scmp.ne.s32.totalorder %s138, %s140
    %p147 = scmp.eq.s32.totalorder %s20, 1
    %p148 = por %p146, %p147
    %p149 = scmp.ne.s32.totalorder %s140, %s141
    %p150 = scmp.eq.s32.totalorder %s20, 0
    %p151 = por %p149, %p150
    %p152 = scmp.ne.s32.totalorder %s140, %s141
    %p153 = scmp.eq.s32.totalorder %s21, 1
    %p154 = por %p152, %p153
    %p156 = scmp.ne.s32.totalorder %s141, %s155
    %p157 = scmp.eq.s32.totalorder %s21, 0
    %p158 = por %p156, %p157
    %s160 = sadd.s32 %s159, 1
    %p163 = scmp.eq.s32.totalorder %s15, 1
    %p164 = scmp.ne.s32.totalorder %s159, %s161
    %p165 = scmp.eq.s32.totalorder %s15, 0
    %p166 = por %p164, %p165
    %p167 = scmp.ne.s32.totalorder %s159, %s161
    %p168 = scmp.eq.s32.totalorder %s20, 1
    %p169 = por %p167, %p168
    %p170 = scmp.ne.s32.totalorder %s161, %s162
    %p171 = scmp.eq.s32.totalorder %s20, 0
    %p172 = por %p170, %p171
    %p173 = scmp.ne.s32.totalorder %s161, %s162
    %p174 = scmp.eq.s32.totalorder %s21, 1
    %p175 = por %p173, %p174
    %p177 = scmp.ne.s32.totalorder %s162, %s176
    %p178 = scmp.eq.s32.totalorder %s21, 0
    %p179 = por %p177, %p178
    %s180 = ssub.s32 %s15, %s22
    %p181 = scmp.eq.s32.totalorder %s180, 0
    %s183 = sadd.s32 %s182, 1
    %s184 = scalar_select %p181, %s182, %s183
    %p187 = pneg %p181
    %p188 = scmp.eq.s32.totalorder %s15, 1
    %p189 = por %p187, %p188
    %p190 = scmp.ne.s32.totalorder %s182, %s185
    %p191 = scmp.eq.s32.totalorder %s15, 0
    %p192 = por %p190, %p191
    %p193 = scmp.ne.s32.totalorder %s182, %s185
    %p194 = scmp.eq.s32.totalorder %s20, 1
    %p195 = por %p193, %p194
    %p196 = scmp.ne.s32.totalorder %s185, %s186
    %p197 = scmp.eq.s32.totalorder %s20, 0
    %p198 = por %p196, %p197
    %p199 = scmp.ne.s32.totalorder %s185, %s186
    %p200 = scmp.eq.s32.totalorder %s21, 1
    %p201 = por %p199, %p200
    %p203 = scmp.ne.s32.totalorder %s186, %s202
    %p204 = scmp.eq.s32.totalorder %s21, 0
    %p205 = por %p203, %p204
    %s206 = ssub.s32 %s15, %s22
    %p207 = scmp.eq.s32.totalorder %s206, 0
    %s209 = sadd.s32 %s208, 1
    %s210 = scalar_select %p207, %s208, %s209
    %p213 = pneg %p207
    %p214 = scmp.eq.s32.totalorder %s15, 1
    %p215 = por %p213, %p214
    %p216 = scmp.ne.s32.totalorder %s208, %s211
    %p217 = scmp.eq.s32.totalorder %s15, 0
    %p218 = por %p216, %p217
    %p219 = scmp.ne.s32.totalorder %s208, %s211
    %p220 = scmp.eq.s32.totalorder %s20, 1
    %p221 = por %p219, %p220
    %p222 = scmp.ne.s32.totalorder %s211, %s212
    %p223 = scmp.eq.s32.totalorder %s20, 0
    %p224 = por %p222, %p223
    %p225 = scmp.ne.s32.totalorder %s211, %s212
    %p226 = scmp.eq.s32.totalorder %s21, 1
    %p227 = por %p225, %p226
    %p229 = scmp.ne.s32.totalorder %s212, %s228
    %p230 = scmp.eq.s32.totalorder %s21, 0
    %p231 = por %p229, %p230
    %p232 = scmp.le.s32.totalorder 1, %s15
    %p233 = scmp.lt.s32.totalorder %s15, 3
    %p234 = pnand %p232, %p233
    %p235 = pneg %p234
    // Predicated region
    $region9: #{resnet_block_forward.4} parent=5 // pred_check
      _
    $region10: #{resnet_block_forward.4} parent=5 // pred_check_branch
      %237 = sbr.rel (%p234) target = $region12
    $region11: #{resnet_block_forward.4} parent=5 // pred_region
      %s238 = ssub.s32 %s15, 1
      // Predicated region
      $region13: #{resnet_block_forward.4} parent=11 // pred_check
        %p239 = pneg %p62
      $region14: #{resnet_block_forward.4} parent=11 // pred_check_branch
        %241 = sbr.rel (%p239) target = $region16
      $region15: #{resnet_block_forward.4} parent=11 // pred_region
        _
      $region16: #{resnet_block_forward.4} parent=11 // pred_fallthru
        _
      // Predicated region
      $region17: #{resnet_block_forward.4} parent=11 // pred_check
        %p242 = pneg %p83
      $region18: #{resnet_block_forward.4} parent=11 // pred_check_branch
        %244 = sbr.rel (%p242) target = $region20
      $region19: #{resnet_block_forward.4} parent=11 // pred_region
        _
      $region20: #{resnet_block_forward.4} parent=11 // pred_fallthru
        _
      // Predicated region
      $region21: #{resnet_block_forward.4} parent=11 // pred_check
        %p245 = pneg %p130
      $region22: #{resnet_block_forward.4} parent=11 // pred_check_branch
        %247 = sbr.rel (%p245) target = $region24
      $region23: #{resnet_block_forward.4} parent=11 // pred_region
        _
      $region24: #{resnet_block_forward.4} parent=11 // pred_fallthru
        _
      // Predicated region
      $region25: #{resnet_block_forward.4} parent=11 // pred_check
        %p248 = pneg %p151
      $region26: #{resnet_block_forward.4} parent=11 // pred_check_branch
        %250 = sbr.rel (%p248) target = $region28
      $region27: #{resnet_block_forward.4} parent=11 // pred_region
        _
      $region28: #{resnet_block_forward.4} parent=11 // pred_fallthru
        _
      // Predicated region
      $region29: #{resnet_block_forward.4} parent=11 // pred_check
        %p251 = pneg %p172
      $region30: #{resnet_block_forward.4} parent=11 // pred_check_branch
        %253 = sbr.rel (%p251) target = $region32
      $region31: #{resnet_block_forward.4} parent=11 // pred_region
        _
      $region32: #{resnet_block_forward.4} parent=11 // pred_fallthru
        _
    $region12: #{resnet_block_forward.4} parent=5 // pred_fallthru
      _
    %p254 = scmp.lt.s32.totalorder %s15, 2
    // Predicated region
    $region33: #{resnet_block_forward.4} parent=5 // pred_check
      %p255 = pneg %p254
    $region34: #{resnet_block_forward.4} parent=5 // pred_check_branch
      %257 = sbr.rel (%p255) target = $region36
    $region35: #{resnet_block_forward.4} parent=5 // pred_region
      // Predicated region
      $region37: #{resnet_block_forward.4} parent=35 // pred_check
        %p258 = pneg %p35
      $region38: #{resnet_block_forward.4} parent=35 // pred_check_branch
        %260 = sbr.rel (%p258) target = $region40
      $region39: #{resnet_block_forward.4} parent=35 // pred_region
        %p261 = scmp.lt.s32.totalorder %s15, 1
        %s262 = scalar_select %p261, %s15, 1
        %s263 = smul.addr %s262, 2
        %s264 = smul.addr %s263, 8
        %s265 = scalar_lea.vmem %s0, %s264
      $region40: #{resnet_block_forward.4} parent=35 // pred_fallthru
        _
      // Predicated region
      $region41: #{resnet_block_forward.4} parent=35 // pred_check
        %p266 = pneg %p103
      $region42: #{resnet_block_forward.4} parent=35 // pred_check_branch
        %268 = sbr.rel (%p266) target = $region44
      $region43: #{resnet_block_forward.4} parent=35 // pred_region
        %p269 = scmp.lt.s32.totalorder %s15, 1
        %s270 = scalar_select %p269, %s15, 1
        %s271 = smul.addr %s270, 2
        %s272 = smul.addr %s271, 8
        %s273 = scalar_lea.vmem %s3, %s272
      $region44: #{resnet_block_forward.4} parent=35 // pred_fallthru
        _
    $region36: #{resnet_block_forward.4} parent=5 // pred_fallthru
      _
    %p274 = scmp.le.s32.totalorder 1, %s15
    %p275 = scmp.lt.s32.totalorder %s15, 3
    %p276 = pnand %p274, %p275
    %p277 = pneg %p276
    // Predicated region
    $region45: #{resnet_block_forward.4} parent=5 // pred_check
      _
    $region46: #{resnet_block_forward.4} parent=5 // pred_check_branch
      %279 = sbr.rel (%p276) target = $region48
    $region47: #{resnet_block_forward.4} parent=5 // pred_region
      %s280 = ssub.s32 %s15, 1
      %p281 = scmp.lt.s32.totalorder %s20, 1
      %s282 = scalar_select %p281, %s20, 1
      %s283 = smul.addr %s282, 2
      %s284 = smul.addr %s283, 8
      %s285 = scalar_lea.vmem %s0, %s284
      %p286 = pneg %p41
      %p287 = pneg %p38
      %p288 = pneg %p62
      %p289 = pneg %p59
      %p290 = pneg %p83
      %p291 = pneg %p80
      %p292 = scmp.lt.s32.totalorder %s20, 1
      %s293 = scalar_select %p292, %s20, 1
      %s294 = smul.addr %s293, 2
      %s295 = smul.addr %s294, 8
      %s296 = scalar_lea.vmem %s3, %s295
      %p297 = pneg %p109
      %p298 = pneg %p106
      %p299 = pneg %p130
      %p300 = pneg %p127
      %p301 = pneg %p151
      %p302 = pneg %p148
      %p303 = pneg %p172
      %p304 = pneg %p169
      %p305 = pneg %p198
      %p306 = pneg %p195
      %p307 = scmp.lt.s32.totalorder %s20, 1
      %s308 = scalar_select %p307, %s20, 1
      %s309 = smul.addr %s308, 2
      %s310 = smul.addr %s309, 8
      %s311 = scalar_lea.vmem %s7, %s310
      %p312 = pneg %p224
      %p313 = pneg %p221
      %p314 = scmp.lt.s32.totalorder %s20, 1
      %s315 = scalar_select %p314, %s20, 1
      %s316 = smul.addr %s315, 3
      %s317 = smul.addr %s316, 8
      %s318 = scalar_lea.vmem %s8, %s317
      %p319 = scmp.lt.s32.totalorder %s20, 1
      %s320 = scalar_select %p319, %s20, 1
      %s321 = smul.addr %s320, 2
      %s322 = smul.addr %s321, 8
      %s323 = scalar_lea.vmem %s0, %s322
      %p324 = scmp.lt.s32.totalorder %s20, 1
      %s325 = scalar_select %p324, %s20, 1
      %s326 = smul.addr %s325, 2
      %s327 = smul.addr %s326, 8
      %s328 = scalar_lea.vmem %s3, %s327
      %p329 = scmp.lt.s32.totalorder %s20, 1
      %s330 = scalar_select %p329, %s20, 1
      %s331 = smul.addr %s330, 2
      %s332 = smul.addr %s331, 8
      %s333 = scalar_lea.vmem %s7, %s332
      %p334 = scmp.lt.s32.totalorder %s20, 1
      %s335 = scalar_select %p334, %s20, 1
      %s336 = smul.addr %s335, 3
      %s337 = smul.addr %s336, 8
      %s338 = scalar_lea.vmem %s8, %s337
      %v339 = vld [vmem:[%s323] sm:$0xff]
      %v340 = vld [vmem:[%s323 + $0x8] sm:$0xff]
      %v341 = vld [vmem:[%s1] sm:$0xff]
      %343 = vset.pattern.permute.xlu0 0
      %344 = vperm.xlu0 %343, %v341
      %v345 = vpop.permute.xlu0 %344
      %v347 = vmul.f32 %v339, %v345
      %v348 = vmul.f32 %v340, %v345
      %v349 = vld [vmem:[%s2] sm:$0xff]
      %351 = vset.pattern.permute.xlu0 0
      %352 = vperm.xlu0 %351, %v349
      %v353 = vpop.permute.xlu0 %352
      %v355 = vadd.f32 %v347, %v353
      %v356 = vadd.f32 %v348, %v353
      %v357 = vmax.f32 %v355, 0.0
      %v358 = vmax.f32 %v356, 0.0
      %359 = vrot.lane.b32.xlu0 %v357, 17
      %v360 = vpop.permute.xlu0 %359
      %361 = vrot.lane.b32.xlu0 %v358, 17
      %v362 = vpop.permute.xlu0 %361
      %v363 = vlaneseq
      %v364 = vand.u32 %v363, 127
      %vm365 = vcmp.lt.s32.totalorder %v364, 17
      %v366 = vsel %vm365, %v360, %v362
      %v367 = vsel %vm365, %v362, %v360
      %v368 = vld [vmem:[%s6] ss:$8 sm:$0x3]
      %v370 = vlaneseq
      %v371 = vshrl.u32 %v370, 7
      %v372 = vsub.s32 0, %v371
      %v373 = vrot.slane %v368, %v372
      %v374 = vlaneseq
      %v375 = vshrl.u32 %v374, 7
      %v376 = vsub.s32 1, %v375
      %v377 = vrot.slane %v368, %v376
      %v380 = vmul.f32 %v367, %v373
      %v381 = vmul.f32 %v366, %v377
      %v382 = vld [vmem:[%s4] sm:$0xff]
      %383 = vrot.lane.b32.xlu0 %v357, 16
      %v384 = vpop.permute.xlu0 %383
      %385 = vrot.lane.b32.xlu0 %v358, 16
      %v386 = vpop.permute.xlu0 %385
      %vm387 = vcmp.lt.s32.totalorder %v364, 16
      %v388 = vsel %vm387, %v384, %v386
      %v389 = vsel %vm387, %v386, %v384
      %s390 = scalar_lea.vmem %s6, 1
      %v391 = vld [vmem:[%s390] ss:$8 sm:$0x3]
      %v393 = vlaneseq
      %v394 = vshrl.u32 %v393, 7
      %v395 = vsub.s32 0, %v394
      %v396 = vrot.slane %v391, %v395
      %v397 = vlaneseq
      %v398 = vshrl.u32 %v397, 7
      %v399 = vsub.s32 1, %v398
      %v400 = vrot.slane %v391, %v399
      %v403 = vmul.f32 %v389, %v396
      %v404 = vmul.f32 %v388, %v400
      %s405 = scalar_lea.vmem %s4, 8
      %v406 = vld [vmem:[%s405] sm:$0xff]
      %vm407 = vcmask 64512
      %v409 = vsel %vm407, %v406, 0
      %411 = vmatprep.subr.mxu0 0.0
      %412 = vmatpush1.msra.mxu0 0.0
      %413 = vmatprep.subr.mxu0 0.0
      %414 = vmatpush1.msra.mxu0 0.0
      %415 = vmatprep.subr.mxu0 0.0
      %416 = vmatpush1.msra.mxu0 0.0
      %417 = vmatprep.subr.mxu0 0.0
      %418 = vmatpush1.msra.mxu0 0.0
      %419 = vmatprep.subr.mxu0 0.0
      %420 = vmatpush1.msra.mxu0 0.0
      %421 = vmatprep.subr.mxu0 0.0
      %422 = vmatpush1.msra.mxu0 0.0
      %423 = vmatprep.subr.mxu0 0.0
      %424 = vmatpush1.msra.mxu0 0.0
      %425 = vmatprep.subr.mxu0 0.0
      %426 = vmatpush1.msra.mxu0 0.0
      %427 = vmatprep.subr.mxu0 0.0
      %428 = vmatpush1.msra.mxu0 0.0
      %429 = vmatprep.subr.mxu0 0.0
      %430 = vmatpush1.msra.mxu0 0.0
      %431 = vmatprep.subr.mxu0 0.0
      %432 = vmatpush1.msra.mxu0 0.0
      %433 = vmatprep.subr.mxu0 0.0
      %434 = vmatpush1.msra.mxu0 0.0
      %435 = vmatprep.subr.mxu0 0.0
      %436 = vmatpush1.msra.mxu0 0.0
      %437 = vmatprep.subr.mxu0 0.0
      %438 = vmatpush1.msra.mxu0 0.0
      %439 = vmatprep.subr.mxu0 0.0
      %440 = vmatpush1.msra.mxu0 0.0
      %441 = vmatprep.subr.mxu0 %v404
      %442 = vmatpush1.msra.mxu0 %v403
      %443 = vmatprep.subr.mxu0 0.0
      %444 = vmatpush2.msra.mxu0 0.0
      %445 = vmatprep.subr.mxu0 0.0
      %446 = vmatpush2.msra.mxu0 0.0
      %447 = vmatprep.subr.mxu0 0.0
      %448 = vmatpush2.msra.mxu0 0.0
      %449 = vmatprep.subr.mxu0 0.0
      %450 = vmatpush2.msra.mxu0 0.0
      %451 = vmatprep.subr.mxu0 0.0
      %452 = vmatpush2.msra.mxu0 0.0
      %453 = vmatprep.subr.mxu0 0.0
      %454 = vmatpush2.msra.mxu0 0.0
      %455 = vmatprep.subr.mxu0 0.0
      %456 = vmatpush2.msra.mxu0 0.0
      %457 = vmatprep.subr.mxu0 0.0
      %458 = vmatpush2.msra.mxu0 0.0
      %459 = vmatprep.subr.mxu0 0.0
      %460 = vmatpush2.msra.mxu0 0.0
      %461 = vmatprep.subr.mxu0 0.0
      %462 = vmatpush2.msra.mxu0 0.0
      %463 = vmatprep.subr.mxu0 0.0
      %464 = vmatpush2.msra.mxu0 0.0
      %465 = vmatprep.subr.mxu0 0.0
      %466 = vmatpush2.msra.mxu0 0.0
      %467 = vmatprep.subr.mxu0 0.0
      %468 = vmatpush2.msra.mxu0 0.0
      %469 = vmatprep.subr.mxu0 0.0
      %470 = vmatpush2.msra.mxu0 0.0
      %471 = vmatprep.subr.mxu0 0.0
      %472 = vmatpush2.msra.mxu0 0.0
      %473 = vmatprep.subr.mxu0 0.0
      %474 = vmatpush2.msra.mxu0 0.0
      %475 = vmatprep.mubr.f32.mxu0 0.0
      %476 = vmatmul.mubr.f32.gmra.mxu0 %v409
      %v477 = vpop.f32.mrf.mxu0
      %v478 = vadd.f32 0.0, %v477
      %v479 = vpop.f32.mrf.mxu0
      %v480 = vadd.f32 0.0, %v479
      %481 = vdwg.mxu0
      %v483 = vsel %vm407, %v382, 0
      %485 = vmatprep.subr.mxu0 0.0
      %486 = vmatpush1.msra.mxu0 0.0
      %487 = vmatprep.subr.mxu0 0.0
      %488 = vmatpush1.msra.mxu0 0.0
      %489 = vmatprep.subr.mxu0 0.0
      %490 = vmatpush1.msra.mxu0 0.0
      %491 = vmatprep.subr.mxu0 0.0
      %492 = vmatpush1.msra.mxu0 0.0
      %493 = vmatprep.subr.mxu0 0.0
      %494 = vmatpush1.msra.mxu0 0.0
      %495 = vmatprep.subr.mxu0 0.0
      %496 = vmatpush1.msra.mxu0 0.0
      %497 = vmatprep.subr.mxu0 0.0
      %498 = vmatpush1.msra.mxu0 0.0
      %499 = vmatprep.subr.mxu0 0.0
      %500 = vmatpush1.msra.mxu0 0.0
      %501 = vmatprep.subr.mxu0 0.0
      %502 = vmatpush1.msra.mxu0 0.0
      %503 = vmatprep.subr.mxu0 0.0
      %504 = vmatpush1.msra.mxu0 0.0
      %505 = vmatprep.subr.mxu0 0.0
      %506 = vmatpush1.msra.mxu0 0.0
      %507 = vmatprep.subr.mxu0 0.0
      %508 = vmatpush1.msra.mxu0 0.0
      %509 = vmatprep.subr.mxu0 0.0
      %510 = vmatpush1.msra.mxu0 0.0
      %511 = vmatprep.subr.mxu0 0.0
      %512 = vmatpush1.msra.mxu0 0.0
      %513 = vmatprep.subr.mxu0 0.0
      %514 = vmatpush1.msra.mxu0 0.0
      %515 = vmatprep.subr.mxu0 %v381
      %516 = vmatpush1.msra.mxu0 %v380
      %517 = vmatprep.subr.mxu0 0.0
      %518 = vmatpush2.msra.mxu0 0.0
      %519 = vmatprep.subr.mxu0 0.0
      %520 = vmatpush2.msra.mxu0 0.0
      %521 = vmatprep.subr.mxu0 0.0
      %522 = vmatpush2.msra.mxu0 0.0
      %523 = vmatprep.subr.mxu0 0.0
      %524 = vmatpush2.msra.mxu0 0.0
      %525 = vmatprep.subr.mxu0 0.0
      %526 = vmatpush2.msra.mxu0 0.0
      %527 = vmatprep.subr.mxu0 0.0
      %528 = vmatpush2.msra.mxu0 0.0
      %529 = vmatprep.subr.mxu0 0.0
      %530 = vmatpush2.msra.mxu0 0.0
      %531 = vmatprep.subr.mxu0 0.0
      %532 = vmatpush2.msra.mxu0 0.0
      %533 = vmatprep.subr.mxu0 0.0
      %534 = vmatpush2.msra.mxu0 0.0
      %535 = vmatprep.subr.mxu0 0.0
      %536 = vmatpush2.msra.mxu0 0.0
      %537 = vmatprep.subr.mxu0 0.0
      %538 = vmatpush2.msra.mxu0 0.0
      %539 = vmatprep.subr.mxu0 0.0
      %540 = vmatpush2.msra.mxu0 0.0
      %541 = vmatprep.subr.mxu0 0.0
      %542 = vmatpush2.msra.mxu0 0.0
      %543 = vmatprep.subr.mxu0 0.0
      %544 = vmatpush2.msra.mxu0 0.0
      %545 = vmatprep.subr.mxu0 0.0
      %546 = vmatpush2.msra.mxu0 0.0
      %547 = vmatprep.subr.mxu0 0.0
      %548 = vmatpush2.msra.mxu0 0.0
      %549 = vmatprep.mubr.f32.mxu0 0.0
      %550 = vmatmul.mubr.f32.gmra.mxu0 %v483
      %v551 = vpop.f32.mrf.mxu0
      %v552 = vadd.f32 %v478, %v551
      %v553 = vpop.f32.mrf.mxu0
      %v554 = vadd.f32 %v480, %v553
      %555 = vdwg.mxu0
      %556 = vrot.lane.b32.xlu0 %v357, 15
      %v557 = vpop.permute.xlu0 %556
      %558 = vrot.lane.b32.xlu0 %v358, 15
      %v559 = vpop.permute.xlu0 %558
      %vm560 = vcmp.lt.s32.totalorder %v364, 15
      %v561 = vsel %vm560, %v557, %v559
      %v562 = vsel %vm560, %v559, %v557
      %s563 = scalar_lea.vmem %s6, 2
      %v564 = vld [vmem:[%s563] ss:$8 sm:$0x3]
      %v566 = vlaneseq
      %v567 = vshrl.u32 %v566, 7
      %v568 = vsub.s32 0, %v567
      %v569 = vrot.slane %v564, %v568
      %v570 = vlaneseq
      %v571 = vshrl.u32 %v570, 7
      %v572 = vsub.s32 1, %v571
      %v573 = vrot.slane %v564, %v572
      %v576 = vmul.f32 %v562, %v569
      %v577 = vmul.f32 %v561, %v573
      %s578 = scalar_lea.vmem %s4, 16
      %v579 = vld [vmem:[%s578] sm:$0xff]
      %v581 = vsel %vm407, %v579, 0
      %583 = vmatprep.subr.mxu0 0.0
      %584 = vmatpush1.msra.mxu0 0.0
      %585 = vmatprep.subr.mxu0 0.0
      %586 = vmatpush1.msra.mxu0 0.0
      %587 = vmatprep.subr.mxu0 0.0
      %588 = vmatpush1.msra.mxu0 0.0
      %589 = vmatprep.subr.mxu0 0.0
      %590 = vmatpush1.msra.mxu0 0.0
      %591 = vmatprep.subr.mxu0 0.0
      %592 = vmatpush1.msra.mxu0 0.0
      %593 = vmatprep.subr.mxu0 0.0
      %594 = vmatpush1.msra.mxu0 0.0
      %595 = vmatprep.subr.mxu0 0.0
      %596 = vmatpush1.msra.mxu0 0.0
      %597 = vmatprep.subr.mxu0 0.0
      %598 = vmatpush1.msra.mxu0 0.0
      %599 = vmatprep.subr.mxu0 0.0
      %600 = vmatpush1.msra.mxu0 0.0
      %601 = vmatprep.subr.mxu0 0.0
      %602 = vmatpush1.msra.mxu0 0.0
      %603 = vmatprep.subr.mxu0 0.0
      %604 = vmatpush1.msra.mxu0 0.0
      %605 = vmatprep.subr.mxu0 0.0
      %606 = vmatpush1.msra.mxu0 0.0
      %607 = vmatprep.subr.mxu0 0.0
      %608 = vmatpush1.msra.mxu0 0.0
      %609 = vmatprep.subr.mxu0 0.0
      %610 = vmatpush1.msra.mxu0 0.0
      %611 = vmatprep.subr.mxu0 0.0
      %612 = vmatpush1.msra.mxu0 0.0
      %613 = vmatprep.subr.mxu0 %v577
      %614 = vmatpush1.msra.mxu0 %v576
      %615 = vmatprep.subr.mxu0 0.0
      %616 = vmatpush2.msra.mxu0 0.0
      %617 = vmatprep.subr.mxu0 0.0
      %618 = vmatpush2.msra.mxu0 0.0
      %619 = vmatprep.subr.mxu0 0.0
      %620 = vmatpush2.msra.mxu0 0.0
      %621 = vmatprep.subr.mxu0 0.0
      %622 = vmatpush2.msra.mxu0 0.0
      %623 = vmatprep.subr.mxu0 0.0
      %624 = vmatpush2.msra.mxu0 0.0
      %625 = vmatprep.subr.mxu0 0.0
      %626 = vmatpush2.msra.mxu0 0.0
      %627 = vmatprep.subr.mxu0 0.0
      %628 = vmatpush2.msra.mxu0 0.0
      %629 = vmatprep.subr.mxu0 0.0
      %630 = vmatpush2.msra.mxu0 0.0
      %631 = vmatprep.subr.mxu0 0.0
      %632 = vmatpush2.msra.mxu0 0.0
      %633 = vmatprep.subr.mxu0 0.0
      %634 = vmatpush2.msra.mxu0 0.0
      %635 = vmatprep.subr.mxu0 0.0
      %636 = vmatpush2.msra.mxu0 0.0
      %637 = vmatprep.subr.mxu0 0.0
      %638 = vmatpush2.msra.mxu0 0.0
      %639 = vmatprep.subr.mxu0 0.0
      %640 = vmatpush2.msra.mxu0 0.0
      %641 = vmatprep.subr.mxu0 0.0
      %642 = vmatpush2.msra.mxu0 0.0
      %643 = vmatprep.subr.mxu0 0.0
      %644 = vmatpush2.msra.mxu0 0.0
      %645 = vmatprep.subr.mxu0 0.0
      %646 = vmatpush2.msra.mxu0 0.0
      %647 = vmatprep.mubr.f32.mxu0 0.0
      %648 = vmatmul.mubr.f32.gmra.mxu0 %v581
      %v649 = vpop.f32.mrf.mxu0
      %v650 = vadd.f32 0.0, %v649
      %v651 = vpop.f32.mrf.mxu0
      %v652 = vadd.f32 0.0, %v651
      %653 = vdwg.mxu0
      %v654 = vadd.f32 %v552, %v650
      %v655 = vadd.f32 %v554, %v652
      %656 = vrot.lane.b32.xlu0 %v357, 1
      %v657 = vpop.permute.xlu0 %656
      %658 = vrot.lane.b32.xlu0 %v358, 1
      %v659 = vpop.permute.xlu0 %658
      %vm660 = vcmp.lt.s32.totalorder %v364, 1
      %v661 = vsel %vm660, %v657, %v659
      %v662 = vsel %vm660, %v659, %v657
      %s663 = scalar_lea.vmem %s6, 3
      %v664 = vld [vmem:[%s663] ss:$8 sm:$0x3]
      %v666 = vlaneseq
      %v667 = vshrl.u32 %v666, 7
      %v668 = vsub.s32 0, %v667
      %v669 = vrot.slane %v664, %v668
      %v670 = vlaneseq
      %v671 = vshrl.u32 %v670, 7
      %v672 = vsub.s32 1, %v671
      %v673 = vrot.slane %v664, %v672
      %v676 = vmul.f32 %v662, %v669
      %v677 = vmul.f32 %v661, %v673
      %s678 = scalar_lea.vmem %s4, 24
      %v679 = vld [vmem:[%s678] sm:$0xff]
      %v681 = vsel %vm407, %v679, 0
      %683 = vmatprep.subr.mxu0 0.0
      %684 = vmatpush1.msra.mxu0 0.0
      %685 = vmatprep.subr.mxu0 0.0
      %686 = vmatpush1.msra.mxu0 0.0
      %687 = vmatprep.subr.mxu0 0.0
      %688 = vmatpush1.msra.mxu0 0.0
      %689 = vmatprep.subr.mxu0 0.0
      %690 = vmatpush1.msra.mxu0 0.0
      %691 = vmatprep.subr.mxu0 0.0
      %692 = vmatpush1.msra.mxu0 0.0
      %693 = vmatprep.subr.mxu0 0.0
      %694 = vmatpush1.msra.mxu0 0.0
      %695 = vmatprep.subr.mxu0 0.0
      %696 = vmatpush1.msra.mxu0 0.0
      %697 = vmatprep.subr.mxu0 0.0
      %698 = vmatpush1.msra.mxu0 0.0
      %699 = vmatprep.subr.mxu0 0.0
      %700 = vmatpush1.msra.mxu0 0.0
      %701 = vmatprep.subr.mxu0 0.0
      %702 = vmatpush1.msra.mxu0 0.0
      %703 = vmatprep.subr.mxu0 0.0
      %704 = vmatpush1.msra.mxu0 0.0
      %705 = vmatprep.subr.mxu0 0.0
      %706 = vmatpush1.msra.mxu0 0.0
      %707 = vmatprep.subr.mxu0 0.0
      %708 = vmatpush1.msra.mxu0 0.0
      %709 = vmatprep.subr.mxu0 0.0
      %710 = vmatpush1.msra.mxu0 0.0
      %711 = vmatprep.subr.mxu0 0.0
      %712 = vmatpush1.msra.mxu0 0.0
      %713 = vmatprep.subr.mxu0 %v677
      %714 = vmatpush1.msra.mxu0 %v676
      %715 = vmatprep.subr.mxu0 0.0
      %716 = vmatpush2.msra.mxu0 0.0
      %717 = vmatprep.subr.mxu0 0.0
      %718 = vmatpush2.msra.mxu0 0.0
      %719 = vmatprep.subr.mxu0 0.0
      %720 = vmatpush2.msra.mxu0 0.0
      %721 = vmatprep.subr.mxu0 0.0
      %722 = vmatpush2.msra.mxu0 0.0
      %723 = vmatprep.subr.mxu0 0.0
      %724 = vmatpush2.msra.mxu0 0.0
      %725 = vmatprep.subr.mxu0 0.0
      %726 = vmatpush2.msra.mxu0 0.0
      %727 = vmatprep.subr.mxu0 0.0
      %728 = vmatpush2.msra.mxu0 0.0
      %729 = vmatprep.subr.mxu0 0.0
      %730 = vmatpush2.msra.mxu0 0.0
      %731 = vmatprep.subr.mxu0 0.0
      %732 = vmatpush2.msra.mxu0 0.0
      %733 = vmatprep.subr.mxu0 0.0
      %734 = vmatpush2.msra.mxu0 0.0
      %735 = vmatprep.subr.mxu0 0.0
      %736 = vmatpush2.msra.mxu0 0.0
      %737 = vmatprep.subr.mxu0 0.0
      %738 = vmatpush2.msra.mxu0 0.0
      %739 = vmatprep.subr.mxu0 0.0
      %740 = vmatpush2.msra.mxu0 0.0
      %741 = vmatprep.subr.mxu0 0.0
      %742 = vmatpush2.msra.mxu0 0.0
      %743 = vmatprep.subr.mxu0 0.0
      %744 = vmatpush2.msra.mxu0 0.0
      %745 = vmatprep.subr.mxu0 0.0
      %746 = vmatpush2.msra.mxu0 0.0
      %747 = vmatprep.mubr.f32.mxu0 0.0
      %748 = vmatmul.mubr.f32.gmra.mxu0 %v681
      %v749 = vpop.f32.mrf.mxu0
      %v750 = vadd.f32 0.0, %v749
      %v751 = vpop.f32.mrf.mxu0
      %v752 = vadd.f32 0.0, %v751
      %753 = vdwg.mxu0
      %v754 = vadd.f32 %v654, %v750
      %v755 = vadd.f32 %v655, %v752
      %s756 = scalar_lea.vmem %s4, 32
      %v757 = vld [vmem:[%s756] sm:$0xff]
      %v759 = vsel %vm407, %v757, 0
      %761 = vmatprep.subr.mxu0 0.0
      %762 = vmatpush1.msra.mxu0 0.0
      %763 = vmatprep.subr.mxu0 0.0
      %764 = vmatpush1.msra.mxu0 0.0
      %765 = vmatprep.subr.mxu0 0.0
      %766 = vmatpush1.msra.mxu0 0.0
      %767 = vmatprep.subr.mxu0 0.0
      %768 = vmatpush1.msra.mxu0 0.0
      %769 = vmatprep.subr.mxu0 0.0
      %770 = vmatpush1.msra.mxu0 0.0
      %771 = vmatprep.subr.mxu0 0.0
      %772 = vmatpush1.msra.mxu0 0.0
      %773 = vmatprep.subr.mxu0 0.0
      %774 = vmatpush1.msra.mxu0 0.0
      %775 = vmatprep.subr.mxu0 0.0
      %776 = vmatpush1.msra.mxu0 0.0
      %777 = vmatprep.subr.mxu0 0.0
      %778 = vmatpush1.msra.mxu0 0.0
      %779 = vmatprep.subr.mxu0 0.0
      %780 = vmatpush1.msra.mxu0 0.0
      %781 = vmatprep.subr.mxu0 0.0
      %782 = vmatpush1.msra.mxu0 0.0
      %783 = vmatprep.subr.mxu0 0.0
      %784 = vmatpush1.msra.mxu0 0.0
      %785 = vmatprep.subr.mxu0 0.0
      %786 = vmatpush1.msra.mxu0 0.0
      %787 = vmatprep.subr.mxu0 0.0
      %788 = vmatpush1.msra.mxu0 0.0
      %789 = vmatprep.subr.mxu0 0.0
      %790 = vmatpush1.msra.mxu0 0.0
      %791 = vmatprep.subr.mxu0 %v358
      %792 = vmatpush1.msra.mxu0 %v357
      %793 = vmatprep.subr.mxu0 0.0
      %794 = vmatpush2.msra.mxu0 0.0
      %795 = vmatprep.subr.mxu0 0.0
      %796 = vmatpush2.msra.mxu0 0.0
      %797 = vmatprep.subr.mxu0 0.0
      %798 = vmatpush2.msra.mxu0 0.0
      %799 = vmatprep.subr.mxu0 0.0
      %800 = vmatpush2.msra.mxu0 0.0
      %801 = vmatprep.subr.mxu0 0.0
      %802 = vmatpush2.msra.mxu0 0.0
      %803 = vmatprep.subr.mxu0 0.0
      %804 = vmatpush2.msra.mxu0 0.0
      %805 = vmatprep.subr.mxu0 0.0
      %806 = vmatpush2.msra.mxu0 0.0
      %807 = vmatprep.subr.mxu0 0.0
      %808 = vmatpush2.msra.mxu0 0.0
      %809 = vmatprep.subr.mxu0 0.0
      %810 = vmatpush2.msra.mxu0 0.0
      %811 = vmatprep.subr.mxu0 0.0
      %812 = vmatpush2.msra.mxu0 0.0
      %813 = vmatprep.subr.mxu0 0.0
      %814 = vmatpush2.msra.mxu0 0.0
      %815 = vmatprep.subr.mxu0 0.0
      %816 = vmatpush2.msra.mxu0 0.0
      %817 = vmatprep.subr.mxu0 0.0
      %818 = vmatpush2.msra.mxu0 0.0
      %819 = vmatprep.subr.mxu0 0.0
      %820 = vmatpush2.msra.mxu0 0.0
      %821 = vmatprep.subr.mxu0 0.0
      %822 = vmatpush2.msra.mxu0 0.0
      %823 = vmatprep.subr.mxu0 0.0
      %824 = vmatpush2.msra.mxu0 0.0
      %825 = vmatprep.mubr.f32.mxu0 0.0
      %826 = vmatmul.mubr.f32.gmra.mxu0 %v759
      %v827 = vpop.f32.mrf.mxu0
      %v828 = vadd.f32 0.0, %v827
      %v829 = vpop.f32.mrf.mxu0
      %v830 = vadd.f32 0.0, %v829
      %831 = vdwg.mxu0
      %v832 = vadd.f32 %v754, %v828
      %v833 = vadd.f32 %v755, %v830
      %834 = vrot.lane.b32.xlu0 %v357, 127
      %v835 = vpop.permute.xlu0 %834
      %836 = vrot.lane.b32.xlu0 %v358, 127
      %v837 = vpop.permute.xlu0 %836
      %vm838 = vcmp.lt.s32.totalorder %v364, 127
      %v839 = vsel %vm838, %v835, %v837
      %v840 = vsel %vm838, %v837, %v835
      %s841 = scalar_lea.vmem %s6, 5
      %v842 = vld [vmem:[%s841] ss:$8 sm:$0x3]
      %v844 = vlaneseq
      %v845 = vshrl.u32 %v844, 7
      %v846 = vsub.s32 0, %v845
      %v847 = vrot.slane %v842, %v846
      %v848 = vlaneseq
      %v849 = vshrl.u32 %v848, 7
      %v850 = vsub.s32 1, %v849
      %v851 = vrot.slane %v842, %v850
      %v854 = vmul.f32 %v839, %v847
      %v855 = vmul.f32 %v840, %v851
      %s856 = scalar_lea.vmem %s4, 40
      %v857 = vld [vmem:[%s856] sm:$0xff]
      %v859 = vsel %vm407, %v857, 0
      %861 = vmatprep.subr.mxu0 0.0
      %862 = vmatpush1.msra.mxu0 0.0
      %863 = vmatprep.subr.mxu0 0.0
      %864 = vmatpush1.msra.mxu0 0.0
      %865 = vmatprep.subr.mxu0 0.0
      %866 = vmatpush1.msra.mxu0 0.0
      %867 = vmatprep.subr.mxu0 0.0
      %868 = vmatpush1.msra.mxu0 0.0
      %869 = vmatprep.subr.mxu0 0.0
      %870 = vmatpush1.msra.mxu0 0.0
      %871 = vmatprep.subr.mxu0 0.0
      %872 = vmatpush1.msra.mxu0 0.0
      %873 = vmatprep.subr.mxu0 0.0
      %874 = vmatpush1.msra.mxu0 0.0
      %875 = vmatprep.subr.mxu0 0.0
      %876 = vmatpush1.msra.mxu0 0.0
      %877 = vmatprep.subr.mxu0 0.0
      %878 = vmatpush1.msra.mxu0 0.0
      %879 = vmatprep.subr.mxu0 0.0
      %880 = vmatpush1.msra.mxu0 0.0
      %881 = vmatprep.subr.mxu0 0.0
      %882 = vmatpush1.msra.mxu0 0.0
      %883 = vmatprep.subr.mxu0 0.0
      %884 = vmatpush1.msra.mxu0 0.0
      %885 = vmatprep.subr.mxu0 0.0
      %886 = vmatpush1.msra.mxu0 0.0
      %887 = vmatprep.subr.mxu0 0.0
      %888 = vmatpush1.msra.mxu0 0.0
      %889 = vmatprep.subr.mxu0 0.0
      %890 = vmatpush1.msra.mxu0 0.0
      %891 = vmatprep.subr.mxu0 %v855
      %892 = vmatpush1.msra.mxu0 %v854
      %893 = vmatprep.subr.mxu0 0.0
      %894 = vmatpush2.msra.mxu0 0.0
      %895 = vmatprep.subr.mxu0 0.0
      %896 = vmatpush2.msra.mxu0 0.0
      %897 = vmatprep.subr.mxu0 0.0
      %898 = vmatpush2.msra.mxu0 0.0
      %899 = vmatprep.subr.mxu0 0.0
      %900 = vmatpush2.msra.mxu0 0.0
      %901 = vmatprep.subr.mxu0 0.0
      %902 = vmatpush2.msra.mxu0 0.0
      %903 = vmatprep.subr.mxu0 0.0
      %904 = vmatpush2.msra.mxu0 0.0
      %905 = vmatprep.subr.mxu0 0.0
      %906 = vmatpush2.msra.mxu0 0.0
      %907 = vmatprep.subr.mxu0 0.0
      %908 = vmatpush2.msra.mxu0 0.0
      %909 = vmatprep.subr.mxu0 0.0
      %910 = vmatpush2.msra.mxu0 0.0
      %911 = vmatprep.subr.mxu0 0.0
      %912 = vmatpush2.msra.mxu0 0.0
      %913 = vmatprep.subr.mxu0 0.0
      %914 = vmatpush2.msra.mxu0 0.0
      %915 = vmatprep.subr.mxu0 0.0
      %916 = vmatpush2.msra.mxu0 0.0
      %917 = vmatprep.subr.mxu0 0.0
      %918 = vmatpush2.msra.mxu0 0.0
      %919 = vmatprep.subr.mxu0 0.0
      %920 = vmatpush2.msra.mxu0 0.0
      %921 = vmatprep.subr.mxu0 0.0
      %922 = vmatpush2.msra.mxu0 0.0
      %923 = vmatprep.subr.mxu0 0.0
      %924 = vmatpush2.msra.mxu0 0.0
      %925 = vmatprep.mubr.f32.mxu0 0.0
      %926 = vmatmul.mubr.f32.gmra.mxu0 %v859
      %v927 = vpop.f32.mrf.mxu0
      %v928 = vadd.f32 0.0, %v927
      %v929 = vpop.f32.mrf.mxu0
      %v930 = vadd.f32 0.0, %v929
      %931 = vdwg.mxu0
      %v932 = vadd.f32 %v832, %v928
      %v933 = vadd.f32 %v833, %v930
      %934 = vrot.lane.b32.xlu0 %v357, 113
      %v935 = vpop.permute.xlu0 %934
      %936 = vrot.lane.b32.xlu0 %v358, 113
      %v937 = vpop.permute.xlu0 %936
      %vm938 = vcmp.lt.s32.totalorder %v364, 113
      %v939 = vsel %vm938, %v935, %v937
      %v940 = vsel %vm938, %v937, %v935
      %s941 = scalar_lea.vmem %s6, 6
      %v942 = vld [vmem:[%s941] ss:$8 sm:$0x3]
      %v944 = vlaneseq
      %v945 = vshrl.u32 %v944, 7
      %v946 = vsub.s32 0, %v945
      %v947 = vrot.slane %v942, %v946
      %v948 = vlaneseq
      %v949 = vshrl.u32 %v948, 7
      %v950 = vsub.s32 1, %v949
      %v951 = vrot.slane %v942, %v950
      %v954 = vmul.f32 %v939, %v947
      %v955 = vmul.f32 %v940, %v951
      %s956 = scalar_lea.vmem %s4, 48
      %v957 = vld [vmem:[%s956] sm:$0xff]
      %v959 = vsel %vm407, %v957, 0
      %961 = vmatprep.subr.mxu0 0.0
      %962 = vmatpush1.msra.mxu0 0.0
      %963 = vmatprep.subr.mxu0 0.0
      %964 = vmatpush1.msra.mxu0 0.0
      %965 = vmatprep.subr.mxu0 0.0
      %966 = vmatpush1.msra.mxu0 0.0
      %967 = vmatprep.subr.mxu0 0.0
      %968 = vmatpush1.msra.mxu0 0.0
      %969 = vmatprep.subr.mxu0 0.0
      %970 = vmatpush1.msra.mxu0 0.0
      %971 = vmatprep.subr.mxu0 0.0
      %972 = vmatpush1.msra.mxu0 0.0
      %973 = vmatprep.subr.mxu0 0.0
      %974 = vmatpush1.msra.mxu0 0.0
      %975 = vmatprep.subr.mxu0 0.0
      %976 = vmatpush1.msra.mxu0 0.0
      %977 = vmatprep.subr.mxu0 0.0
      %978 = vmatpush1.msra.mxu0 0.0
      %979 = vmatprep.subr.mxu0 0.0
      %980 = vmatpush1.msra.mxu0 0.0
      %981 = vmatprep.subr.mxu0 0.0
      %982 = vmatpush1.msra.mxu0 0.0
      %983 = vmatprep.subr.mxu0 0.0
      %984 = vmatpush1.msra.mxu0 0.0
      %985 = vmatprep.subr.mxu0 0.0
      %986 = vmatpush1.msra.mxu0 0.0
      %987 = vmatprep.subr.mxu0 0.0
      %988 = vmatpush1.msra.mxu0 0.0
      %989 = vmatprep.subr.mxu0 0.0
      %990 = vmatpush1.msra.mxu0 0.0
      %991 = vmatprep.subr.mxu0 %v955
      %992 = vmatpush1.msra.mxu0 %v954
      %993 = vmatprep.subr.mxu0 0.0
      %994 = vmatpush2.msra.mxu0 0.0
      %995 = vmatprep.subr.mxu0 0.0
      %996 = vmatpush2.msra.mxu0 0.0
      %997 = vmatprep.subr.mxu0 0.0
      %998 = vmatpush2.msra.mxu0 0.0
      %999 = vmatprep.subr.mxu0 0.0
      %1000 = vmatpush2.msra.mxu0 0.0
      %1001 = vmatprep.subr.mxu0 0.0
      %1002 = vmatpush2.msra.mxu0 0.0
      %1003 = vmatprep.subr.mxu0 0.0
      %1004 = vmatpush2.msra.mxu0 0.0
      %1005 = vmatprep.subr.mxu0 0.0
      %1006 = vmatpush2.msra.mxu0 0.0
      %1007 = vmatprep.subr.mxu0 0.0
      %1008 = vmatpush2.msra.mxu0 0.0
      %1009 = vmatprep.subr.mxu0 0.0
      %1010 = vmatpush2.msra.mxu0 0.0
      %1011 = vmatprep.subr.mxu0 0.0
      %1012 = vmatpush2.msra.mxu0 0.0
      %1013 = vmatprep.subr.mxu0 0.0
      %1014 = vmatpush2.msra.mxu0 0.0
      %1015 = vmatprep.subr.mxu0 0.0
      %1016 = vmatpush2.msra.mxu0 0.0
      %1017 = vmatprep.subr.mxu0 0.0
      %1018 = vmatpush2.msra.mxu0 0.0
      %1019 = vmatprep.subr.mxu0 0.0
      %1020 = vmatpush2.msra.mxu0 0.0
      %1021 = vmatprep.subr.mxu0 0.0
      %1022 = vmatpush2.msra.mxu0 0.0
      %1023 = vmatprep.subr.mxu0 0.0
      %1024 = vmatpush2.msra.mxu0 0.0
      %1025 = vmatprep.mubr.f32.mxu0 0.0
      %1026 = vmatmul.mubr.f32.gmra.mxu0 %v959
      %v1027 = vpop.f32.mrf.mxu0
      %v1028 = vadd.f32 0.0, %v1027
      %v1029 = vpop.f32.mrf.mxu0
      %v1030 = vadd.f32 0.0, %v1029
      %1031 = vdwg.mxu0
      %v1032 = vadd.f32 %v932, %v1028
      %v1033 = vadd.f32 %v933, %v1030
      %1034 = vrot.lane.b32.xlu0 %v357, 112
      %v1035 = vpop.permute.xlu0 %1034
      %1036 = vrot.lane.b32.xlu0 %v358, 112
      %v1037 = vpop.permute.xlu0 %1036
      %vm1038 = vcmp.lt.s32.totalorder %v364, 112
      %v1039 = vsel %vm1038, %v1035, %v1037
      %v1040 = vsel %vm1038, %v1037, %v1035
      %s1041 = scalar_lea.vmem %s6, 7
      %v1042 = vld [vmem:[%s1041] ss:$8 sm:$0x3]
      %v1044 = vlaneseq
      %v1045 = vshrl.u32 %v1044, 7
      %v1046 = vsub.s32 0, %v1045
      %v1047 = vrot.slane %v1042, %v1046
      %v1048 = vlaneseq
      %v1049 = vshrl.u32 %v1048, 7
      %v1050 = vsub.s32 1, %v1049
      %v1051 = vrot.slane %v1042, %v1050
      %v1054 = vmul.f32 %v1039, %v1047
      %v1055 = vmul.f32 %v1040, %v1051
      %s1056 = scalar_lea.vmem %s4, 56
      %v1057 = vld [vmem:[%s1056] sm:$0xff]
      %v1059 = vsel %vm407, %v1057, 0
      %1061 = vmatprep.subr.mxu0 0.0
      %1062 = vmatpush1.msra.mxu0 0.0
      %1063 = vmatprep.subr.mxu0 0.0
      %1064 = vmatpush1.msra.mxu0 0.0
      %1065 = vmatprep.subr.mxu0 0.0
      %1066 = vmatpush1.msra.mxu0 0.0
      %1067 = vmatprep.subr.mxu0 0.0
      %1068 = vmatpush1.msra.mxu0 0.0
      %1069 = vmatprep.subr.mxu0 0.0
      %1070 = vmatpush1.msra.mxu0 0.0
      %1071 = vmatprep.subr.mxu0 0.0
      %1072 = vmatpush1.msra.mxu0 0.0
      %1073 = vmatprep.subr.mxu0 0.0
      %1074 = vmatpush1.msra.mxu0 0.0
      %1075 = vmatprep.subr.mxu0 0.0
      %1076 = vmatpush1.msra.mxu0 0.0
      %1077 = vmatprep.subr.mxu0 0.0
      %1078 = vmatpush1.msra.mxu0 0.0
      %1079 = vmatprep.subr.mxu0 0.0
      %1080 = vmatpush1.msra.mxu0 0.0
      %1081 = vmatprep.subr.mxu0 0.0
      %1082 = vmatpush1.msra.mxu0 0.0
      %1083 = vmatprep.subr.mxu0 0.0
      %1084 = vmatpush1.msra.mxu0 0.0
      %1085 = vmatprep.subr.mxu0 0.0
      %1086 = vmatpush1.msra.mxu0 0.0
      %1087 = vmatprep.subr.mxu0 0.0
      %1088 = vmatpush1.msra.mxu0 0.0
      %1089 = vmatprep.subr.mxu0 0.0
      %1090 = vmatpush1.msra.mxu0 0.0
      %1091 = vmatprep.subr.mxu0 %v1055
      %1092 = vmatpush1.msra.mxu0 %v1054
      %1093 = vmatprep.subr.mxu0 0.0
      %1094 = vmatpush2.msra.mxu0 0.0
      %1095 = vmatprep.subr.mxu0 0.0
      %1096 = vmatpush2.msra.mxu0 0.0
      %1097 = vmatprep.subr.mxu0 0.0
      %1098 = vmatpush2.msra.mxu0 0.0
      %1099 = vmatprep.subr.mxu0 0.0
      %1100 = vmatpush2.msra.mxu0 0.0
      %1101 = vmatprep.subr.mxu0 0.0
      %1102 = vmatpush2.msra.mxu0 0.0
      %1103 = vmatprep.subr.mxu0 0.0
      %1104 = vmatpush2.msra.mxu0 0.0
      %1105 = vmatprep.subr.mxu0 0.0
      %1106 = vmatpush2.msra.mxu0 0.0
      %1107 = vmatprep.subr.mxu0 0.0
      %1108 = vmatpush2.msra.mxu0 0.0
      %1109 = vmatprep.subr.mxu0 0.0
      %1110 = vmatpush2.msra.mxu0 0.0
      %1111 = vmatprep.subr.mxu0 0.0
      %1112 = vmatpush2.msra.mxu0 0.0
      %1113 = vmatprep.subr.mxu0 0.0
      %1114 = vmatpush2.msra.mxu0 0.0
      %1115 = vmatprep.subr.mxu0 0.0
      %1116 = vmatpush2.msra.mxu0 0.0
      %1117 = vmatprep.subr.mxu0 0.0
      %1118 = vmatpush2.msra.mxu0 0.0
      %1119 = vmatprep.subr.mxu0 0.0
      %1120 = vmatpush2.msra.mxu0 0.0
      %1121 = vmatprep.subr.mxu0 0.0
      %1122 = vmatpush2.msra.mxu0 0.0
      %1123 = vmatprep.subr.mxu0 0.0
      %1124 = vmatpush2.msra.mxu0 0.0
      %1125 = vmatprep.mubr.f32.mxu0 0.0
      %1126 = vmatmul.mubr.f32.gmra.mxu0 %v1059
      %v1127 = vpop.f32.mrf.mxu0
      %v1128 = vadd.f32 0.0, %v1127
      %v1129 = vpop.f32.mrf.mxu0
      %v1130 = vadd.f32 0.0, %v1129
      %1131 = vdwg.mxu0
      %v1132 = vadd.f32 %v1032, %v1128
      %v1133 = vadd.f32 %v1033, %v1130
      %1134 = vrot.lane.b32.xlu0 %v357, 111
      %v1135 = vpop.permute.xlu0 %1134
      %1136 = vrot.lane.b32.xlu0 %v358, 111
      %v1137 = vpop.permute.xlu0 %1136
      %vm1138 = vcmp.lt.s32.totalorder %v364, 111
      %v1139 = vsel %vm1138, %v1135, %v1137
      %v1140 = vsel %vm1138, %v1137, %v1135
      %s1141 = scalar_lea.vmem %s6, 16
      %v1142 = vld [vmem:[%s1141] ss:$8 sm:$0x3]
      %v1144 = vlaneseq
      %v1145 = vshrl.u32 %v1144, 7
      %v1146 = vsub.s32 0, %v1145
      %v1147 = vrot.slane %v1142, %v1146
      %v1148 = vlaneseq
      %v1149 = vshrl.u32 %v1148, 7
      %v1150 = vsub.s32 1, %v1149
      %v1151 = vrot.slane %v1142, %v1150
      %v1154 = vmul.f32 %v1139, %v1147
      %v1155 = vmul.f32 %v1140, %v1151
      %s1156 = scalar_lea.vmem %s4, 64
      %v1157 = vld [vmem:[%s1156] sm:$0xff]
      %v1159 = vsel %vm407, %v1157, 0
      %1161 = vmatprep.subr.mxu0 0.0
      %1162 = vmatpush1.msra.mxu0 0.0
      %1163 = vmatprep.subr.mxu0 0.0
      %1164 = vmatpush1.msra.mxu0 0.0
      %1165 = vmatprep.subr.mxu0 0.0
      %1166 = vmatpush1.msra.mxu0 0.0
      %1167 = vmatprep.subr.mxu0 0.0
      %1168 = vmatpush1.msra.mxu0 0.0
      %1169 = vmatprep.subr.mxu0 0.0
      %1170 = vmatpush1.msra.mxu0 0.0
      %1171 = vmatprep.subr.mxu0 0.0
      %1172 = vmatpush1.msra.mxu0 0.0
      %1173 = vmatprep.subr.mxu0 0.0
      %1174 = vmatpush1.msra.mxu0 0.0
      %1175 = vmatprep.subr.mxu0 0.0
      %1176 = vmatpush1.msra.mxu0 0.0
      %1177 = vmatprep.subr.mxu0 0.0
      %1178 = vmatpush1.msra.mxu0 0.0
      %1179 = vmatprep.subr.mxu0 0.0
      %1180 = vmatpush1.msra.mxu0 0.0
      %1181 = vmatprep.subr.mxu0 0.0
      %1182 = vmatpush1.msra.mxu0 0.0
      %1183 = vmatprep.subr.mxu0 0.0
      %1184 = vmatpush1.msra.mxu0 0.0
      %1185 = vmatprep.subr.mxu0 0.0
      %1186 = vmatpush1.msra.mxu0 0.0
      %1187 = vmatprep.subr.mxu0 0.0
      %1188 = vmatpush1.msra.mxu0 0.0
      %1189 = vmatprep.subr.mxu0 0.0
      %1190 = vmatpush1.msra.mxu0 0.0
      %1191 = vmatprep.subr.mxu0 %v1155
      %1192 = vmatpush1.msra.mxu0 %v1154
      %1193 = vmatprep.subr.mxu0 0.0
      %1194 = vmatpush2.msra.mxu0 0.0
      %1195 = vmatprep.subr.mxu0 0.0
      %1196 = vmatpush2.msra.mxu0 0.0
      %1197 = vmatprep.subr.mxu0 0.0
      %1198 = vmatpush2.msra.mxu0 0.0
      %1199 = vmatprep.subr.mxu0 0.0
      %1200 = vmatpush2.msra.mxu0 0.0
      %1201 = vmatprep.subr.mxu0 0.0
      %1202 = vmatpush2.msra.mxu0 0.0
      %1203 = vmatprep.subr.mxu0 0.0
      %1204 = vmatpush2.msra.mxu0 0.0
      %1205 = vmatprep.subr.mxu0 0.0
      %1206 = vmatpush2.msra.mxu0 0.0
      %1207 = vmatprep.subr.mxu0 0.0
      %1208 = vmatpush2.msra.mxu0 0.0
      %1209 = vmatprep.subr.mxu0 0.0
      %1210 = vmatpush2.msra.mxu0 0.0
      %1211 = vmatprep.subr.mxu0 0.0
      %1212 = vmatpush2.msra.mxu0 0.0
      %1213 = vmatprep.subr.mxu0 0.0
      %1214 = vmatpush2.msra.mxu0 0.0
      %1215 = vmatprep.subr.mxu0 0.0
      %1216 = vmatpush2.msra.mxu0 0.0
      %1217 = vmatprep.subr.mxu0 0.0
      %1218 = vmatpush2.msra.mxu0 0.0
      %1219 = vmatprep.subr.mxu0 0.0
      %1220 = vmatpush2.msra.mxu0 0.0
      %1221 = vmatprep.subr.mxu0 0.0
      %1222 = vmatpush2.msra.mxu0 0.0
      %1223 = vmatprep.subr.mxu0 0.0
      %1224 = vmatpush2.msra.mxu0 0.0
      %1225 = vmatprep.mubr.f32.mxu0 0.0
      %1226 = vmatmul.mubr.f32.gmra.mxu0 %v1159
      %v1227 = vpop.f32.mrf.mxu0
      %v1228 = vadd.f32 0.0, %v1227
      %v1229 = vpop.f32.mrf.mxu0
      %v1230 = vadd.f32 0.0, %v1229
      %1231 = vdwg.mxu0
      %v1232 = vadd.f32 %v1132, %v1228
      %v1233 = vadd.f32 %v1133, %v1230
      %v1234 = vld [vmem:[%s5] sm:$0xff]
      %1236 = vset.pattern.permute.xlu0 0
      %1237 = vperm.xlu0 %1236, %v1234
      %v1238 = vpop.permute.xlu0 %1237
      %v1240 = vadd.f32 %v1232, %v1238
      %v1241 = vadd.f32 %v1233, %v1238
      %1242 = vst [vmem:[%s333] sm:$0xff] %v1240
      %1243 = vst [vmem:[%s333 + $0x8] sm:$0xff] %v1241
      %v1244 = vld [vmem:[%s328] sm:$0xff]
      %v1245 = vld [vmem:[%s328 + $0x8] sm:$0xff]
      %v1246 = vmul.f32 %v1240, %v1240
      %v1247 = vmul.f32 %v1241, %v1241
      %v1248 = vmul.f32 %v1244, %v1240
      %v1249 = vmul.f32 %v1245, %v1241
      %1250 = vmatprep.subr.mxu0 0.0
      %1251 = vmatpush1.msra.mxu0 1.0
      %1252 = vmatprep.subr.mxu0 0.0
      %1253 = vmatpush1.msra.mxu0 1.0
      %1254 = vmatprep.subr.mxu0 0.0
      %1255 = vmatpush1.msra.mxu0 1.0
      %1256 = vmatprep.subr.mxu0 0.0
      %1257 = vmatpush1.msra.mxu0 1.0
      %1258 = vmatprep.subr.mxu0 0.0
      %1259 = vmatpush1.msra.mxu0 1.0
      %1260 = vmatprep.subr.mxu0 0.0
      %1261 = vmatpush1.msra.mxu0 1.0
      %1262 = vmatprep.subr.mxu0 0.0
      %1263 = vmatpush1.msra.mxu0 1.0
      %1264 = vmatprep.subr.mxu0 0.0
      %1265 = vmatpush1.msra.mxu0 1.0
      %1266 = vmatprep.subr.mxu0 0.0
      %1267 = vmatpush1.msra.mxu0 1.0
      %1268 = vmatprep.subr.mxu0 0.0
      %1269 = vmatpush1.msra.mxu0 1.0
      %1270 = vmatprep.subr.mxu0 0.0
      %1271 = vmatpush1.msra.mxu0 1.0
      %1272 = vmatprep.subr.mxu0 0.0
      %1273 = vmatpush1.msra.mxu0 1.0
      %1274 = vmatprep.subr.mxu0 0.0
      %1275 = vmatpush1.msra.mxu0 1.0
      %1276 = vmatprep.subr.mxu0 0.0
      %1277 = vmatpush1.msra.mxu0 1.0
      %1278 = vmatprep.subr.mxu0 0.0
      %1279 = vmatpush1.msra.mxu0 1.0
      %1280 = vmatprep.subr.mxu0 0.0
      %1281 = vmatpush1.msra.mxu0 1.0
      %1282 = vmatprep.subr.mxu0 0.0
      %1283 = vmatpush2.msra.mxu0 1.0
      %1284 = vmatprep.subr.mxu0 0.0
      %1285 = vmatpush2.msra.mxu0 1.0
      %1286 = vmatprep.subr.mxu0 0.0
      %1287 = vmatpush2.msra.mxu0 1.0
      %1288 = vmatprep.subr.mxu0 0.0
      %1289 = vmatpush2.msra.mxu0 1.0
      %1290 = vmatprep.subr.mxu0 0.0
      %1291 = vmatpush2.msra.mxu0 1.0
      %1292 = vmatprep.subr.mxu0 0.0
      %1293 = vmatpush2.msra.mxu0 1.0
      %1294 = vmatprep.subr.mxu0 0.0
      %1295 = vmatpush2.msra.mxu0 1.0
      %1296 = vmatprep.subr.mxu0 0.0
      %1297 = vmatpush2.msra.mxu0 1.0
      %1298 = vmatprep.subr.mxu0 0.0
      %1299 = vmatpush2.msra.mxu0 1.0
      %1300 = vmatprep.subr.mxu0 0.0
      %1301 = vmatpush2.msra.mxu0 1.0
      %1302 = vmatprep.subr.mxu0 0.0
      %1303 = vmatpush2.msra.mxu0 1.0
      %1304 = vmatprep.subr.mxu0 0.0
      %1305 = vmatpush2.msra.mxu0 1.0
      %1306 = vmatprep.subr.mxu0 0.0
      %1307 = vmatpush2.msra.mxu0 1.0
      %1308 = vmatprep.subr.mxu0 0.0
      %1309 = vmatpush2.msra.mxu0 1.0
      %1310 = vmatprep.subr.mxu0 0.0
      %1311 = vmatpush2.msra.mxu0 1.0
      %1312 = vmatprep.subr.mxu0 0.0
      %1313 = vmatpush2.msra.mxu0 1.0
      %1314 = vmatprep.mubr.f32.mxu0 %v1241
      %1315 = vmatmul.mubr.f32.gmra.mxu0 %v1240
      %v1316 = vpop.f32.mrf.mxu0
      %v1317 = vadd.f32 0.0, %v1316
      %v1318 = vpop.f32.mrf.mxu0
      %1319 = vmatprep.mubr.f32.mxu0 %v1247
      %1320 = vmatmul.mubr.f32.gmra.mxu0 %v1246
      %v1321 = vpop.f32.mrf.mxu0
      %v1322 = vadd.f32 0.0, %v1321
      %v1323 = vpop.f32.mrf.mxu0
      %1324 = vmatprep.mubr.f32.mxu0 %v1249
      %1325 = vmatmul.mubr.f32.gmra.mxu0 %v1248
      %v1326 = vpop.f32.mrf.mxu0
      %v1327 = vadd.f32 0.0, %v1326
      %v1328 = vpop.f32.mrf.mxu0
      %1329 = vdwg.mxu0
      %vm1330 = vcmask 7168
      %1331 = vst.msk [vmem:[%s338] sm:$0xff] %vm1330, %v1317
      %1332 = vst.msk [vmem:[%s338 + $0x8] sm:$0xff] %vm1330, %v1322
      %1333 = vst.msk [vmem:[%s338 + $0x10] sm:$0xff] %vm1330, %v1327
      %p1334 = scmp.lt.s32.totalorder %s20, 1
      %s1335 = scalar_select %p1334, %s20, 1
      %s1336 = smul.addr %s1335, 2
      %s1337 = smul.addr %s1336, 8
      %s1338 = scalar_lea.vmem %s7, %s1337
      %p1339 = scmp.lt.s32.totalorder %s20, 1
      %s1340 = scalar_select %p1339, %s20, 1
      %s1341 = smul.addr %s1340, 3
      %s1342 = smul.addr %s1341, 8
      %s1343 = scalar_lea.vmem %s8, %s1342
      // Predicated region
      $region49: #{resnet_block_forward.4} parent=47 // pred_check
        %p1344 = pneg %p195
      $region50: #{resnet_block_forward.4} parent=47 // pred_check_branch
        %1346 = sbr.rel (%p1344) target = $region52
      $region51: #{resnet_block_forward.4} parent=47 // pred_region
        _
      $region52: #{resnet_block_forward.4} parent=47 // pred_fallthru
        _
      // Predicated region
      $region53: #{resnet_block_forward.4} parent=47 // pred_check
        %p1347 = pneg %p221
      $region54: #{resnet_block_forward.4} parent=47 // pred_check_branch
        %1349 = sbr.rel (%p1347) target = $region56
      $region55: #{resnet_block_forward.4} parent=47 // pred_region
        _
      $region56: #{resnet_block_forward.4} parent=47 // pred_fallthru
        _
    $region48: #{resnet_block_forward.4} parent=5 // pred_fallthru
      _
    %p1350 = scmp.le.s32.totalorder 2, %s15
    // Predicated region
    $region57: #{resnet_block_forward.4} parent=5 // pred_check
      %p1351 = pneg %p1350
    $region58: #{resnet_block_forward.4} parent=5 // pred_check_branch
      %1353 = sbr.rel (%p1351) target = $region60
    $region59: #{resnet_block_forward.4} parent=5 // pred_region
      %s1354 = ssub.s32 %s15, 2
      // Predicated region
      $region61: #{resnet_block_forward.4} parent=59 // pred_check
        %p1355 = pneg %p201
      $region62: #{resnet_block_forward.4} parent=59 // pred_check_branch
        %1357 = sbr.rel (%p1355) target = $region64
      $region63: #{resnet_block_forward.4} parent=59 // pred_region
        %p1358 = scmp.lt.s32.totalorder %s21, 1
        %s1359 = scalar_select %p1358, %s21, 1
        %s1360 = smul.addr %s1359, 2
        %s1361 = smul.addr %s1360, 8
        %s1362 = scalar_lea.vmem %s7, %s1361
      $region64: #{resnet_block_forward.4} parent=59 // pred_fallthru
        _
      // Predicated region
      $region65: #{resnet_block_forward.4} parent=59 // pred_check
        %p1363 = pneg %p227
      $region66: #{resnet_block_forward.4} parent=59 // pred_check_branch
        %1365 = sbr.rel (%p1363) target = $region68
      $region67: #{resnet_block_forward.4} parent=59 // pred_region
        %p1366 = scmp.lt.s32.totalorder %s21, 1
        %s1367 = scalar_select %p1366, %s21, 1
        %s1368 = smul.addr %s1367, 3
        %s1369 = smul.addr %s1368, 8
        %s1370 = scalar_lea.vmem %s8, %s1369
      $region68: #{resnet_block_forward.4} parent=59 // pred_fallthru
        _
    $region60: #{resnet_block_forward.4} parent=5 // pred_fallthru
      _
  $region6: #{resnet_block_forward.4} parent=0 // loop_footer
    %s19 = sadd.s32 1, %s15
  $region7: #{resnet_block_forward.4} parent=0 // loop_footer_branch
    %14 = sbr.rel target = $region3
  $region8: #{resnet_block_forward.4} parent=0 // loop_exit
    _

// kernel: resnet_block_forward.3
$region0: #{resnet_block_forward.3}
  #allocation0 [shape = 'u32[]', space=smem, size = 0x4, offset = 0x4, fixed_abs, tag = 'smem constant byte address 0x4 - core index']
  #allocation1 [shape = 'u32[144,128]{1,0:T(1,128)}', space=vmem, size = 0x12000, scoped, tag = 'internal scratch']
  %s0 = inlined_call_operand.vmem [shape: f32[2,8,256], index: 0, kind: input, shape index: {}]
  %s1 = inlined_call_operand.vmem [shape: f32[9,8,8], index: 1, kind: input, shape index: {}]
  %s2 = inlined_call_operand.vmem [shape: f32[8,1], index: 2, kind: input, shape index: {}]
  %s3 = inlined_call_operand.vmem [shape: f32[9,256], index: 3, kind: input, shape index: {}]
  %s4 = inlined_call_operand.vmem [shape: f32[2,8,256], index: 4, kind: output, shape index: {0}]
  %s5 = inlined_call_operand.vmem [shape: f32[2,32,1], index: 5, kind: output, shape index: {1}]
  %6 = xla_tuple %s4, %s5
  %s7 = sld [smem:[#allocation0]]
  $region57: #{resnet_block_forward.3} parent=0
    _
  %s9 = ssub.s32 1, %s7
  %s10 = scalar_select 0, %s9, %s7
  loop: start=0, step=1, limit=4
  $region2: #{resnet_block_forward.3} parent=0 // loop_pre_header
    _
  $region3: #{resnet_block_forward.3} parent=0 // loop_header
    %s12 = sphi 0, %s16
    %p13 = scmp.ge.s32.totalorder %s12, 4
    %s22 = sphi 0, %s24
    %s25 = sphi 0, %s22
    %s26 = sphi 0, %s25
    %s42 = sphi 0, %s26
    %s46 = sphi 0, %s46
    %s48 = sphi 0, %s46
    %s49 = sphi 0, %s48
    %s63 = sphi 0, %s49
    %s67 = sphi 0, %s67
    %s69 = sphi 0, %s67
    %s70 = sphi 0, %s69
    %s84 = sphi 0, %s70
    %s88 = sphi 0, %s88
    %s90 = sphi 0, %s88
    %s91 = sphi 0, %s90
    %s105 = sphi 0, %s91
    %s111 = sphi 0, %s113
    %s114 = sphi 0, %s111
    %s115 = sphi 0, %s114
    %s131 = sphi 0, %s115
    %s137 = sphi 0, %s139
    %s140 = sphi 0, %s137
    %s141 = sphi 0, %s140
    %s157 = sphi 0, %s141
  $region4: #{resnet_block_forward.3} parent=0 // loop_header_branch
    %15 = sbr.rel (%p13) target = $region8
  $region5: #{resnet_block_forward.3} parent=0 // loop_body
    %s17 = ssub.s32 %s12, 1
    %s18 = ssub.s32 %s12, 2
    %s19 = sadd.s32 %s12, 1
    %s20 = ssub.s32 %s12, %s19
    %p21 = scmp.eq.s32.totalorder %s20, 0
    %s23 = sadd.s32 %s22, 1
    %s24 = scalar_select %p21, %s22, %s23
    %p27 = pneg %p21
    %p28 = scmp.eq.s32.totalorder %s12, 1
    %p29 = por %p27, %p28
    %p30 = scmp.ne.s32.totalorder %s22, %s25
    %p31 = scmp.eq.s32.totalorder %s12, 0
    %p32 = por %p30, %p31
    %p33 = scmp.ne.s32.totalorder %s22, %s25
    %p34 = scmp.eq.s32.totalorder %s17, 1
    %p35 = por %p33, %p34
    %p36 = scmp.ne.s32.totalorder %s25, %s26
    %p37 = scmp.eq.s32.totalorder %s17, 0
    %p38 = por %p36, %p37
    %p39 = scmp.ne.s32.totalorder %s25, %s26
    %p40 = scmp.eq.s32.totalorder %s18, 1
    %p41 = por %p39, %p40
    %p43 = scmp.ne.s32.totalorder %s26, %s42
    %p44 = scmp.eq.s32.totalorder %s18, 0
    %p45 = por %p43, %p44
    %s47 = sadd.s32 %s46, 1
    %p50 = scmp.eq.s32.totalorder %s12, 1
    %p51 = scmp.ne.s32.totalorder %s46, %s48
    %p52 = scmp.eq.s32.totalorder %s12, 0
    %p53 = por %p51, %p52
    %p54 = scmp.ne.s32.totalorder %s46, %s48
    %p55 = scmp.eq.s32.totalorder %s17, 1
    %p56 = por %p54, %p55
    %p57 = scmp.ne.s32.totalorder %s48, %s49
    %p58 = scmp.eq.s32.totalorder %s17, 0
    %p59 = por %p57, %p58
    %p60 = scmp.ne.s32.totalorder %s48, %s49
    %p61 = scmp.eq.s32.totalorder %s18, 1
    %p62 = por %p60, %p61
    %p64 = scmp.ne.s32.totalorder %s49, %s63
    %p65 = scmp.eq.s32.totalorder %s18, 0
    %p66 = por %p64, %p65
    %s68 = sadd.s32 %s67, 1
    %p71 = scmp.eq.s32.totalorder %s12, 1
    %p72 = scmp.ne.s32.totalorder %s67, %s69
    %p73 = scmp.eq.s32.totalorder %s12, 0
    %p74 = por %p72, %p73
    %p75 = scmp.ne.s32.totalorder %s67, %s69
    %p76 = scmp.eq.s32.totalorder %s17, 1
    %p77 = por %p75, %p76
    %p78 = scmp.ne.s32.totalorder %s69, %s70
    %p79 = scmp.eq.s32.totalorder %s17, 0
    %p80 = por %p78, %p79
    %p81 = scmp.ne.s32.totalorder %s69, %s70
    %p82 = scmp.eq.s32.totalorder %s18, 1
    %p83 = por %p81, %p82
    %p85 = scmp.ne.s32.totalorder %s70, %s84
    %p86 = scmp.eq.s32.totalorder %s18, 0
    %p87 = por %p85, %p86
    %s89 = sadd.s32 %s88, 1
    %p92 = scmp.eq.s32.totalorder %s12, 1
    %p93 = scmp.ne.s32.totalorder %s88, %s90
    %p94 = scmp.eq.s32.totalorder %s12, 0
    %p95 = por %p93, %p94
    %p96 = scmp.ne.s32.totalorder %s88, %s90
    %p97 = scmp.eq.s32.totalorder %s17, 1
    %p98 = por %p96, %p97
    %p99 = scmp.ne.s32.totalorder %s90, %s91
    %p100 = scmp.eq.s32.totalorder %s17, 0
    %p101 = por %p99, %p100
    %p102 = scmp.ne.s32.totalorder %s90, %s91
    %p103 = scmp.eq.s32.totalorder %s18, 1
    %p104 = por %p102, %p103
    %p106 = scmp.ne.s32.totalorder %s91, %s105
    %p107 = scmp.eq.s32.totalorder %s18, 0
    %p108 = por %p106, %p107
    %s109 = ssub.s32 %s12, %s19
    %p110 = scmp.eq.s32.totalorder %s109, 0
    %s112 = sadd.s32 %s111, 1
    %s113 = scalar_select %p110, %s111, %s112
    %p116 = pneg %p110
    %p117 = scmp.eq.s32.totalorder %s12, 1
    %p118 = por %p116, %p117
    %p119 = scmp.ne.s32.totalorder %s111, %s114
    %p120 = scmp.eq.s32.totalorder %s12, 0
    %p121 = por %p119, %p120
    %p122 = scmp.ne.s32.totalorder %s111, %s114
    %p123 = scmp.eq.s32.totalorder %s17, 1
    %p124 = por %p122, %p123
    %p125 = scmp.ne.s32.totalorder %s114, %s115
    %p126 = scmp.eq.s32.totalorder %s17, 0
    %p127 = por %p125, %p126
    %p128 = scmp.ne.s32.totalorder %s114, %s115
    %p129 = scmp.eq.s32.totalorder %s18, 1
    %p130 = por %p128, %p129
    %p132 = scmp.ne.s32.totalorder %s115, %s131
    %p133 = scmp.eq.s32.totalorder %s18, 0
    %p134 = por %p132, %p133
    %s135 = ssub.s32 %s12, %s19
    %p136 = scmp.eq.s32.totalorder %s135, 0
    %s138 = sadd.s32 %s137, 1
    %s139 = scalar_select %p136, %s137, %s138
    %p142 = pneg %p136
    %p143 = scmp.eq.s32.totalorder %s12, 1
    %p144 = por %p142, %p143
    %p145 = scmp.ne.s32.totalorder %s137, %s140
    %p146 = scmp.eq.s32.totalorder %s12, 0
    %p147 = por %p145, %p146
    %p148 = scmp.ne.s32.totalorder %s137, %s140
    %p149 = scmp.eq.s32.totalorder %s17, 1
    %p150 = por %p148, %p149
    %p151 = scmp.ne.s32.totalorder %s140, %s141
    %p152 = scmp.eq.s32.totalorder %s17, 0
    %p153 = por %p151, %p152
    %p154 = scmp.ne.s32.totalorder %s140, %s141
    %p155 = scmp.eq.s32.totalorder %s18, 1
    %p156 = por %p154, %p155
    %p158 = scmp.ne.s32.totalorder %s141, %s157
    %p159 = scmp.eq.s32.totalorder %s18, 0
    %p160 = por %p158, %p159
    %p161 = scmp.le.s32.totalorder 1, %s12
    %p162 = scmp.lt.s32.totalorder %s12, 3
    %p163 = pnand %p161, %p162
    %p164 = pneg %p163
    // Predicated region
    $region9: #{resnet_block_forward.3} parent=5 // pred_check
      _
    $region10: #{resnet_block_forward.3} parent=5 // pred_check_branch
      %166 = sbr.rel (%p163) target = $region12
    $region11: #{resnet_block_forward.3} parent=5 // pred_region
      %s167 = ssub.s32 %s12, 1
      // Predicated region
      $region13: #{resnet_block_forward.3} parent=11 // pred_check
        %p168 = pneg %p59
      $region14: #{resnet_block_forward.3} parent=11 // pred_check_branch
        %170 = sbr.rel (%p168) target = $region16
      $region15: #{resnet_block_forward.3} parent=11 // pred_region
        _
      $region16: #{resnet_block_forward.3} parent=11 // pred_fallthru
        _
      // Predicated region
      $region17: #{resnet_block_forward.3} parent=11 // pred_check
        %p171 = pneg %p80
      $region18: #{resnet_block_forward.3} parent=11 // pred_check_branch
        %173 = sbr.rel (%p171) target = $region20
      $region19: #{resnet_block_forward.3} parent=11 // pred_region
        _
      $region20: #{resnet_block_forward.3} parent=11 // pred_fallthru
        _
      // Predicated region
      $region21: #{resnet_block_forward.3} parent=11 // pred_check
        %p174 = pneg %p101
      $region22: #{resnet_block_forward.3} parent=11 // pred_check_branch
        %176 = sbr.rel (%p174) target = $region24
      $region23: #{resnet_block_forward.3} parent=11 // pred_region
        _
      $region24: #{resnet_block_forward.3} parent=11 // pred_fallthru
        _
    $region12: #{resnet_block_forward.3} parent=5 // pred_fallthru
      _
    %p177 = scmp.lt.s32.totalorder %s12, 2
    // Predicated region
    $region25: #{resnet_block_forward.3} parent=5 // pred_check
      %p178 = pneg %p177
    $region26: #{resnet_block_forward.3} parent=5 // pred_check_branch
      %180 = sbr.rel (%p178) target = $region28
    $region27: #{resnet_block_forward.3} parent=5 // pred_region
      // Predicated region
      $region29: #{resnet_block_forward.3} parent=27 // pred_check
        %p181 = pneg %p32
      $region30: #{resnet_block_forward.3} parent=27 // pred_check_branch
        %183 = sbr.rel (%p181) target = $region32
      $region31: #{resnet_block_forward.3} parent=27 // pred_region
        %p184 = scmp.lt.s32.totalorder %s12, 1
        %s185 = scalar_select %p184, %s12, 1
        %s186 = smul.addr %s185, 2
        %s187 = smul.addr %s186, 8
        %s188 = scalar_lea.vmem %s0, %s187
      $region32: #{resnet_block_forward.3} parent=27 // pred_fallthru
        _
    $region28: #{resnet_block_forward.3} parent=5 // pred_fallthru
      _
    %p189 = scmp.le.s32.totalorder 1, %s12
    %p190 = scmp.lt.s32.totalorder %s12, 3
    %p191 = pnand %p189, %p190
    %p192 = pneg %p191
    // Predicated region
    $region33: #{resnet_block_forward.3} parent=5 // pred_check
      _
    $region34: #{resnet_block_forward.3} parent=5 // pred_check_branch
      %194 = sbr.rel (%p191) target = $region36
    $region35: #{resnet_block_forward.3} parent=5 // pred_region
      %s195 = ssub.s32 %s12, 1
      %p196 = scmp.lt.s32.totalorder %s17, 1
      %s197 = scalar_select %p196, %s17, 1
      %s198 = smul.addr %s197, 2
      %s199 = smul.addr %s198, 8
      %s200 = scalar_lea.vmem %s0, %s199
      %p201 = pneg %p38
      %p202 = pneg %p35
      %p203 = pneg %p59
      %p204 = pneg %p56
      %p205 = pneg %p80
      %p206 = pneg %p77
      %p207 = pneg %p101
      %p208 = pneg %p98
      %p209 = pneg %p127
      %p210 = pneg %p124
      %p211 = scmp.lt.s32.totalorder %s17, 1
      %s212 = scalar_select %p211, %s17, 1
      %s213 = smul.addr %s212, 2
      %s214 = smul.addr %s213, 8
      %s215 = scalar_lea.vmem %s4, %s214
      %p216 = pneg %p153
      %p217 = pneg %p150
      %p218 = scmp.lt.s32.totalorder %s17, 1
      %s219 = scalar_select %p218, %s17, 1
      %s220 = smul.addr %s219, 4
      %s221 = smul.addr %s220, 8
      %s222 = scalar_lea.vmem %s5, %s221
      %p223 = scmp.lt.s32.totalorder %s17, 1
      %s224 = scalar_select %p223, %s17, 1
      %s225 = smul.addr %s224, 2
      %s226 = smul.addr %s225, 8
      %s227 = scalar_lea.vmem %s0, %s226
      %p228 = scmp.lt.s32.totalorder %s17, 1
      %s229 = scalar_select %p228, %s17, 1
      %s230 = smul.addr %s229, 2
      %s231 = smul.addr %s230, 8
      %s232 = scalar_lea.vmem %s4, %s231
      %p233 = scmp.lt.s32.totalorder %s17, 1
      %s234 = scalar_select %p233, %s17, 1
      %s235 = smul.addr %s234, 4
      %s236 = smul.addr %s235, 8
      %s237 = scalar_lea.vmem %s5, %s236
      %v238 = vld [vmem:[%s227] sm:$0xff]
      %v239 = vld [vmem:[%s227 + $0x8] sm:$0xff]
      %240 = vrot.lane.b32.xlu0 %v238, 17
      %v241 = vpop.permute.xlu0 %240
      %242 = vrot.lane.b32.xlu0 %v239, 17
      %v243 = vpop.permute.xlu0 %242
      %v244 = vlaneseq
      %v245 = vand.u32 %v244, 127
      %vm246 = vcmp.lt.s32.totalorder %v245, 17
      %v247 = vsel %vm246, %v241, %v243
      %v248 = vsel %vm246, %v243, %v241
      %v249 = vld [vmem:[%s3] ss:$8 sm:$0x3]
      %v251 = vlaneseq
      %v252 = vshrl.u32 %v251, 7
      %v253 = vsub.s32 0, %v252
      %v254 = vrot.slane %v249, %v253
      %v255 = vlaneseq
      %v256 = vshrl.u32 %v255, 7
      %v257 = vsub.s32 1, %v256
      %v258 = vrot.slane %v249, %v257
      %v261 = vmul.f32 %v248, %v254
      %v262 = vmul.f32 %v247, %v258
      %v263 = vld [vmem:[%s1] sm:$0xff]
      %264 = vrot.lane.b32.xlu0 %v238, 16
      %v265 = vpop.permute.xlu0 %264
      %266 = vrot.lane.b32.xlu0 %v239, 16
      %v267 = vpop.permute.xlu0 %266
      %vm268 = vcmp.lt.s32.totalorder %v245, 16
      %v269 = vsel %vm268, %v265, %v267
      %v270 = vsel %vm268, %v267, %v265
      %s271 = scalar_lea.vmem %s3, 1
      %v272 = vld [vmem:[%s271] ss:$8 sm:$0x3]
      %v274 = vlaneseq
      %v275 = vshrl.u32 %v274, 7
      %v276 = vsub.s32 0, %v275
      %v277 = vrot.slane %v272, %v276
      %v278 = vlaneseq
      %v279 = vshrl.u32 %v278, 7
      %v280 = vsub.s32 1, %v279
      %v281 = vrot.slane %v272, %v280
      %v284 = vmul.f32 %v270, %v277
      %v285 = vmul.f32 %v269, %v281
      %s286 = scalar_lea.vmem %s1, 8
      %v287 = vld [vmem:[%s286] sm:$0xff]
      %vm288 = vcmask 64512
      %v290 = vsel %vm288, %v287, 0
      %292 = vmatprep.subr.mxu0 0.0
      %293 = vmatpush1.msra.mxu0 0.0
      %294 = vmatprep.subr.mxu0 0.0
      %295 = vmatpush1.msra.mxu0 0.0
      %296 = vmatprep.subr.mxu0 0.0
      %297 = vmatpush1.msra.mxu0 0.0
      %298 = vmatprep.subr.mxu0 0.0
      %299 = vmatpush1.msra.mxu0 0.0
      %300 = vmatprep.subr.mxu0 0.0
      %301 = vmatpush1.msra.mxu0 0.0
      %302 = vmatprep.subr.mxu0 0.0
      %303 = vmatpush1.msra.mxu0 0.0
      %304 = vmatprep.subr.mxu0 0.0
      %305 = vmatpush1.msra.mxu0 0.0
      %306 = vmatprep.subr.mxu0 0.0
      %307 = vmatpush1.msra.mxu0 0.0
      %308 = vmatprep.subr.mxu0 0.0
      %309 = vmatpush1.msra.mxu0 0.0
      %310 = vmatprep.subr.mxu0 0.0
      %311 = vmatpush1.msra.mxu0 0.0
      %312 = vmatprep.subr.mxu0 0.0
      %313 = vmatpush1.msra.mxu0 0.0
      %314 = vmatprep.subr.mxu0 0.0
      %315 = vmatpush1.msra.mxu0 0.0
      %316 = vmatprep.subr.mxu0 0.0
      %317 = vmatpush1.msra.mxu0 0.0
      %318 = vmatprep.subr.mxu0 0.0
      %319 = vmatpush1.msra.mxu0 0.0
      %320 = vmatprep.subr.mxu0 0.0
      %321 = vmatpush1.msra.mxu0 0.0
      %322 = vmatprep.subr.mxu0 %v285
      %323 = vmatpush1.msra.mxu0 %v284
      %324 = vmatprep.subr.mxu0 0.0
      %325 = vmatpush2.msra.mxu0 0.0
      %326 = vmatprep.subr.mxu0 0.0
      %327 = vmatpush2.msra.mxu0 0.0
      %328 = vmatprep.subr.mxu0 0.0
      %329 = vmatpush2.msra.mxu0 0.0
      %330 = vmatprep.subr.mxu0 0.0
      %331 = vmatpush2.msra.mxu0 0.0
      %332 = vmatprep.subr.mxu0 0.0
      %333 = vmatpush2.msra.mxu0 0.0
      %334 = vmatprep.subr.mxu0 0.0
      %335 = vmatpush2.msra.mxu0 0.0
      %336 = vmatprep.subr.mxu0 0.0
      %337 = vmatpush2.msra.mxu0 0.0
      %338 = vmatprep.subr.mxu0 0.0
      %339 = vmatpush2.msra.mxu0 0.0
      %340 = vmatprep.subr.mxu0 0.0
      %341 = vmatpush2.msra.mxu0 0.0
      %342 = vmatprep.subr.mxu0 0.0
      %343 = vmatpush2.msra.mxu0 0.0
      %344 = vmatprep.subr.mxu0 0.0
      %345 = vmatpush2.msra.mxu0 0.0
      %346 = vmatprep.subr.mxu0 0.0
      %347 = vmatpush2.msra.mxu0 0.0
      %348 = vmatprep.subr.mxu0 0.0
      %349 = vmatpush2.msra.mxu0 0.0
      %350 = vmatprep.subr.mxu0 0.0
      %351 = vmatpush2.msra.mxu0 0.0
      %352 = vmatprep.subr.mxu0 0.0
      %353 = vmatpush2.msra.mxu0 0.0
      %354 = vmatprep.subr.mxu0 0.0
      %355 = vmatpush2.msra.mxu0 0.0
      %356 = vmatprep.mubr.f32.mxu0 0.0
      %357 = vmatmul.mubr.f32.gmra.mxu0 %v290
      %v358 = vpop.f32.mrf.mxu0
      %v359 = vadd.f32 0.0, %v358
      %v360 = vpop.f32.mrf.mxu0
      %v361 = vadd.f32 0.0, %v360
      %362 = vdwg.mxu0
      %v364 = vsel %vm288, %v263, 0
      %366 = vmatprep.subr.mxu0 0.0
      %367 = vmatpush1.msra.mxu0 0.0
      %368 = vmatprep.subr.mxu0 0.0
      %369 = vmatpush1.msra.mxu0 0.0
      %370 = vmatprep.subr.mxu0 0.0
      %371 = vmatpush1.msra.mxu0 0.0
      %372 = vmatprep.subr.mxu0 0.0
      %373 = vmatpush1.msra.mxu0 0.0
      %374 = vmatprep.subr.mxu0 0.0
      %375 = vmatpush1.msra.mxu0 0.0
      %376 = vmatprep.subr.mxu0 0.0
      %377 = vmatpush1.msra.mxu0 0.0
      %378 = vmatprep.subr.mxu0 0.0
      %379 = vmatpush1.msra.mxu0 0.0
      %380 = vmatprep.subr.mxu0 0.0
      %381 = vmatpush1.msra.mxu0 0.0
      %382 = vmatprep.subr.mxu0 0.0
      %383 = vmatpush1.msra.mxu0 0.0
      %384 = vmatprep.subr.mxu0 0.0
      %385 = vmatpush1.msra.mxu0 0.0
      %386 = vmatprep.subr.mxu0 0.0
      %387 = vmatpush1.msra.mxu0 0.0
      %388 = vmatprep.subr.mxu0 0.0
      %389 = vmatpush1.msra.mxu0 0.0
      %390 = vmatprep.subr.mxu0 0.0
      %391 = vmatpush1.msra.mxu0 0.0
      %392 = vmatprep.subr.mxu0 0.0
      %393 = vmatpush1.msra.mxu0 0.0
      %394 = vmatprep.subr.mxu0 0.0
      %395 = vmatpush1.msra.mxu0 0.0
      %396 = vmatprep.subr.mxu0 %v262
      %397 = vmatpush1.msra.mxu0 %v261
      %398 = vmatprep.subr.mxu0 0.0
      %399 = vmatpush2.msra.mxu0 0.0
      %400 = vmatprep.subr.mxu0 0.0
      %401 = vmatpush2.msra.mxu0 0.0
      %402 = vmatprep.subr.mxu0 0.0
      %403 = vmatpush2.msra.mxu0 0.0
      %404 = vmatprep.subr.mxu0 0.0
      %405 = vmatpush2.msra.mxu0 0.0
      %406 = vmatprep.subr.mxu0 0.0
      %407 = vmatpush2.msra.mxu0 0.0
      %408 = vmatprep.subr.mxu0 0.0
      %409 = vmatpush2.msra.mxu0 0.0
      %410 = vmatprep.subr.mxu0 0.0
      %411 = vmatpush2.msra.mxu0 0.0
      %412 = vmatprep.subr.mxu0 0.0
      %413 = vmatpush2.msra.mxu0 0.0
      %414 = vmatprep.subr.mxu0 0.0
      %415 = vmatpush2.msra.mxu0 0.0
      %416 = vmatprep.subr.mxu0 0.0
      %417 = vmatpush2.msra.mxu0 0.0
      %418 = vmatprep.subr.mxu0 0.0
      %419 = vmatpush2.msra.mxu0 0.0
      %420 = vmatprep.subr.mxu0 0.0
      %421 = vmatpush2.msra.mxu0 0.0
      %422 = vmatprep.subr.mxu0 0.0
      %423 = vmatpush2.msra.mxu0 0.0
      %424 = vmatprep.subr.mxu0 0.0
      %425 = vmatpush2.msra.mxu0 0.0
      %426 = vmatprep.subr.mxu0 0.0
      %427 = vmatpush2.msra.mxu0 0.0
      %428 = vmatprep.subr.mxu0 0.0
      %429 = vmatpush2.msra.mxu0 0.0
      %430 = vmatprep.mubr.f32.mxu0 0.0
      %431 = vmatmul.mubr.f32.gmra.mxu0 %v364
      %v432 = vpop.f32.mrf.mxu0
      %v433 = vadd.f32 %v359, %v432
      %v434 = vpop.f32.mrf.mxu0
      %v435 = vadd.f32 %v361, %v434
      %436 = vdwg.mxu0
      %437 = vrot.lane.b32.xlu0 %v238, 15
      %v438 = vpop.permute.xlu0 %437
      %439 = vrot.lane.b32.xlu0 %v239, 15
      %v440 = vpop.permute.xlu0 %439
      %vm441 = vcmp.lt.s32.totalorder %v245, 15
      %v442 = vsel %vm441, %v438, %v440
      %v443 = vsel %vm441, %v440, %v438
      %s444 = scalar_lea.vmem %s3, 2
      %v445 = vld [vmem:[%s444] ss:$8 sm:$0x3]
      %v447 = vlaneseq
      %v448 = vshrl.u32 %v447, 7
      %v449 = vsub.s32 0, %v448
      %v450 = vrot.slane %v445, %v449
      %v451 = vlaneseq
      %v452 = vshrl.u32 %v451, 7
      %v453 = vsub.s32 1, %v452
      %v454 = vrot.slane %v445, %v453
      %v457 = vmul.f32 %v443, %v450
      %v458 = vmul.f32 %v442, %v454
      %s459 = scalar_lea.vmem %s1, 16
      %v460 = vld [vmem:[%s459] sm:$0xff]
      %v462 = vsel %vm288, %v460, 0
      %464 = vmatprep.subr.mxu0 0.0
      %465 = vmatpush1.msra.mxu0 0.0
      %466 = vmatprep.subr.mxu0 0.0
      %467 = vmatpush1.msra.mxu0 0.0
      %468 = vmatprep.subr.mxu0 0.0
      %469 = vmatpush1.msra.mxu0 0.0
      %470 = vmatprep.subr.mxu0 0.0
      %471 = vmatpush1.msra.mxu0 0.0
      %472 = vmatprep.subr.mxu0 0.0
      %473 = vmatpush1.msra.mxu0 0.0
      %474 = vmatprep.subr.mxu0 0.0
      %475 = vmatpush1.msra.mxu0 0.0
      %476 = vmatprep.subr.mxu0 0.0
      %477 = vmatpush1.msra.mxu0 0.0
      %478 = vmatprep.subr.mxu0 0.0
      %479 = vmatpush1.msra.mxu0 0.0
      %480 = vmatprep.subr.mxu0 0.0
      %481 = vmatpush1.msra.mxu0 0.0
      %482 = vmatprep.subr.mxu0 0.0
      %483 = vmatpush1.msra.mxu0 0.0
      %484 = vmatprep.subr.mxu0 0.0
      %485 = vmatpush1.msra.mxu0 0.0
      %486 = vmatprep.subr.mxu0 0.0
      %487 = vmatpush1.msra.mxu0 0.0
      %488 = vmatprep.subr.mxu0 0.0
      %489 = vmatpush1.msra.mxu0 0.0
      %490 = vmatprep.subr.mxu0 0.0
      %491 = vmatpush1.msra.mxu0 0.0
      %492 = vmatprep.subr.mxu0 0.0
      %493 = vmatpush1.msra.mxu0 0.0
      %494 = vmatprep.subr.mxu0 %v458
      %495 = vmatpush1.msra.mxu0 %v457
      %496 = vmatprep.subr.mxu0 0.0
      %497 = vmatpush2.msra.mxu0 0.0
      %498 = vmatprep.subr.mxu0 0.0
      %499 = vmatpush2.msra.mxu0 0.0
      %500 = vmatprep.subr.mxu0 0.0
      %501 = vmatpush2.msra.mxu0 0.0
      %502 = vmatprep.subr.mxu0 0.0
      %503 = vmatpush2.msra.mxu0 0.0
      %504 = vmatprep.subr.mxu0 0.0
      %505 = vmatpush2.msra.mxu0 0.0
      %506 = vmatprep.subr.mxu0 0.0
      %507 = vmatpush2.msra.mxu0 0.0
      %508 = vmatprep.subr.mxu0 0.0
      %509 = vmatpush2.msra.mxu0 0.0
      %510 = vmatprep.subr.mxu0 0.0
      %511 = vmatpush2.msra.mxu0 0.0
      %512 = vmatprep.subr.mxu0 0.0
      %513 = vmatpush2.msra.mxu0 0.0
      %514 = vmatprep.subr.mxu0 0.0
      %515 = vmatpush2.msra.mxu0 0.0
      %516 = vmatprep.subr.mxu0 0.0
      %517 = vmatpush2.msra.mxu0 0.0
      %518 = vmatprep.subr.mxu0 0.0
      %519 = vmatpush2.msra.mxu0 0.0
      %520 = vmatprep.subr.mxu0 0.0
      %521 = vmatpush2.msra.mxu0 0.0
      %522 = vmatprep.subr.mxu0 0.0
      %523 = vmatpush2.msra.mxu0 0.0
      %524 = vmatprep.subr.mxu0 0.0
      %525 = vmatpush2.msra.mxu0 0.0
      %526 = vmatprep.subr.mxu0 0.0
      %527 = vmatpush2.msra.mxu0 0.0
      %528 = vmatprep.mubr.f32.mxu0 0.0
      %529 = vmatmul.mubr.f32.gmra.mxu0 %v462
      %v530 = vpop.f32.mrf.mxu0
      %v531 = vadd.f32 0.0, %v530
      %v532 = vpop.f32.mrf.mxu0
      %v533 = vadd.f32 0.0, %v532
      %534 = vdwg.mxu0
      %v535 = vadd.f32 %v433, %v531
      %v536 = vadd.f32 %v435, %v533
      %537 = vrot.lane.b32.xlu0 %v238, 1
      %v538 = vpop.permute.xlu0 %537
      %539 = vrot.lane.b32.xlu0 %v239, 1
      %v540 = vpop.permute.xlu0 %539
      %vm541 = vcmp.lt.s32.totalorder %v245, 1
      %v542 = vsel %vm541, %v538, %v540
      %v543 = vsel %vm541, %v540, %v538
      %s544 = scalar_lea.vmem %s3, 3
      %v545 = vld [vmem:[%s544] ss:$8 sm:$0x3]
      %v547 = vlaneseq
      %v548 = vshrl.u32 %v547, 7
      %v549 = vsub.s32 0, %v548
      %v550 = vrot.slane %v545, %v549
      %v551 = vlaneseq
      %v552 = vshrl.u32 %v551, 7
      %v553 = vsub.s32 1, %v552
      %v554 = vrot.slane %v545, %v553
      %v557 = vmul.f32 %v543, %v550
      %v558 = vmul.f32 %v542, %v554
      %s559 = scalar_lea.vmem %s1, 24
      %v560 = vld [vmem:[%s559] sm:$0xff]
      %v562 = vsel %vm288, %v560, 0
      %564 = vmatprep.subr.mxu0 0.0
      %565 = vmatpush1.msra.mxu0 0.0
      %566 = vmatprep.subr.mxu0 0.0
      %567 = vmatpush1.msra.mxu0 0.0
      %568 = vmatprep.subr.mxu0 0.0
      %569 = vmatpush1.msra.mxu0 0.0
      %570 = vmatprep.subr.mxu0 0.0
      %571 = vmatpush1.msra.mxu0 0.0
      %572 = vmatprep.subr.mxu0 0.0
      %573 = vmatpush1.msra.mxu0 0.0
      %574 = vmatprep.subr.mxu0 0.0
      %575 = vmatpush1.msra.mxu0 0.0
      %576 = vmatprep.subr.mxu0 0.0
      %577 = vmatpush1.msra.mxu0 0.0
      %578 = vmatprep.subr.mxu0 0.0
      %579 = vmatpush1.msra.mxu0 0.0
      %580 = vmatprep.subr.mxu0 0.0
      %581 = vmatpush1.msra.mxu0 0.0
      %582 = vmatprep.subr.mxu0 0.0
      %583 = vmatpush1.msra.mxu0 0.0
      %584 = vmatprep.subr.mxu0 0.0
      %585 = vmatpush1.msra.mxu0 0.0
      %586 = vmatprep.subr.mxu0 0.0
      %587 = vmatpush1.msra.mxu0 0.0
      %588 = vmatprep.subr.mxu0 0.0
      %589 = vmatpush1.msra.mxu0 0.0
      %590 = vmatprep.subr.mxu0 0.0
      %591 = vmatpush1.msra.mxu0 0.0
      %592 = vmatprep.subr.mxu0 0.0
      %593 = vmatpush1.msra.mxu0 0.0
      %594 = vmatprep.subr.mxu0 %v558
      %595 = vmatpush1.msra.mxu0 %v557
      %596 = vmatprep.subr.mxu0 0.0
      %597 = vmatpush2.msra.mxu0 0.0
      %598 = vmatprep.subr.mxu0 0.0
      %599 = vmatpush2.msra.mxu0 0.0
      %600 = vmatprep.subr.mxu0 0.0
      %601 = vmatpush2.msra.mxu0 0.0
      %602 = vmatprep.subr.mxu0 0.0
      %603 = vmatpush2.msra.mxu0 0.0
      %604 = vmatprep.subr.mxu0 0.0
      %605 = vmatpush2.msra.mxu0 0.0
      %606 = vmatprep.subr.mxu0 0.0
      %607 = vmatpush2.msra.mxu0 0.0
      %608 = vmatprep.subr.mxu0 0.0
      %609 = vmatpush2.msra.mxu0 0.0
      %610 = vmatprep.subr.mxu0 0.0
      %611 = vmatpush2.msra.mxu0 0.0
      %612 = vmatprep.subr.mxu0 0.0
      %613 = vmatpush2.msra.mxu0 0.0
      %614 = vmatprep.subr.mxu0 0.0
      %615 = vmatpush2.msra.mxu0 0.0
      %616 = vmatprep.subr.mxu0 0.0
      %617 = vmatpush2.msra.mxu0 0.0
      %618 = vmatprep.subr.mxu0 0.0
      %619 = vmatpush2.msra.mxu0 0.0
      %620 = vmatprep.subr.mxu0 0.0
      %621 = vmatpush2.msra.mxu0 0.0
      %622 = vmatprep.subr.mxu0 0.0
      %623 = vmatpush2.msra.mxu0 0.0
      %624 = vmatprep.subr.mxu0 0.0
      %625 = vmatpush2.msra.mxu0 0.0
      %626 = vmatprep.subr.mxu0 0.0
      %627 = vmatpush2.msra.mxu0 0.0
      %628 = vmatprep.mubr.f32.mxu0 0.0
      %629 = vmatmul.mubr.f32.gmra.mxu0 %v562
      %v630 = vpop.f32.mrf.mxu0
      %v631 = vadd.f32 0.0, %v630
      %v632 = vpop.f32.mrf.mxu0
      %v633 = vadd.f32 0.0, %v632
      %634 = vdwg.mxu0
      %v635 = vadd.f32 %v535, %v631
      %v636 = vadd.f32 %v536, %v633
      %s637 = scalar_lea.vmem %s1, 32
      %v638 = vld [vmem:[%s637] sm:$0xff]
      %v640 = vsel %vm288, %v638, 0
      %642 = vmatprep.subr.mxu0 0.0
      %643 = vmatpush1.msra.mxu0 0.0
      %644 = vmatprep.subr.mxu0 0.0
      %645 = vmatpush1.msra.mxu0 0.0
      %646 = vmatprep.subr.mxu0 0.0
      %647 = vmatpush1.msra.mxu0 0.0
      %648 = vmatprep.subr.mxu0 0.0
      %649 = vmatpush1.msra.mxu0 0.0
      %650 = vmatprep.subr.mxu0 0.0
      %651 = vmatpush1.msra.mxu0 0.0
      %652 = vmatprep.subr.mxu0 0.0
      %653 = vmatpush1.msra.mxu0 0.0
      %654 = vmatprep.subr.mxu0 0.0
      %655 = vmatpush1.msra.mxu0 0.0
      %656 = vmatprep.subr.mxu0 0.0
      %657 = vmatpush1.msra.mxu0 0.0
      %658 = vmatprep.subr.mxu0 0.0
      %659 = vmatpush1.msra.mxu0 0.0
      %660 = vmatprep.subr.mxu0 0.0
      %661 = vmatpush1.msra.mxu0 0.0
      %662 = vmatprep.subr.mxu0 0.0
      %663 = vmatpush1.msra.mxu0 0.0
      %664 = vmatprep.subr.mxu0 0.0
      %665 = vmatpush1.msra.mxu0 0.0
      %666 = vmatprep.subr.mxu0 0.0
      %667 = vmatpush1.msra.mxu0 0.0
      %668 = vmatprep.subr.mxu0 0.0
      %669 = vmatpush1.msra.mxu0 0.0
      %670 = vmatprep.subr.mxu0 0.0
      %671 = vmatpush1.msra.mxu0 0.0
      %672 = vmatprep.subr.mxu0 %v239
      %673 = vmatpush1.msra.mxu0 %v238
      %674 = vmatprep.subr.mxu0 0.0
      %675 = vmatpush2.msra.mxu0 0.0
      %676 = vmatprep.subr.mxu0 0.0
      %677 = vmatpush2.msra.mxu0 0.0
      %678 = vmatprep.subr.mxu0 0.0
      %679 = vmatpush2.msra.mxu0 0.0
      %680 = vmatprep.subr.mxu0 0.0
      %681 = vmatpush2.msra.mxu0 0.0
      %682 = vmatprep.subr.mxu0 0.0
      %683 = vmatpush2.msra.mxu0 0.0
      %684 = vmatprep.subr.mxu0 0.0
      %685 = vmatpush2.msra.mxu0 0.0
      %686 = vmatprep.subr.mxu0 0.0
      %687 = vmatpush2.msra.mxu0 0.0
      %688 = vmatprep.subr.mxu0 0.0
      %689 = vmatpush2.msra.mxu0 0.0
      %690 = vmatprep.subr.mxu0 0.0
      %691 = vmatpush2.msra.mxu0 0.0
      %692 = vmatprep.subr.mxu0 0.0
      %693 = vmatpush2.msra.mxu0 0.0
      %694 = vmatprep.subr.mxu0 0.0
      %695 = vmatpush2.msra.mxu0 0.0
      %696 = vmatprep.subr.mxu0 0.0
      %697 = vmatpush2.msra.mxu0 0.0
      %698 = vmatprep.subr.mxu0 0.0
      %699 = vmatpush2.msra.mxu0 0.0
      %700 = vmatprep.subr.mxu0 0.0
      %701 = vmatpush2.msra.mxu0 0.0
      %702 = vmatprep.subr.mxu0 0.0
      %703 = vmatpush2.msra.mxu0 0.0
      %704 = vmatprep.subr.mxu0 0.0
      %705 = vmatpush2.msra.mxu0 0.0
      %706 = vmatprep.mubr.f32.mxu0 0.0
      %707 = vmatmul.mubr.f32.gmra.mxu0 %v640
      %v708 = vpop.f32.mrf.mxu0
      %v709 = vadd.f32 0.0, %v708
      %v710 = vpop.f32.mrf.mxu0
      %v711 = vadd.f32 0.0, %v710
      %712 = vdwg.mxu0
      %v713 = vadd.f32 %v635, %v709
      %v714 = vadd.f32 %v636, %v711
      %715 = vrot.lane.b32.xlu0 %v238, 127
      %v716 = vpop.permute.xlu0 %715
      %717 = vrot.lane.b32.xlu0 %v239, 127
      %v718 = vpop.permute.xlu0 %717
      %vm719 = vcmp.lt.s32.totalorder %v245, 127
      %v720 = vsel %vm719, %v716, %v718
      %v721 = vsel %vm719, %v718, %v716
      %s722 = scalar_lea.vmem %s3, 5
      %v723 = vld [vmem:[%s722] ss:$8 sm:$0x3]
      %v725 = vlaneseq
      %v726 = vshrl.u32 %v725, 7
      %v727 = vsub.s32 0, %v726
      %v728 = vrot.slane %v723, %v727
      %v729 = vlaneseq
      %v730 = vshrl.u32 %v729, 7
      %v731 = vsub.s32 1, %v730
      %v732 = vrot.slane %v723, %v731
      %v735 = vmul.f32 %v720, %v728
      %v736 = vmul.f32 %v721, %v732
      %s737 = scalar_lea.vmem %s1, 40
      %v738 = vld [vmem:[%s737] sm:$0xff]
      %v740 = vsel %vm288, %v738, 0
      %742 = vmatprep.subr.mxu0 0.0
      %743 = vmatpush1.msra.mxu0 0.0
      %744 = vmatprep.subr.mxu0 0.0
      %745 = vmatpush1.msra.mxu0 0.0
      %746 = vmatprep.subr.mxu0 0.0
      %747 = vmatpush1.msra.mxu0 0.0
      %748 = vmatprep.subr.mxu0 0.0
      %749 = vmatpush1.msra.mxu0 0.0
      %750 = vmatprep.subr.mxu0 0.0
      %751 = vmatpush1.msra.mxu0 0.0
      %752 = vmatprep.subr.mxu0 0.0
      %753 = vmatpush1.msra.mxu0 0.0
      %754 = vmatprep.subr.mxu0 0.0
      %755 = vmatpush1.msra.mxu0 0.0
      %756 = vmatprep.subr.mxu0 0.0
      %757 = vmatpush1.msra.mxu0 0.0
      %758 = vmatprep.subr.mxu0 0.0
      %759 = vmatpush1.msra.mxu0 0.0
      %760 = vmatprep.subr.mxu0 0.0
      %761 = vmatpush1.msra.mxu0 0.0
      %762 = vmatprep.subr.mxu0 0.0
      %763 = vmatpush1.msra.mxu0 0.0
      %764 = vmatprep.subr.mxu0 0.0
      %765 = vmatpush1.msra.mxu0 0.0
      %766 = vmatprep.subr.mxu0 0.0
      %767 = vmatpush1.msra.mxu0 0.0
      %768 = vmatprep.subr.mxu0 0.0
      %769 = vmatpush1.msra.mxu0 0.0
      %770 = vmatprep.subr.mxu0 0.0
      %771 = vmatpush1.msra.mxu0 0.0
      %772 = vmatprep.subr.mxu0 %v736
      %773 = vmatpush1.msra.mxu0 %v735
      %774 = vmatprep.subr.mxu0 0.0
      %775 = vmatpush2.msra.mxu0 0.0
      %776 = vmatprep.subr.mxu0 0.0
      %777 = vmatpush2.msra.mxu0 0.0
      %778 = vmatprep.subr.mxu0 0.0
      %779 = vmatpush2.msra.mxu0 0.0
      %780 = vmatprep.subr.mxu0 0.0
      %781 = vmatpush2.msra.mxu0 0.0
      %782 = vmatprep.subr.mxu0 0.0
      %783 = vmatpush2.msra.mxu0 0.0
      %784 = vmatprep.subr.mxu0 0.0
      %785 = vmatpush2.msra.mxu0 0.0
      %786 = vmatprep.subr.mxu0 0.0
      %787 = vmatpush2.msra.mxu0 0.0
      %788 = vmatprep.subr.mxu0 0.0
      %789 = vmatpush2.msra.mxu0 0.0
      %790 = vmatprep.subr.mxu0 0.0
      %791 = vmatpush2.msra.mxu0 0.0
      %792 = vmatprep.subr.mxu0 0.0
      %793 = vmatpush2.msra.mxu0 0.0
      %794 = vmatprep.subr.mxu0 0.0
      %795 = vmatpush2.msra.mxu0 0.0
      %796 = vmatprep.subr.mxu0 0.0
      %797 = vmatpush2.msra.mxu0 0.0
      %798 = vmatprep.subr.mxu0 0.0
      %799 = vmatpush2.msra.mxu0 0.0
      %800 = vmatprep.subr.mxu0 0.0
      %801 = vmatpush2.msra.mxu0 0.0
      %802 = vmatprep.subr.mxu0 0.0
      %803 = vmatpush2.msra.mxu0 0.0
      %804 = vmatprep.subr.mxu0 0.0
      %805 = vmatpush2.msra.mxu0 0.0
      %806 = vmatprep.mubr.f32.mxu0 0.0
      %807 = vmatmul.mubr.f32.gmra.mxu0 %v740
      %v808 = vpop.f32.mrf.mxu0
      %v809 = vadd.f32 0.0, %v808
      %v810 = vpop.f32.mrf.mxu0
      %v811 = vadd.f32 0.0, %v810
      %812 = vdwg.mxu0
      %v813 = vadd.f32 %v713, %v809
      %v814 = vadd.f32 %v714, %v811
      %815 = vrot.lane.b32.xlu0 %v238, 113
      %v816 = vpop.permute.xlu0 %815
      %817 = vrot.lane.b32.xlu0 %v239, 113
      %v818 = vpop.permute.xlu0 %817
      %vm819 = vcmp.lt.s32.totalorder %v245, 113
      %v820 = vsel %vm819, %v816, %v818
      %v821 = vsel %vm819, %v818, %v816
      %s822 = scalar_lea.vmem %s3, 6
      %v823 = vld [vmem:[%s822] ss:$8 sm:$0x3]
      %v825 = vlaneseq
      %v826 = vshrl.u32 %v825, 7
      %v827 = vsub.s32 0, %v826
      %v828 = vrot.slane %v823, %v827
      %v829 = vlaneseq
      %v830 = vshrl.u32 %v829, 7
      %v831 = vsub.s32 1, %v830
      %v832 = vrot.slane %v823, %v831
      %v835 = vmul.f32 %v820, %v828
      %v836 = vmul.f32 %v821, %v832
      %s837 = scalar_lea.vmem %s1, 48
      %v838 = vld [vmem:[%s837] sm:$0xff]
      %v840 = vsel %vm288, %v838, 0
      %842 = vmatprep.subr.mxu0 0.0
      %843 = vmatpush1.msra.mxu0 0.0
      %844 = vmatprep.subr.mxu0 0.0
      %845 = vmatpush1.msra.mxu0 0.0
      %846 = vmatprep.subr.mxu0 0.0
      %847 = vmatpush1.msra.mxu0 0.0
      %848 = vmatprep.subr.mxu0 0.0
      %849 = vmatpush1.msra.mxu0 0.0
      %850 = vmatprep.subr.mxu0 0.0
      %851 = vmatpush1.msra.mxu0 0.0
      %852 = vmatprep.subr.mxu0 0.0
      %853 = vmatpush1.msra.mxu0 0.0
      %854 = vmatprep.subr.mxu0 0.0
      %855 = vmatpush1.msra.mxu0 0.0
      %856 = vmatprep.subr.mxu0 0.0
      %857 = vmatpush1.msra.mxu0 0.0
      %858 = vmatprep.subr.mxu0 0.0
      %859 = vmatpush1.msra.mxu0 0.0
      %860 = vmatprep.subr.mxu0 0.0
      %861 = vmatpush1.msra.mxu0 0.0
      %862 = vmatprep.subr.mxu0 0.0
      %863 = vmatpush1.msra.mxu0 0.0
      %864 = vmatprep.subr.mxu0 0.0
      %865 = vmatpush1.msra.mxu0 0.0
      %866 = vmatprep.subr.mxu0 0.0
      %867 = vmatpush1.msra.mxu0 0.0
      %868 = vmatprep.subr.mxu0 0.0
      %869 = vmatpush1.msra.mxu0 0.0
      %870 = vmatprep.subr.mxu0 0.0
      %871 = vmatpush1.msra.mxu0 0.0
      %872 = vmatprep.subr.mxu0 %v836
      %873 = vmatpush1.msra.mxu0 %v835
      %874 = vmatprep.subr.mxu0 0.0
      %875 = vmatpush2.msra.mxu0 0.0
      %876 = vmatprep.subr.mxu0 0.0
      %877 = vmatpush2.msra.mxu0 0.0
      %878 = vmatprep.subr.mxu0 0.0
      %879 = vmatpush2.msra.mxu0 0.0
      %880 = vmatprep.subr.mxu0 0.0
      %881 = vmatpush2.msra.mxu0 0.0
      %882 = vmatprep.subr.mxu0 0.0
      %883 = vmatpush2.msra.mxu0 0.0
      %884 = vmatprep.subr.mxu0 0.0
      %885 = vmatpush2.msra.mxu0 0.0
      %886 = vmatprep.subr.mxu0 0.0
      %887 = vmatpush2.msra.mxu0 0.0
      %888 = vmatprep.subr.mxu0 0.0
      %889 = vmatpush2.msra.mxu0 0.0
      %890 = vmatprep.subr.mxu0 0.0
      %891 = vmatpush2.msra.mxu0 0.0
      %892 = vmatprep.subr.mxu0 0.0
      %893 = vmatpush2.msra.mxu0 0.0
      %894 = vmatprep.subr.mxu0 0.0
      %895 = vmatpush2.msra.mxu0 0.0
      %896 = vmatprep.subr.mxu0 0.0
      %897 = vmatpush2.msra.mxu0 0.0
      %898 = vmatprep.subr.mxu0 0.0
      %899 = vmatpush2.msra.mxu0 0.0
      %900 = vmatprep.subr.mxu0 0.0
      %901 = vmatpush2.msra.mxu0 0.0
      %902 = vmatprep.subr.mxu0 0.0
      %903 = vmatpush2.msra.mxu0 0.0
      %904 = vmatprep.subr.mxu0 0.0
      %905 = vmatpush2.msra.mxu0 0.0
      %906 = vmatprep.mubr.f32.mxu0 0.0
      %907 = vmatmul.mubr.f32.gmra.mxu0 %v840
      %v908 = vpop.f32.mrf.mxu0
      %v909 = vadd.f32 0.0, %v908
      %v910 = vpop.f32.mrf.mxu0
      %v911 = vadd.f32 0.0, %v910
      %912 = vdwg.mxu0
      %v913 = vadd.f32 %v813, %v909
      %v914 = vadd.f32 %v814, %v911
      %915 = vrot.lane.b32.xlu0 %v238, 112
      %v916 = vpop.permute.xlu0 %915
      %917 = vrot.lane.b32.xlu0 %v239, 112
      %v918 = vpop.permute.xlu0 %917
      %vm919 = vcmp.lt.s32.totalorder %v245, 112
      %v920 = vsel %vm919, %v916, %v918
      %v921 = vsel %vm919, %v918, %v916
      %s922 = scalar_lea.vmem %s3, 7
      %v923 = vld [vmem:[%s922] ss:$8 sm:$0x3]
      %v925 = vlaneseq
      %v926 = vshrl.u32 %v925, 7
      %v927 = vsub.s32 0, %v926
      %v928 = vrot.slane %v923, %v927
      %v929 = vlaneseq
      %v930 = vshrl.u32 %v929, 7
      %v931 = vsub.s32 1, %v930
      %v932 = vrot.slane %v923, %v931
      %v935 = vmul.f32 %v920, %v928
      %v936 = vmul.f32 %v921, %v932
      %s937 = scalar_lea.vmem %s1, 56
      %v938 = vld [vmem:[%s937] sm:$0xff]
      %v940 = vsel %vm288, %v938, 0
      %942 = vmatprep.subr.mxu0 0.0
      %943 = vmatpush1.msra.mxu0 0.0
      %944 = vmatprep.subr.mxu0 0.0
      %945 = vmatpush1.msra.mxu0 0.0
      %946 = vmatprep.subr.mxu0 0.0
      %947 = vmatpush1.msra.mxu0 0.0
      %948 = vmatprep.subr.mxu0 0.0
      %949 = vmatpush1.msra.mxu0 0.0
      %950 = vmatprep.subr.mxu0 0.0
      %951 = vmatpush1.msra.mxu0 0.0
      %952 = vmatprep.subr.mxu0 0.0
      %953 = vmatpush1.msra.mxu0 0.0
      %954 = vmatprep.subr.mxu0 0.0
      %955 = vmatpush1.msra.mxu0 0.0
      %956 = vmatprep.subr.mxu0 0.0
      %957 = vmatpush1.msra.mxu0 0.0
      %958 = vmatprep.subr.mxu0 0.0
      %959 = vmatpush1.msra.mxu0 0.0
      %960 = vmatprep.subr.mxu0 0.0
      %961 = vmatpush1.msra.mxu0 0.0
      %962 = vmatprep.subr.mxu0 0.0
      %963 = vmatpush1.msra.mxu0 0.0
      %964 = vmatprep.subr.mxu0 0.0
      %965 = vmatpush1.msra.mxu0 0.0
      %966 = vmatprep.subr.mxu0 0.0
      %967 = vmatpush1.msra.mxu0 0.0
      %968 = vmatprep.subr.mxu0 0.0
      %969 = vmatpush1.msra.mxu0 0.0
      %970 = vmatprep.subr.mxu0 0.0
      %971 = vmatpush1.msra.mxu0 0.0
      %972 = vmatprep.subr.mxu0 %v936
      %973 = vmatpush1.msra.mxu0 %v935
      %974 = vmatprep.subr.mxu0 0.0
      %975 = vmatpush2.msra.mxu0 0.0
      %976 = vmatprep.subr.mxu0 0.0
      %977 = vmatpush2.msra.mxu0 0.0
      %978 = vmatprep.subr.mxu0 0.0
      %979 = vmatpush2.msra.mxu0 0.0
      %980 = vmatprep.subr.mxu0 0.0
      %981 = vmatpush2.msra.mxu0 0.0
      %982 = vmatprep.subr.mxu0 0.0
      %983 = vmatpush2.msra.mxu0 0.0
      %984 = vmatprep.subr.mxu0 0.0
      %985 = vmatpush2.msra.mxu0 0.0
      %986 = vmatprep.subr.mxu0 0.0
      %987 = vmatpush2.msra.mxu0 0.0
      %988 = vmatprep.subr.mxu0 0.0
      %989 = vmatpush2.msra.mxu0 0.0
      %990 = vmatprep.subr.mxu0 0.0
      %991 = vmatpush2.msra.mxu0 0.0
      %992 = vmatprep.subr.mxu0 0.0
      %993 = vmatpush2.msra.mxu0 0.0
      %994 = vmatprep.subr.mxu0 0.0
      %995 = vmatpush2.msra.mxu0 0.0
      %996 = vmatprep.subr.mxu0 0.0
      %997 = vmatpush2.msra.mxu0 0.0
      %998 = vmatprep.subr.mxu0 0.0
      %999 = vmatpush2.msra.mxu0 0.0
      %1000 = vmatprep.subr.mxu0 0.0
      %1001 = vmatpush2.msra.mxu0 0.0
      %1002 = vmatprep.subr.mxu0 0.0
      %1003 = vmatpush2.msra.mxu0 0.0
      %1004 = vmatprep.subr.mxu0 0.0
      %1005 = vmatpush2.msra.mxu0 0.0
      %1006 = vmatprep.mubr.f32.mxu0 0.0
      %1007 = vmatmul.mubr.f32.gmra.mxu0 %v940
      %v1008 = vpop.f32.mrf.mxu0
      %v1009 = vadd.f32 0.0, %v1008
      %v1010 = vpop.f32.mrf.mxu0
      %v1011 = vadd.f32 0.0, %v1010
      %1012 = vdwg.mxu0
      %v1013 = vadd.f32 %v913, %v1009
      %v1014 = vadd.f32 %v914, %v1011
      %1015 = vrot.lane.b32.xlu0 %v238, 111
      %v1016 = vpop.permute.xlu0 %1015
      %1017 = vrot.lane.b32.xlu0 %v239, 111
      %v1018 = vpop.permute.xlu0 %1017
      %vm1019 = vcmp.lt.s32.totalorder %v245, 111
      %v1020 = vsel %vm1019, %v1016, %v1018
      %v1021 = vsel %vm1019, %v1018, %v1016
      %s1022 = scalar_lea.vmem %s3, 16
      %v1023 = vld [vmem:[%s1022] ss:$8 sm:$0x3]
      %v1025 = vlaneseq
      %v1026 = vshrl.u32 %v1025, 7
      %v1027 = vsub.s32 0, %v1026
      %v1028 = vrot.slane %v1023, %v1027
      %v1029 = vlaneseq
      %v1030 = vshrl.u32 %v1029, 7
      %v1031 = vsub.s32 1, %v1030
      %v1032 = vrot.slane %v1023, %v1031
      %v1035 = vmul.f32 %v1020, %v1028
      %v1036 = vmul.f32 %v1021, %v1032
      %s1037 = scalar_lea.vmem %s1, 64
      %v1038 = vld [vmem:[%s1037] sm:$0xff]
      %v1040 = vsel %vm288, %v1038, 0
      %1042 = vmatprep.subr.mxu0 0.0
      %1043 = vmatpush1.msra.mxu0 0.0
      %1044 = vmatprep.subr.mxu0 0.0
      %1045 = vmatpush1.msra.mxu0 0.0
      %1046 = vmatprep.subr.mxu0 0.0
      %1047 = vmatpush1.msra.mxu0 0.0
      %1048 = vmatprep.subr.mxu0 0.0
      %1049 = vmatpush1.msra.mxu0 0.0
      %1050 = vmatprep.subr.mxu0 0.0
      %1051 = vmatpush1.msra.mxu0 0.0
      %1052 = vmatprep.subr.mxu0 0.0
      %1053 = vmatpush1.msra.mxu0 0.0
      %1054 = vmatprep.subr.mxu0 0.0
      %1055 = vmatpush1.msra.mxu0 0.0
      %1056 = vmatprep.subr.mxu0 0.0
      %1057 = vmatpush1.msra.mxu0 0.0
      %1058 = vmatprep.subr.mxu0 0.0
      %1059 = vmatpush1.msra.mxu0 0.0
      %1060 = vmatprep.subr.mxu0 0.0
      %1061 = vmatpush1.msra.mxu0 0.0
      %1062 = vmatprep.subr.mxu0 0.0
      %1063 = vmatpush1.msra.mxu0 0.0
      %1064 = vmatprep.subr.mxu0 0.0
      %1065 = vmatpush1.msra.mxu0 0.0
      %1066 = vmatprep.subr.mxu0 0.0
      %1067 = vmatpush1.msra.mxu0 0.0
      %1068 = vmatprep.subr.mxu0 0.0
      %1069 = vmatpush1.msra.mxu0 0.0
      %1070 = vmatprep.subr.mxu0 0.0
      %1071 = vmatpush1.msra.mxu0 0.0
      %1072 = vmatprep.subr.mxu0 %v1036
      %1073 = vmatpush1.msra.mxu0 %v1035
      %1074 = vmatprep.subr.mxu0 0.0
      %1075 = vmatpush2.msra.mxu0 0.0
      %1076 = vmatprep.subr.mxu0 0.0
      %1077 = vmatpush2.msra.mxu0 0.0
      %1078 = vmatprep.subr.mxu0 0.0
      %1079 = vmatpush2.msra.mxu0 0.0
      %1080 = vmatprep.subr.mxu0 0.0
      %1081 = vmatpush2.msra.mxu0 0.0
      %1082 = vmatprep.subr.mxu0 0.0
      %1083 = vmatpush2.msra.mxu0 0.0
      %1084 = vmatprep.subr.mxu0 0.0
      %1085 = vmatpush2.msra.mxu0 0.0
      %1086 = vmatprep.subr.mxu0 0.0
      %1087 = vmatpush2.msra.mxu0 0.0
      %1088 = vmatprep.subr.mxu0 0.0
      %1089 = vmatpush2.msra.mxu0 0.0
      %1090 = vmatprep.subr.mxu0 0.0
      %1091 = vmatpush2.msra.mxu0 0.0
      %1092 = vmatprep.subr.mxu0 0.0
      %1093 = vmatpush2.msra.mxu0 0.0
      %1094 = vmatprep.subr.mxu0 0.0
      %1095 = vmatpush2.msra.mxu0 0.0
      %1096 = vmatprep.subr.mxu0 0.0
      %1097 = vmatpush2.msra.mxu0 0.0
      %1098 = vmatprep.subr.mxu0 0.0
      %1099 = vmatpush2.msra.mxu0 0.0
      %1100 = vmatprep.subr.mxu0 0.0
      %1101 = vmatpush2.msra.mxu0 0.0
      %1102 = vmatprep.subr.mxu0 0.0
      %1103 = vmatpush2.msra.mxu0 0.0
      %1104 = vmatprep.subr.mxu0 0.0
      %1105 = vmatpush2.msra.mxu0 0.0
      %1106 = vmatprep.mubr.f32.mxu0 0.0
      %1107 = vmatmul.mubr.f32.gmra.mxu0 %v1040
      %v1108 = vpop.f32.mrf.mxu0
      %v1109 = vadd.f32 0.0, %v1108
      %v1110 = vpop.f32.mrf.mxu0
      %v1111 = vadd.f32 0.0, %v1110
      %1112 = vdwg.mxu0
      %v1113 = vadd.f32 %v1013, %v1109
      %v1114 = vadd.f32 %v1014, %v1111
      %v1115 = vld [vmem:[%s2] sm:$0xff]
      %1117 = vset.pattern.permute.xlu0 0
      %1118 = vperm.xlu0 %1117, %v1115
      %v1119 = vpop.permute.xlu0 %1118
      %v1121 = vadd.f32 %v1113, %v1119
      %v1122 = vadd.f32 %v1114, %v1119
      %1123 = vst [vmem:[%s232] sm:$0xff] %v1121
      %1124 = vst [vmem:[%s232 + $0x8] sm:$0xff] %v1122
      %v1125 = vmul.f32 %v1121, %v1121
      %v1126 = vmul.f32 %v1122, %v1122
      %v1127 = vmul.f32 %v238, %v238
      %v1128 = vmul.f32 %v239, %v239
      %1129 = vmatprep.subr.mxu0 0.0
      %1130 = vmatpush1.msra.mxu0 1.0
      %1131 = vmatprep.subr.mxu0 0.0
      %1132 = vmatpush1.msra.mxu0 1.0
      %1133 = vmatprep.subr.mxu0 0.0
      %1134 = vmatpush1.msra.mxu0 1.0
      %1135 = vmatprep.subr.mxu0 0.0
      %1136 = vmatpush1.msra.mxu0 1.0
      %1137 = vmatprep.subr.mxu0 0.0
      %1138 = vmatpush1.msra.mxu0 1.0
      %1139 = vmatprep.subr.mxu0 0.0
      %1140 = vmatpush1.msra.mxu0 1.0
      %1141 = vmatprep.subr.mxu0 0.0
      %1142 = vmatpush1.msra.mxu0 1.0
      %1143 = vmatprep.subr.mxu0 0.0
      %1144 = vmatpush1.msra.mxu0 1.0
      %1145 = vmatprep.subr.mxu0 0.0
      %1146 = vmatpush1.msra.mxu0 1.0
      %1147 = vmatprep.subr.mxu0 0.0
      %1148 = vmatpush1.msra.mxu0 1.0
      %1149 = vmatprep.subr.mxu0 0.0
      %1150 = vmatpush1.msra.mxu0 1.0
      %1151 = vmatprep.subr.mxu0 0.0
      %1152 = vmatpush1.msra.mxu0 1.0
      %1153 = vmatprep.subr.mxu0 0.0
      %1154 = vmatpush1.msra.mxu0 1.0
      %1155 = vmatprep.subr.mxu0 0.0
      %1156 = vmatpush1.msra.mxu0 1.0
      %1157 = vmatprep.subr.mxu0 0.0
      %1158 = vmatpush1.msra.mxu0 1.0
      %1159 = vmatprep.subr.mxu0 0.0
      %1160 = vmatpush1.msra.mxu0 1.0
      %1161 = vmatprep.subr.mxu0 0.0
      %1162 = vmatpush2.msra.mxu0 1.0
      %1163 = vmatprep.subr.mxu0 0.0
      %1164 = vmatpush2.msra.mxu0 1.0
      %1165 = vmatprep.subr.mxu0 0.0
      %1166 = vmatpush2.msra.mxu0 1.0
      %1167 = vmatprep.subr.mxu0 0.0
      %1168 = vmatpush2.msra.mxu0 1.0
      %1169 = vmatprep.subr.mxu0 0.0
      %1170 = vmatpush2.msra.mxu0 1.0
      %1171 = vmatprep.subr.mxu0 0.0
      %1172 = vmatpush2.msra.mxu0 1.0
      %1173 = vmatprep.subr.mxu0 0.0
      %1174 = vmatpush2.msra.mxu0 1.0
      %1175 = vmatprep.subr.mxu0 0.0
      %1176 = vmatpush2.msra.mxu0 1.0
      %1177 = vmatprep.subr.mxu0 0.0
      %1178 = vmatpush2.msra.mxu0 1.0
      %1179 = vmatprep.subr.mxu0 0.0
      %1180 = vmatpush2.msra.mxu0 1.0
      %1181 = vmatprep.subr.mxu0 0.0
      %1182 = vmatpush2.msra.mxu0 1.0
      %1183 = vmatprep.subr.mxu0 0.0
      %1184 = vmatpush2.msra.mxu0 1.0
      %1185 = vmatprep.subr.mxu0 0.0
      %1186 = vmatpush2.msra.mxu0 1.0
      %1187 = vmatprep.subr.mxu0 0.0
      %1188 = vmatpush2.msra.mxu0 1.0
      %1189 = vmatprep.subr.mxu0 0.0
      %1190 = vmatpush2.msra.mxu0 1.0
      %1191 = vmatprep.subr.mxu0 0.0
      %1192 = vmatpush2.msra.mxu0 1.0
      %1193 = vmatprep.mubr.f32.mxu0 %v1122
      %1194 = vmatmul.mubr.f32.gmra.mxu0 %v1121
      %v1195 = vpop.f32.mrf.mxu0
      %v1196 = vadd.f32 0.0, %v1195
      %v1197 = vpop.f32.mrf.mxu0
      %1198 = vmatprep.mubr.f32.mxu0 %v1126
      %1199 = vmatmul.mubr.f32.gmra.mxu0 %v1125
      %v1200 = vpop.f32.mrf.mxu0
      %v1201 = vadd.f32 0.0, %v1200
      %v1202 = vpop.f32.mrf.mxu0
      %1203 = vmatprep.mubr.f32.mxu0 %v239
      %1204 = vmatmul.mubr.f32.gmra.mxu0 %v238
      %v1205 = vpop.f32.mrf.mxu0
      %v1206 = vadd.f32 0.0, %v1205
      %v1207 = vpop.f32.mrf.mxu0
      %1208 = vmatprep.mubr.f32.mxu0 %v1128
      %1209 = vmatmul.mubr.f32.gmra.mxu0 %v1127
      %v1210 = vpop.f32.mrf.mxu0
      %v1211 = vadd.f32 0.0, %v1210
      %v1212 = vpop.f32.mrf.mxu0
      %1213 = vdwg.mxu0
      %vm1214 = vcmask 7168
      %1215 = vst.msk [vmem:[%s237] sm:$0xff] %vm1214, %v1196
      %1216 = vst.msk [vmem:[%s237 + $0x8] sm:$0xff] %vm1214, %v1201
      %1217 = vst.msk [vmem:[%s237 + $0x10] sm:$0xff] %vm1214, %v1206
      %1218 = vst.msk [vmem:[%s237 + $0x18] sm:$0xff] %vm1214, %v1211
      %p1219 = scmp.lt.s32.totalorder %s17, 1
      %s1220 = scalar_select %p1219, %s17, 1
      %s1221 = smul.addr %s1220, 2
      %s1222 = smul.addr %s1221, 8
      %s1223 = scalar_lea.vmem %s4, %s1222
      %p1224 = scmp.lt.s32.totalorder %s17, 1
      %s1225 = scalar_select %p1224, %s17, 1
      %s1226 = smul.addr %s1225, 4
      %s1227 = smul.addr %s1226, 8
      %s1228 = scalar_lea.vmem %s5, %s1227
      // Predicated region
      $region37: #{resnet_block_forward.3} parent=35 // pred_check
        %p1229 = pneg %p124
      $region38: #{resnet_block_forward.3} parent=35 // pred_check_branch
        %1231 = sbr.rel (%p1229) target = $region40
      $region39: #{resnet_block_forward.3} parent=35 // pred_region
        _
      $region40: #{resnet_block_forward.3} parent=35 // pred_fallthru
        _
      // Predicated region
      $region41: #{resnet_block_forward.3} parent=35 // pred_check
        %p1232 = pneg %p150
      $region42: #{resnet_block_forward.3} parent=35 // pred_check_branch
        %1234 = sbr.rel (%p1232) target = $region44
      $region43: #{resnet_block_forward.3} parent=35 // pred_region
        _
      $region44: #{resnet_block_forward.3} parent=35 // pred_fallthru
        _
    $region36: #{resnet_block_forward.3} parent=5 // pred_fallthru
      _
    %p1235 = scmp.le.s32.totalorder 2, %s12
    // Predicated region
    $region45: #{resnet_block_forward.3} parent=5 // pred_check
      %p1236 = pneg %p1235
    $region46: #{resnet_block_forward.3} parent=5 // pred_check_branch
      %1238 = sbr.rel (%p1236) target = $region48
    $region47: #{resnet_block_forward.3} parent=5 // pred_region
      %s1239 = ssub.s32 %s12, 2
      // Predicated region
      $region49: #{resnet_block_forward.3} parent=47 // pred_check
        %p1240 = pneg %p130
      $region50: #{resnet_block_forward.3} parent=47 // pred_check_branch
        %1242 = sbr.rel (%p1240) target = $region52
      $region51: #{resnet_block_forward.3} parent=47 // pred_region
        %p1243 = scmp.lt.s32.totalorder %s18, 1
        %s1244 = scalar_select %p1243, %s18, 1
        %s1245 = smul.addr %s1244, 2
        %s1246 = smul.addr %s1245, 8
        %s1247 = scalar_lea.vmem %s4, %s1246
      $region52: #{resnet_block_forward.3} parent=47 // pred_fallthru
        _
      // Predicated region
      $region53: #{resnet_block_forward.3} parent=47 // pred_check
        %p1248 = pneg %p156
      $region54: #{resnet_block_forward.3} parent=47 // pred_check_branch
        %1250 = sbr.rel (%p1248) target = $region56
      $region55: #{resnet_block_forward.3} parent=47 // pred_region
        %p1251 = scmp.lt.s32.totalorder %s18, 1
        %s1252 = scalar_select %p1251, %s18, 1
        %s1253 = smul.addr %s1252, 4
        %s1254 = smul.addr %s1253, 8
        %s1255 = scalar_lea.vmem %s5, %s1254
      $region56: #{resnet_block_forward.3} parent=47 // pred_fallthru
        _
    $region48: #{resnet_block_forward.3} parent=5 // pred_fallthru
      _
  $region6: #{resnet_block_forward.3} parent=0 // loop_footer
    %s16 = sadd.s32 1, %s12
  $region7: #{resnet_block_forward.3} parent=0 // loop_footer_branch
    %11 = sbr.rel target = $region3
  $region8: #{resnet_block_forward.3} parent=0 // loop_exit
    _

</llo_original>
